<compile_context>
chip_gen: v5e
topology: v5e:2x2
jax: 0.10.0
libtpu: 0.0.40
codegen_flags: <defaults>
</compile_context>

<pallas_src>
import math

import numpy as np
import jax
import jax.numpy as jnp
from jax.experimental import pallas as pl
from jax.experimental.pallas import tpu as pltpu


def _posenc_kernel(w_ref, mult_ref, phase_ref, selid_ref, x_ref, o_ref):
    """One grouped row-tile of positional encoding.

    w_ref:     (L, W) bf16 one-hot replication matrix, L = G*D, W = G*D*(1+2F)
    mult_ref:  (1, W) f32 per-output-lane frequency (0 on identity lanes)
    phase_ref: (1, W) f32 per-output-lane phase (0 for sin, pi/2 for cos)
    selid_ref: (1, W) f32 1.0 on identity lanes, 0.0 elsewhere
    x_ref:     (T, L) input tile (G rows folded into the lane axis)
    o_ref:     (T, W) output tile (lane-dense)
    """
    x = x_ref[...].astype(jnp.float32)                     # (T, L)

    # Exact 3-way bf16 split of x by mantissa truncation (bit masks), so that
    # p0 + p1 + p2 == x bit-exactly and each piece is exactly bf16-representable.
    hi = jnp.uint32(0xFFFF0000)
    p0 = pltpu.bitcast(pltpu.bitcast(x, jnp.uint32) & hi, jnp.float32)
    r1 = x - p0                                            # exact, <= 16 significant bits
    p1 = pltpu.bitcast(pltpu.bitcast(r1, jnp.uint32) & hi, jnp.float32)
    p2 = r1 - p1                                           # exact, <= 8 significant bits

    # Replicate x across the per-row frequency blocks on the MXU (one-hot matrix, so the
    # bf16 matmuls and the f32 re-summation are exact): rep[:, g*out_dim + b*D + d] == x[:, g*D + d].
    w = w_ref[...]                                         # (L, W) bf16
    f32 = jnp.float32
    rep = (jnp.dot(p0.astype(jnp.bfloat16), w, preferred_element_type=f32)
           + jnp.dot(p1.astype(jnp.bfloat16), w, preferred_element_type=f32)
           + jnp.dot(p2.astype(jnp.bfloat16), w, preferred_element_type=f32))

    # theta = f * x (+ pi/2 on cos lanes); cos(t) == sin(t + pi/2).
    theta = rep * mult_ref[...] + phase_ref[...]
    s = jnp.sin(theta)                                     # ~8% wasted EUP on identity lanes; mem-bound
    sel = selid_ref[...]
    o_ref[...] = (rep * sel + s * (1.0 - sel)).astype(o_ref.dtype)


def positional_encoding(x, num_frequencies, *, tile_m=8192):
    """x: array of shape (..., input_dim). Returns (..., input_dim*(1+2F))."""
    input_dim = int(x.shape[-1])
    lead_shape = x.shape[:-1]
    reps = 1 + 2 * num_frequencies
    out_dim = input_dim * reps

    x2d = x.reshape(-1, input_dim)
    m = x2d.shape[0]
    if m == 0:
        return jnp.zeros((*lead_shape, out_dim), dtype=x.dtype)

    # --- group size: fold G rows into the lane axis so tiles are lane-dense ------------
    G = 128 // math.gcd(input_dim, 128)
    # keep the one-hot replication matrix modest for very wide inputs
    while G > 1 and (G * input_dim) * (G * out_dim) * 2 > (8 << 20):
        G //= 2
    L = G * input_dim           # input lanes per grouped row
    W = G * out_dim             # output lanes per grouped row

    mg = max(pl.cdiv(m, G), 8)  # grouped rows; >=8 so the MXU M-dim is never degenerate
    m_pad = mg * G
    if m_pad != m:
        x2d = jnp.pad(x2d, ((0, m_pad - m), (0, 0)))
    xg = x2d.reshape(mg, L)

    # --- per-output-lane constants ------------------------------------------------------
    freqs = 2.0 ** np.linspace(0.0, num_frequencies - 1, num_frequencies)
    mult_row = np.zeros((out_dim,), np.float32)
    phase_row = np.zeros((out_dim,), np.float32)
    selid_row = np.zeros((out_dim,), np.float32)
    selid_row[:input_dim] = 1.0                            # identity block
    for b, f in enumerate(freqs):
        s0 = (1 + 2 * b) * input_dim                       # sin block
        c0 = (2 + 2 * b) * input_dim                       # cos block
        mult_row[s0:s0 + input_dim] = f
        mult_row[c0:c0 + input_dim] = f
        phase_row[c0:c0 + input_dim] = np.pi / 2.0
    mult = jnp.asarray(np.tile(mult_row, G)).reshape(1, W)
    phase = jnp.asarray(np.tile(phase_row, G)).reshape(1, W)
    selid = jnp.asarray(np.tile(selid_row, G)).reshape(1, W)

    # one-hot replication matrix: input lane g*D+d -> output lanes g*out_dim + b*D + d
    wmat_np = np.zeros((L, W), np.float32)
    for g in range(G):
        for b in range(reps):
            for d in range(input_dim):
                wmat_np[g * input_dim + d, g * out_dim + b * input_dim + d] = 1.0
    wmat = jnp.asarray(wmat_np, dtype=jnp.bfloat16)

    # --- tiling ---------------------------------------------------------------------------
    itemsize = jnp.dtype(x.dtype).itemsize
    sub = {4: 8, 2: 16, 1: 32}.get(itemsize, 8)            # sublane multiple for this dtype
    want = max(sub, tile_m // G)                           # grouped rows per grid step
    # keep double-buffered in+out tiles under ~24 MiB (v7x has only 64 MiB physical VMEM)
    max_tile_g = max(sub, (((24 << 20) // (2 * (L + W) * itemsize)) // sub) * sub)
    want = min(want, max_tile_g)
    # keep >=4 grid steps when there is enough work (megacore sharding on v7x)
    if mg > 4 * sub:
        want = min(want, pl.cdiv(mg, 4))
    if want >= mg:
        tile_g = mg                                        # full-extent block: always legal
    else:
        tile_g = max(sub, (want // sub) * sub)
    grid = (pl.cdiv(mg, tile_g),)                          # ragged last block masked by Pallas

    cost = pl.CostEstimate(
        flops=int(6 * mg * L * W + 6 * m_pad * out_dim),
        transcendentals=int(m_pad * out_dim),
        bytes_accessed=int(mg * (L + W) * itemsize + L * W * 2 + 3 * W * 4),
    )

    out_g = pl.pallas_call(
        _posenc_kernel,
        out_shape=jax.ShapeDtypeStruct((mg, W), x.dtype),
        grid_spec=pltpu.PrefetchScalarGridSpec(
            num_scalar_prefetch=0,
            grid=grid,
            in_specs=[
                pl.BlockSpec((L, W), lambda i: (0, 0)),        # replication matrix (resident)
                pl.BlockSpec((1, W), lambda i: (0, 0)),        # mult
                pl.BlockSpec((1, W), lambda i: (0, 0)),        # phase
                pl.BlockSpec((1, W), lambda i: (0, 0)),        # identity select
                pl.BlockSpec((tile_g, L), lambda i: (i, 0)),   # grouped input rows
            ],
            out_specs=pl.BlockSpec((tile_g, W), lambda i: (i, 0)),
        ),
        compiler_params=pltpu.CompilerParams(
            dimension_semantics=("parallel",),                 # shard row tiles across TCs on v7x
            vmem_limit_bytes=32 * 1024 * 1024,
        ),
        cost_estimate=cost,
    )(wmat, mult, phase, selid, xg)

    out2d = out_g.reshape(m_pad, out_dim)                      # row-major view of grouped output
    if m_pad != m:
        out2d = out2d[:m]                                      # only when rows were padded
    return out2d.reshape(*lead_shape, out_dim)


def positional_encoding_ref(x, num_frequencies):
    freq_bands = 2.0 ** jnp.linspace(0.0, num_frequencies - 1, num_frequencies)
    parts = [x]
    for f in freq_bands:
        parts.append(jnp.sin(f * x))
        parts.append(jnp.cos(f * x))
    return jnp.concatenate(parts, axis=-1)


if __name__ == "__main__":
    key = jax.random.PRNGKey(0)
    k1, k2, k3 = jax.random.split(key, 3)

    input_dim = 4
    num_frequencies = 6
    out_dim = input_dim * (1 + 2 * num_frequencies)

    # Tiny shape (rows padded up internally, single block).
    x1 = jax.random.normal(k1, (2, 8, input_dim), dtype=jnp.float32)
    o1 = jax.block_until_ready(positional_encoding(x1, num_frequencies))
    r1 = positional_encoding_ref(x1, num_frequencies)
    assert o1.shape == (2, 8, out_dim), o1.shape
    assert jnp.allclose(o1, r1, atol=1e-5, rtol=1e-5), "mismatch vs reference (tiny)"

    # Group-aligned shape (m = 256 rows -> no padding, single full-extent block).
    x2 = jax.random.normal(k2, (2, 128, input_dim), dtype=jnp.float32)
    o2 = jax.block_until_ready(positional_encoding(x2, num_frequencies))
    r2 = positional_encoding_ref(x2, num_frequencies)
    assert o2.shape == (2, 128, out_dim), o2.shape
    assert jnp.allclose(o2, r2, atol=1e-5, rtol=1e-5), "mismatch vs reference (aligned)"

    # Ragged shape (m = 1050 rows -> padded to 1056, 33 grouped rows, 5 grid steps).
    x3 = jax.random.normal(k3, (3, 350, input_dim), dtype=jnp.float32)
    o3 = jax.block_until_ready(positional_encoding(x3, num_frequencies))
    r3 = positional_encoding_ref(x3, num_frequencies)
    assert o3.shape == (3, 350, out_dim), o3.shape
    assert jnp.allclose(o3, r3, atol=1e-5, rtol=1e-5), "mismatch vs reference (ragged)"

    print("KERNEL_OK")
</pallas_src>

<mosaic_0001>
module attributes {stable_mosaic.version = 11 : i64} {
  func.func @_posenc_kernel(%arg0: i32, %arg1: memref<128x1664xbf16, #tpu.memory_space<vmem>>, %arg2: memref<1x1664xf32, #tpu.memory_space<vmem>>, %arg3: memref<1x1664xf32, #tpu.memory_space<vmem>>, %arg4: memref<1x1664xf32, #tpu.memory_space<vmem>>, %arg5: memref<8x128xf32, #tpu.memory_space<vmem>>, %arg6: memref<8x1664xf32, #tpu.memory_space<vmem>>) attributes {dimension_semantics = [#tpu.dimension_semantics<parallel>], iteration_bounds = array<i64: 1>, scalar_prefetch = 0 : i64, scratch_operands = 0 : i64, tpu.core_type = #tpu.core_type<tc>, window_params = [{pipeline_mode = #tpu.pipeline_mode<synchronous>, transform_indices = @transform_0, window_bounds = array<i64: 128, 1664>}, {pipeline_mode = #tpu.pipeline_mode<synchronous>, transform_indices = @transform_1, window_bounds = array<i64: 1, 1664>}, {pipeline_mode = #tpu.pipeline_mode<synchronous>, transform_indices = @transform_2, window_bounds = array<i64: 1, 1664>}, {pipeline_mode = #tpu.pipeline_mode<synchronous>, transform_indices = @transform_3, window_bounds = array<i64: 1, 1664>}, {transform_indices = @transform_4, window_bounds = array<i64: 8, 128>}, {transform_indices = @transform_5, window_bounds = array<i64: 8, 1664>}]} {
    %c0 = arith.constant 0 : index
    %c0_0 = arith.constant 0 : index
    %0 = vector.load %arg5[%c0, %c0_0] : memref<8x128xf32, #tpu.memory_space<vmem>>, vector<8x128xf32>
    %1 = tpu.bitcast %0 : vector<8x128xf32> -> vector<8x128xi32>
    %c-65536_i32 = arith.constant -65536 : i32
    %2 = vector.broadcast %c-65536_i32 : i32 to vector<8x128xi32>
    %3 = arith.andi %1, %2 : vector<8x128xi32>
    %4 = tpu.bitcast %3 : vector<8x128xi32> -> vector<8x128xf32>
    %5 = arith.subf %0, %4 : vector<8x128xf32>
    %6 = tpu.bitcast %5 : vector<8x128xf32> -> vector<8x128xi32>
    %c-65536_i32_1 = arith.constant -65536 : i32
    %7 = vector.broadcast %c-65536_i32_1 : i32 to vector<8x128xi32>
    %8 = arith.andi %6, %7 : vector<8x128xi32>
    %9 = tpu.bitcast %8 : vector<8x128xi32> -> vector<8x128xf32>
    %10 = arith.subf %5, %9 : vector<8x128xf32>
    %c0_2 = arith.constant 0 : index
    %c0_3 = arith.constant 0 : index
    %11 = vector.load %arg1[%c0_2, %c0_3] : memref<128x1664xbf16, #tpu.memory_space<vmem>>, vector<128x1664xbf16>
    %12 = arith.truncf %4 : vector<8x128xf32> to vector<8x128xbf16>
    %cst = arith.constant dense<0.000000e+00> : vector<8x1664xf32>
    %13 = tpu.matmul %12, %11, %cst {dimension_numbers = #tpu.dot_dimension_numbers<[1], [0], [0], [1], [0, 0, 1, 1], [], []>} : vector<8x128xbf16>, vector<128x1664xbf16>, vector<8x1664xf32> -> vector<8x1664xf32>
    %14 = arith.truncf %9 : vector<8x128xf32> to vector<8x128xbf16>
    %cst_4 = arith.constant dense<0.000000e+00> : vector<8x1664xf32>
    %15 = tpu.matmul %14, %11, %cst_4 {dimension_numbers = #tpu.dot_dimension_numbers<[1], [0], [0], [1], [0, 0, 1, 1], [], []>} : vector<8x128xbf16>, vector<128x1664xbf16>, vector<8x1664xf32> -> vector<8x1664xf32>
    %16 = arith.addf %13, %15 : vector<8x1664xf32>
    %17 = arith.truncf %10 : vector<8x128xf32> to vector<8x128xbf16>
    %cst_5 = arith.constant dense<0.000000e+00> : vector<8x1664xf32>
    %18 = tpu.matmul %17, %11, %cst_5 {dimension_numbers = #tpu.dot_dimension_numbers<[1], [0], [0], [1], [0, 0, 1, 1], [], []>} : vector<8x128xbf16>, vector<128x1664xbf16>, vector<8x1664xf32> -> vector<8x1664xf32>
    %19 = arith.addf %16, %18 : vector<8x1664xf32>
    %c0_6 = arith.constant 0 : index
    %c0_7 = arith.constant 0 : index
    %20 = vector.load %arg2[%c0_6, %c0_7] : memref<1x1664xf32, #tpu.memory_space<vmem>>, vector<1x1664xf32>
    %21 = vector.broadcast %20 : vector<1x1664xf32> to vector<8x1664xf32>
    %22 = arith.mulf %19, %21 : vector<8x1664xf32>
    %c0_8 = arith.constant 0 : index
    %c0_9 = arith.constant 0 : index
    %23 = vector.load %arg3[%c0_8, %c0_9] : memref<1x1664xf32, #tpu.memory_space<vmem>>, vector<1x1664xf32>
    %24 = vector.broadcast %23 : vector<1x1664xf32> to vector<8x1664xf32>
    %25 = arith.addf %22, %24 : vector<8x1664xf32>
    %26 = math.sin %25 : vector<8x1664xf32>
    %c0_10 = arith.constant 0 : index
    %c0_11 = arith.constant 0 : index
    %27 = vector.load %arg4[%c0_10, %c0_11] : memref<1x1664xf32, #tpu.memory_space<vmem>>, vector<1x1664xf32>
    %28 = vector.broadcast %27 : vector<1x1664xf32> to vector<8x1664xf32>
    %29 = arith.mulf %19, %28 : vector<8x1664xf32>
    %cst_12 = arith.constant 1.000000e+00 : f32
    %30 = vector.broadcast %cst_12 : f32 to vector<1x1664xf32>
    %31 = arith.subf %30, %27 : vector<1x1664xf32>
    %32 = vector.broadcast %31 : vector<1x1664xf32> to vector<8x1664xf32>
    %33 = arith.mulf %26, %32 : vector<8x1664xf32>
    %34 = arith.addf %29, %33 : vector<8x1664xf32>
    %c0_13 = arith.constant 0 : index
    %c0_14 = arith.constant 0 : index
    %35 = vector.load %arg6[%c0_13, %c0_14] : memref<8x1664xf32, #tpu.memory_space<vmem>>, vector<8x1664xf32>
    tpu.vector_store %arg6[%c0_13, %c0_14], %34 {strides = array<i32>} : memref<8x1664xf32, #tpu.memory_space<vmem>>, vector<8x1664xf32>,
    return
  }
  func.func @transform_0(%arg0: i32) -> (i32, i32) {
    %c0_i32 = arith.constant 0 : i32
    %c0_i32_0 = arith.constant 0 : i32
    %c0_i32_1 = arith.constant 0 : i32
    return %c0_i32, %c0_i32_0 : i32, i32
  }
  func.func @transform_1(%arg0: i32) -> (i32, i32) {
    %c0_i32 = arith.constant 0 : i32
    %c0_i32_0 = arith.constant 0 : i32
    %c0_i32_1 = arith.constant 0 : i32
    return %c0_i32, %c0_i32_0 : i32, i32
  }
  func.func @transform_2(%arg0: i32) -> (i32, i32) {
    %c0_i32 = arith.constant 0 : i32
    %c0_i32_0 = arith.constant 0 : i32
    %c0_i32_1 = arith.constant 0 : i32
    return %c0_i32, %c0_i32_0 : i32, i32
  }
  func.func @transform_3(%arg0: i32) -> (i32, i32) {
    %c0_i32 = arith.constant 0 : i32
    %c0_i32_0 = arith.constant 0 : i32
    %c0_i32_1 = arith.constant 0 : i32
    return %c0_i32, %c0_i32_0 : i32, i32
  }
  func.func @transform_4(%arg0: i32) -> (i32, i32) {
    %c0_i32 = arith.constant 0 : i32
    %c0_i32_0 = arith.constant 0 : i32
    return %arg0, %c0_i32 : i32, i32
  }
  func.func @transform_5(%arg0: i32) -> (i32, i32) {
    %c0_i32 = arith.constant 0 : i32
    %c0_i32_0 = arith.constant 0 : i32
    return %arg0, %c0_i32 : i32, i32
  }
}

</mosaic_0001>

<llo_original>
// kernel: tpu_custom_call.1
$region0: #{tpu_custom_call.1}
  #allocation0 [shape = 'u32[]', space=smem, size = 0x4, offset = 0x4, fixed_abs, tag = 'smem constant byte address 0x4 - core index']
  #allocation1 [shape = 'u32[72,128]{1,0:T(1,128)}', space=vmem, size = 0x9000, scoped, tag = 'internal scratch']
  %s0 = inlined_call_operand.hbm [shape: bf16[128,1664], index: 0, kind: input, shape index: {}]
  %s1 = inlined_call_operand.hbm [shape: f32[1,1664], index: 1, kind: input, shape index: {}]
  %s2 = inlined_call_operand.hbm [shape: f32[1,1664], index: 2, kind: input, shape index: {}]
  %s3 = inlined_call_operand.hbm [shape: f32[1,1664], index: 3, kind: input, shape index: {}]
  %s4 = inlined_call_operand.hbm [shape: f32[8,128], index: 4, kind: input, shape index: {}]
  %s5 = inlined_call_operand.hbm [shape: f32[8,1664], index: 5, kind: output, shape index: {}]
  %s6 = sld [smem:[#allocation0]]
  $region50: #{tpu_custom_call.1} parent=0
    _
  %s8 = ssub.s32 1, %s6
  %s9 = scalar_select 0, %s8, %s6
  $region1: #{tpu_custom_call.1} parent=0
    #allocation2 [shape = 'u8[425984]{0}', space=vmem, size = 0x68000, scoped, tag = 'input window, operand 0, single buffered']
    #allocation3 [shape = 's32[1]{0}', space=sflag, size = 0x4, scoped, tag = 'scoped memory for tpu_custom_call.1']
    #allocation4 [shape = 's32[1]{0}', space=sflag, size = 0x4, scoped, tag = 'scoped memory for tpu_custom_call.1']
    #allocation5 [shape = 'u8[6656]{0}', space=vmem, size = 0x1c00, scoped, tag = 'input window, operand 1, single buffered']
    #allocation6 [shape = 's32[1]{0}', space=sflag, size = 0x4, scoped, tag = 'scoped memory for tpu_custom_call.1']
    #allocation7 [shape = 'u8[6656]{0}', space=vmem, size = 0x1c00, scoped, tag = 'input window, operand 2, single buffered']
    #allocation8 [shape = 'u8[6656]{0}', space=vmem, size = 0x1c00, scoped, tag = 'input window, operand 3, single buffered']
    #allocation9 [shape = 's32[1]{0}', space=sflag, size = 0x4, scoped, tag = 'scoped memory for tpu_custom_call.1']
    #allocation10 [shape = 'u8[4096]{0}', space=vmem, size = 0x1000, scoped, tag = 'input window, operand 4, single buffered']
    #allocation11 [shape = 'u8[53248]{0}', space=vmem, size = 0xd000, scoped, tag = 'output window, operand 0, single buffered']
    %10 = vsyncpa [#allocation3], 0
    %11 = vsyncpa [#allocation6], 0
    %12 = vsyncpa [#allocation9], 0
    %13 = vsyncpa [#allocation4], 0
    // Predicated region
    $region2: #{tpu_custom_call.1} parent=1 // pred_check
      _
    $region3: #{tpu_custom_call.1} parent=1 // pred_check_branch
      %15 = sbr.rel (0) target = $region5
    $region4: #{tpu_custom_call.1} parent=1 // pred_region
      %17 = vsyncadd [#allocation3], 0
      %s18 = sshll.u32 %s0, 4
      %s19 = int_to_ptr.hbm [resolvable:$true] %s18
      %s20 = sshll.u32 [#allocation2], 4
      %s21 = int_to_ptr.vmem [resolvable:$true] %s20
      %26 = dma.hbm_to_vmem [thread:$0]  %s19, 13312, %s21, [#allocation3], 832, 832, 52
    $region5: #{tpu_custom_call.1} parent=1 // pred_fallthru
      _
    // Predicated region
    $region6: #{tpu_custom_call.1} parent=1 // pred_check
      _
    $region7: #{tpu_custom_call.1} parent=1 // pred_check_branch
      %28 = sbr.rel (0) target = $region9
    $region8: #{tpu_custom_call.1} parent=1 // pred_region
      %30 = vsyncadd [#allocation6], 0
      %s32 = sshll.u32 %s1, 4
      %s33 = int_to_ptr.hbm [resolvable:$true] %s32
      %s34 = sshll.u32 [#allocation5], 4
      %s35 = int_to_ptr.vmem [resolvable:$true] %s34
      %37 = dma.hbm_to_vmem [thread:$0]  %s33, 208, %s35, [#allocation6]
    $region9: #{tpu_custom_call.1} parent=1 // pred_fallthru
      _
    // Predicated region
    $region10: #{tpu_custom_call.1} parent=1 // pred_check
      _
    $region11: #{tpu_custom_call.1} parent=1 // pred_check_branch
      %39 = sbr.rel (0) target = $region13
    $region12: #{tpu_custom_call.1} parent=1 // pred_region
      %41 = vsyncadd [#allocation6], 0
      %s43 = sshll.u32 %s2, 4
      %s44 = int_to_ptr.hbm [resolvable:$true] %s43
      %s45 = sshll.u32 [#allocation7], 4
      %s46 = int_to_ptr.vmem [resolvable:$true] %s45
      %48 = dma.hbm_to_vmem [thread:$0]  %s44, 208, %s46, [#allocation6]
    $region13: #{tpu_custom_call.1} parent=1 // pred_fallthru
      _
    // Predicated region
    $region14: #{tpu_custom_call.1} parent=1 // pred_check
      _
    $region15: #{tpu_custom_call.1} parent=1 // pred_check_branch
      %50 = sbr.rel (0) target = $region17
    $region16: #{tpu_custom_call.1} parent=1 // pred_region
      %52 = vsyncadd [#allocation9], 0
      %s54 = sshll.u32 %s3, 4
      %s55 = int_to_ptr.hbm [resolvable:$true] %s54
      %s56 = sshll.u32 [#allocation8], 4
      %s57 = int_to_ptr.vmem [resolvable:$true] %s56
      %59 = dma.hbm_to_vmem [thread:$0]  %s55, 208, %s57, [#allocation9]
    $region17: #{tpu_custom_call.1} parent=1 // pred_fallthru
      _
    // Predicated region
    $region18: #{tpu_custom_call.1} parent=1 // pred_check
      _
    $region19: #{tpu_custom_call.1} parent=1 // pred_check_branch
      %61 = sbr.rel (0) target = $region21
    $region20: #{tpu_custom_call.1} parent=1 // pred_region
      %63 = vsyncadd [#allocation9], 0
      %s65 = sshll.u32 %s4, 4
      %s66 = int_to_ptr.hbm [resolvable:$true] %s65
      %s67 = sshll.u32 [#allocation10], 4
      %s68 = int_to_ptr.vmem [resolvable:$true] %s67
      %70 = dma.hbm_to_vmem [thread:$0]  %s66, 128, %s68, [#allocation9]
    $region21: #{tpu_custom_call.1} parent=1 // pred_fallthru
      _
    // Predicated region
    $region22: #{tpu_custom_call.1} parent=1 // pred_check
      _
    $region23: #{tpu_custom_call.1} parent=1 // pred_check_branch
      %72 = sbr.rel (0) target = $region25
    $region24: #{tpu_custom_call.1} parent=1 // pred_region
      %74 = dma.done [#allocation3], 13312
    $region25: #{tpu_custom_call.1} parent=1 // pred_fallthru
      _
    // Predicated region
    $region26: #{tpu_custom_call.1} parent=1 // pred_check
      _
    $region27: #{tpu_custom_call.1} parent=1 // pred_check_branch
      %76 = sbr.rel (0) target = $region29
    $region28: #{tpu_custom_call.1} parent=1 // pred_region
      %78 = dma.done [#allocation6], 208
    $region29: #{tpu_custom_call.1} parent=1 // pred_fallthru
      _
    // Predicated region
    $region30: #{tpu_custom_call.1} parent=1 // pred_check
      _
    $region31: #{tpu_custom_call.1} parent=1 // pred_check_branch
      %80 = sbr.rel (0) target = $region33
    $region32: #{tpu_custom_call.1} parent=1 // pred_region
      %82 = dma.done [#allocation6], 208
    $region33: #{tpu_custom_call.1} parent=1 // pred_fallthru
      _
    // Predicated region
    $region34: #{tpu_custom_call.1} parent=1 // pred_check
      _
    $region35: #{tpu_custom_call.1} parent=1 // pred_check_branch
      %84 = sbr.rel (0) target = $region37
    $region36: #{tpu_custom_call.1} parent=1 // pred_region
      %86 = dma.done [#allocation9], 208
    $region37: #{tpu_custom_call.1} parent=1 // pred_fallthru
      _
    // Predicated region
    $region38: #{tpu_custom_call.1} parent=1 // pred_check
      _
    $region39: #{tpu_custom_call.1} parent=1 // pred_check_branch
      %88 = sbr.rel (0) target = $region41
    $region40: #{tpu_custom_call.1} parent=1 // pred_region
      %90 = dma.done [#allocation9], 128
    $region41: #{tpu_custom_call.1} parent=1 // pred_fallthru
      _
    %v91 = vld [vmem:[#allocation10] sm:$0xff]
    %v93 = vand.u32 %v91, 4294901760
    %v95 = vsub.f32 %v91, %v93
    %v97 = vand.u32 %v95, 4294901760
    %v99 = vsub.f32 %v95, %v97
    %v100 = vld [vmem:[#allocation2] sm:$0xff]
    %v101 = vld [vmem:[#allocation2 + $0x8] sm:$0xff]
    %v102 = vld [vmem:[#allocation2 + $0x10] sm:$0xff]
    %v103 = vld [vmem:[#allocation2 + $0x18] sm:$0xff]
    %v104 = vld [vmem:[#allocation2 + $0x20] sm:$0xff]
    %v105 = vld [vmem:[#allocation2 + $0x28] sm:$0xff]
    %v106 = vld [vmem:[#allocation2 + $0x30] sm:$0xf]
    %v107 = vld [vmem:[#allocation2 + $0x34] sm:$0xff]
    %v108 = vld [vmem:[#allocation2 + $0x3c] sm:$0xff]
    %v109 = vld [vmem:[#allocation2 + $0x44] sm:$0xff]
    %v110 = vld [vmem:[#allocation2 + $0x4c] sm:$0xff]
    %v111 = vld [vmem:[#allocation2 + $0x54] sm:$0xff]
    %v112 = vld [vmem:[#allocation2 + $0x5c] sm:$0xff]
    %v113 = vld [vmem:[#allocation2 + $0x64] sm:$0xf]
    %v114 = vld [vmem:[#allocation2 + $0x68] sm:$0xff]
    %v115 = vld [vmem:[#allocation2 + $0x70] sm:$0xff]
    %v116 = vld [vmem:[#allocation2 + $0x78] sm:$0xff]
    %v117 = vld [vmem:[#allocation2 + $0x80] sm:$0xff]
    %v118 = vld [vmem:[#allocation2 + $0x88] sm:$0xff]
    %v119 = vld [vmem:[#allocation2 + $0x90] sm:$0xff]
    %v120 = vld [vmem:[#allocation2 + $0x98] sm:$0xf]
    %v121 = vld [vmem:[#allocation2 + $0x9c] sm:$0xff]
    %v122 = vld [vmem:[#allocation2 + $0xa4] sm:$0xff]
    %v123 = vld [vmem:[#allocation2 + $0xac] sm:$0xff]
    %v124 = vld [vmem:[#allocation2 + $0xb4] sm:$0xff]
    %v125 = vld [vmem:[#allocation2 + $0xbc] sm:$0xff]
    %v126 = vld [vmem:[#allocation2 + $0xc4] sm:$0xff]
    %v127 = vld [vmem:[#allocation2 + $0xcc] sm:$0xf]
    %v128 = vld [vmem:[#allocation2 + $0xd0] sm:$0xff]
    %v129 = vld [vmem:[#allocation2 + $0xd8] sm:$0xff]
    %v130 = vld [vmem:[#allocation2 + $0xe0] sm:$0xff]
    %v131 = vld [vmem:[#allocation2 + $0xe8] sm:$0xff]
    %v132 = vld [vmem:[#allocation2 + $0xf0] sm:$0xff]
    %v133 = vld [vmem:[#allocation2 + $0xf8] sm:$0xff]
    %v134 = vld [vmem:[#allocation2 + $0x100] sm:$0xf]
    %v135 = vld [vmem:[#allocation2 + $0x104] sm:$0xff]
    %v136 = vld [vmem:[#allocation2 + $0x10c] sm:$0xff]
    %v137 = vld [vmem:[#allocation2 + $0x114] sm:$0xff]
    %v138 = vld [vmem:[#allocation2 + $0x11c] sm:$0xff]
    %v139 = vld [vmem:[#allocation2 + $0x124] sm:$0xff]
    %v140 = vld [vmem:[#allocation2 + $0x12c] sm:$0xff]
    %v141 = vld [vmem:[#allocation2 + $0x134] sm:$0xf]
    %v142 = vld [vmem:[#allocation2 + $0x138] sm:$0xff]
    %v143 = vld [vmem:[#allocation2 + $0x140] sm:$0xff]
    %v144 = vld [vmem:[#allocation2 + $0x148] sm:$0xff]
    %v145 = vld [vmem:[#allocation2 + $0x150] sm:$0xff]
    %v146 = vld [vmem:[#allocation2 + $0x158] sm:$0xff]
    %v147 = vld [vmem:[#allocation2 + $0x160] sm:$0xff]
    %v148 = vld [vmem:[#allocation2 + $0x168] sm:$0xf]
    %v149 = vld [vmem:[#allocation2 + $0x16c] sm:$0xff]
    %v150 = vld [vmem:[#allocation2 + $0x174] sm:$0xff]
    %v151 = vld [vmem:[#allocation2 + $0x17c] sm:$0xff]
    %v152 = vld [vmem:[#allocation2 + $0x184] sm:$0xff]
    %v153 = vld [vmem:[#allocation2 + $0x18c] sm:$0xff]
    %v154 = vld [vmem:[#allocation2 + $0x194] sm:$0xff]
    %v155 = vld [vmem:[#allocation2 + $0x19c] sm:$0xf]
    %v156 = vld [vmem:[#allocation2 + $0x1a0] sm:$0xff]
    %v157 = vld [vmem:[#allocation2 + $0x1a8] sm:$0xff]
    %v158 = vld [vmem:[#allocation2 + $0x1b0] sm:$0xff]
    %v159 = vld [vmem:[#allocation2 + $0x1b8] sm:$0xff]
    %v160 = vld [vmem:[#allocation2 + $0x1c0] sm:$0xff]
    %v161 = vld [vmem:[#allocation2 + $0x1c8] sm:$0xff]
    %v162 = vld [vmem:[#allocation2 + $0x1d0] sm:$0xf]
    %v163 = vld [vmem:[#allocation2 + $0x1d4] sm:$0xff]
    %v164 = vld [vmem:[#allocation2 + $0x1dc] sm:$0xff]
    %v165 = vld [vmem:[#allocation2 + $0x1e4] sm:$0xff]
    %v166 = vld [vmem:[#allocation2 + $0x1ec] sm:$0xff]
    %v167 = vld [vmem:[#allocation2 + $0x1f4] sm:$0xff]
    %v168 = vld [vmem:[#allocation2 + $0x1fc] sm:$0xff]
    %v169 = vld [vmem:[#allocation2 + $0x204] sm:$0xf]
    %v170 = vld [vmem:[#allocation2 + $0x208] sm:$0xff]
    %v171 = vld [vmem:[#allocation2 + $0x210] sm:$0xff]
    %v172 = vld [vmem:[#allocation2 + $0x218] sm:$0xff]
    %v173 = vld [vmem:[#allocation2 + $0x220] sm:$0xff]
    %v174 = vld [vmem:[#allocation2 + $0x228] sm:$0xff]
    %v175 = vld [vmem:[#allocation2 + $0x230] sm:$0xff]
    %v176 = vld [vmem:[#allocation2 + $0x238] sm:$0xf]
    %v177 = vld [vmem:[#allocation2 + $0x23c] sm:$0xff]
    %v178 = vld [vmem:[#allocation2 + $0x244] sm:$0xff]
    %v179 = vld [vmem:[#allocation2 + $0x24c] sm:$0xff]
    %v180 = vld [vmem:[#allocation2 + $0x254] sm:$0xff]
    %v181 = vld [vmem:[#allocation2 + $0x25c] sm:$0xff]
    %v182 = vld [vmem:[#allocation2 + $0x264] sm:$0xff]
    %v183 = vld [vmem:[#allocation2 + $0x26c] sm:$0xf]
    %v184 = vld [vmem:[#allocation2 + $0x270] sm:$0xff]
    %v185 = vld [vmem:[#allocation2 + $0x278] sm:$0xff]
    %v186 = vld [vmem:[#allocation2 + $0x280] sm:$0xff]
    %v187 = vld [vmem:[#allocation2 + $0x288] sm:$0xff]
    %v188 = vld [vmem:[#allocation2 + $0x290] sm:$0xff]
    %v189 = vld [vmem:[#allocation2 + $0x298] sm:$0xff]
    %v190 = vld [vmem:[#allocation2 + $0x2a0] sm:$0xf]
    %v191 = vld [vmem:[#allocation2 + $0x2a4] sm:$0xff]
    %v192 = vld [vmem:[#allocation2 + $0x2ac] sm:$0xff]
    %v193 = vld [vmem:[#allocation2 + $0x2b4] sm:$0xff]
    %v194 = vld [vmem:[#allocation2 + $0x2bc] sm:$0xff]
    %v195 = vld [vmem:[#allocation2 + $0x2c4] sm:$0xff]
    %v196 = vld [vmem:[#allocation2 + $0x2cc] sm:$0xff]
    %v197 = vld [vmem:[#allocation2 + $0x2d4] sm:$0xf]
    %v198 = vld [vmem:[#allocation2 + $0x2d8] sm:$0xff]
    %v199 = vld [vmem:[#allocation2 + $0x2e0] sm:$0xff]
    %v200 = vld [vmem:[#allocation2 + $0x2e8] sm:$0xff]
    %v201 = vld [vmem:[#allocation2 + $0x2f0] sm:$0xff]
    %v202 = vld [vmem:[#allocation2 + $0x2f8] sm:$0xff]
    %v203 = vld [vmem:[#allocation2 + $0x300] sm:$0xff]
    %v204 = vld [vmem:[#allocation2 + $0x308] sm:$0xf]
    %v205 = vld [vmem:[#allocation2 + $0x30c] sm:$0xff]
    %v206 = vld [vmem:[#allocation2 + $0x314] sm:$0xff]
    %v207 = vld [vmem:[#allocation2 + $0x31c] sm:$0xff]
    %v208 = vld [vmem:[#allocation2 + $0x324] sm:$0xff]
    %v209 = vld [vmem:[#allocation2 + $0x32c] sm:$0xff]
    %v210 = vld [vmem:[#allocation2 + $0x334] sm:$0xff]
    %v211 = vld [vmem:[#allocation2 + $0x33c] sm:$0xf]
    %v212 = vpack.c.bf16 %v93, %v93
    %v213 = vpack.c.bf16 %v97, %v97
    %v326 = vunpack.c.l.b16 %v100
    %v327 = vunpack.c.h.b16 %v100
    %v328 = vunpack.c.l.b16 %v101
    %v329 = vunpack.c.h.b16 %v101
    %v330 = vunpack.c.l.b16 %v102
    %v331 = vunpack.c.h.b16 %v102
    %v332 = vunpack.c.l.b16 %v103
    %v333 = vunpack.c.h.b16 %v103
    %v334 = vunpack.c.l.b16 %v104
    %v335 = vunpack.c.h.b16 %v104
    %v336 = vunpack.c.l.b16 %v105
    %v337 = vunpack.c.h.b16 %v105
    %v338 = vunpack.c.l.b16 %v106
    %v339 = vunpack.c.l.b16 %v107
    %v340 = vunpack.c.h.b16 %v107
    %v341 = vunpack.c.l.b16 %v108
    %v342 = vunpack.c.h.b16 %v108
    %v343 = vunpack.c.l.b16 %v109
    %v344 = vunpack.c.h.b16 %v109
    %v345 = vunpack.c.l.b16 %v110
    %v346 = vunpack.c.h.b16 %v110
    %v347 = vunpack.c.l.b16 %v111
    %v348 = vunpack.c.h.b16 %v111
    %v349 = vunpack.c.l.b16 %v112
    %v350 = vunpack.c.h.b16 %v112
    %v351 = vunpack.c.l.b16 %v113
    %v352 = vunpack.c.l.b16 %v114
    %v353 = vunpack.c.h.b16 %v114
    %v354 = vunpack.c.l.b16 %v115
    %v355 = vunpack.c.h.b16 %v115
    %v356 = vunpack.c.l.b16 %v116
    %v357 = vunpack.c.h.b16 %v116
    %v358 = vunpack.c.l.b16 %v117
    %v359 = vunpack.c.h.b16 %v117
    %v360 = vunpack.c.l.b16 %v118
    %v361 = vunpack.c.h.b16 %v118
    %v362 = vunpack.c.l.b16 %v119
    %v363 = vunpack.c.h.b16 %v119
    %v364 = vunpack.c.l.b16 %v120
    %v365 = vunpack.c.l.b16 %v121
    %v366 = vunpack.c.h.b16 %v121
    %v367 = vunpack.c.l.b16 %v122
    %v368 = vunpack.c.h.b16 %v122
    %v369 = vunpack.c.l.b16 %v123
    %v370 = vunpack.c.h.b16 %v123
    %v371 = vunpack.c.l.b16 %v124
    %v372 = vunpack.c.h.b16 %v124
    %v373 = vunpack.c.l.b16 %v125
    %v374 = vunpack.c.h.b16 %v125
    %v375 = vunpack.c.l.b16 %v126
    %v376 = vunpack.c.h.b16 %v126
    %v377 = vunpack.c.l.b16 %v127
    %v378 = vunpack.c.l.b16 %v128
    %v379 = vunpack.c.h.b16 %v128
    %v380 = vunpack.c.l.b16 %v129
    %v381 = vunpack.c.h.b16 %v129
    %v382 = vunpack.c.l.b16 %v130
    %v383 = vunpack.c.h.b16 %v130
    %v384 = vunpack.c.l.b16 %v131
    %v385 = vunpack.c.h.b16 %v131
    %v386 = vunpack.c.l.b16 %v132
    %v387 = vunpack.c.h.b16 %v132
    %v388 = vunpack.c.l.b16 %v133
    %v389 = vunpack.c.h.b16 %v133
    %v390 = vunpack.c.l.b16 %v134
    %v391 = vunpack.c.l.b16 %v135
    %v392 = vunpack.c.h.b16 %v135
    %v393 = vunpack.c.l.b16 %v136
    %v394 = vunpack.c.h.b16 %v136
    %v395 = vunpack.c.l.b16 %v137
    %v396 = vunpack.c.h.b16 %v137
    %v397 = vunpack.c.l.b16 %v138
    %v398 = vunpack.c.h.b16 %v138
    %v399 = vunpack.c.l.b16 %v139
    %v400 = vunpack.c.h.b16 %v139
    %v401 = vunpack.c.l.b16 %v140
    %v402 = vunpack.c.h.b16 %v140
    %v403 = vunpack.c.l.b16 %v141
    %v404 = vunpack.c.l.b16 %v142
    %v405 = vunpack.c.h.b16 %v142
    %v406 = vunpack.c.l.b16 %v143
    %v407 = vunpack.c.h.b16 %v143
    %v408 = vunpack.c.l.b16 %v144
    %v409 = vunpack.c.h.b16 %v144
    %v410 = vunpack.c.l.b16 %v145
    %v411 = vunpack.c.h.b16 %v145
    %v412 = vunpack.c.l.b16 %v146
    %v413 = vunpack.c.h.b16 %v146
    %v414 = vunpack.c.l.b16 %v147
    %v415 = vunpack.c.h.b16 %v147
    %v416 = vunpack.c.l.b16 %v148
    %v417 = vunpack.c.l.b16 %v149
    %v418 = vunpack.c.h.b16 %v149
    %v419 = vunpack.c.l.b16 %v150
    %v420 = vunpack.c.h.b16 %v150
    %v421 = vunpack.c.l.b16 %v151
    %v422 = vunpack.c.h.b16 %v151
    %v423 = vunpack.c.l.b16 %v152
    %v424 = vunpack.c.h.b16 %v152
    %v425 = vunpack.c.l.b16 %v153
    %v426 = vunpack.c.h.b16 %v153
    %v427 = vunpack.c.l.b16 %v154
    %v428 = vunpack.c.h.b16 %v154
    %v429 = vunpack.c.l.b16 %v155
    %v430 = vunpack.c.l.b16 %v156
    %v431 = vunpack.c.h.b16 %v156
    %v432 = vunpack.c.l.b16 %v157
    %v433 = vunpack.c.h.b16 %v157
    %v434 = vunpack.c.l.b16 %v158
    %v435 = vunpack.c.h.b16 %v158
    %v436 = vunpack.c.l.b16 %v159
    %v437 = vunpack.c.h.b16 %v159
    %v438 = vunpack.c.l.b16 %v160
    %v439 = vunpack.c.h.b16 %v160
    %v440 = vunpack.c.l.b16 %v161
    %v441 = vunpack.c.h.b16 %v161
    %v442 = vunpack.c.l.b16 %v162
    %v443 = vunpack.c.l.b16 %v163
    %v444 = vunpack.c.h.b16 %v163
    %v445 = vunpack.c.l.b16 %v164
    %v446 = vunpack.c.h.b16 %v164
    %v447 = vunpack.c.l.b16 %v165
    %v448 = vunpack.c.h.b16 %v165
    %v449 = vunpack.c.l.b16 %v166
    %v450 = vunpack.c.h.b16 %v166
    %v451 = vunpack.c.l.b16 %v167
    %v452 = vunpack.c.h.b16 %v167
    %v453 = vunpack.c.l.b16 %v168
    %v454 = vunpack.c.h.b16 %v168
    %v455 = vunpack.c.l.b16 %v169
    %v456 = vunpack.c.l.b16 %v170
    %v457 = vunpack.c.h.b16 %v170
    %v458 = vunpack.c.l.b16 %v171
    %v459 = vunpack.c.h.b16 %v171
    %v460 = vunpack.c.l.b16 %v172
    %v461 = vunpack.c.h.b16 %v172
    %v462 = vunpack.c.l.b16 %v173
    %v463 = vunpack.c.h.b16 %v173
    %v464 = vunpack.c.l.b16 %v174
    %v465 = vunpack.c.h.b16 %v174
    %v466 = vunpack.c.l.b16 %v175
    %v467 = vunpack.c.h.b16 %v175
    %v468 = vunpack.c.l.b16 %v176
    %v469 = vunpack.c.l.b16 %v177
    %v470 = vunpack.c.h.b16 %v177
    %v471 = vunpack.c.l.b16 %v178
    %v472 = vunpack.c.h.b16 %v178
    %v473 = vunpack.c.l.b16 %v179
    %v474 = vunpack.c.h.b16 %v179
    %v475 = vunpack.c.l.b16 %v180
    %v476 = vunpack.c.h.b16 %v180
    %v477 = vunpack.c.l.b16 %v181
    %v478 = vunpack.c.h.b16 %v181
    %v479 = vunpack.c.l.b16 %v182
    %v480 = vunpack.c.h.b16 %v182
    %v481 = vunpack.c.l.b16 %v183
    %v482 = vunpack.c.l.b16 %v184
    %v483 = vunpack.c.h.b16 %v184
    %v484 = vunpack.c.l.b16 %v185
    %v485 = vunpack.c.h.b16 %v185
    %v486 = vunpack.c.l.b16 %v186
    %v487 = vunpack.c.h.b16 %v186
    %v488 = vunpack.c.l.b16 %v187
    %v489 = vunpack.c.h.b16 %v187
    %v490 = vunpack.c.l.b16 %v188
    %v491 = vunpack.c.h.b16 %v188
    %v492 = vunpack.c.l.b16 %v189
    %v493 = vunpack.c.h.b16 %v189
    %v494 = vunpack.c.l.b16 %v190
    %v495 = vunpack.c.l.b16 %v191
    %v496 = vunpack.c.h.b16 %v191
    %v497 = vunpack.c.l.b16 %v192
    %v498 = vunpack.c.h.b16 %v192
    %v499 = vunpack.c.l.b16 %v193
    %v500 = vunpack.c.h.b16 %v193
    %v501 = vunpack.c.l.b16 %v194
    %v502 = vunpack.c.h.b16 %v194
    %v503 = vunpack.c.l.b16 %v195
    %v504 = vunpack.c.h.b16 %v195
    %v505 = vunpack.c.l.b16 %v196
    %v506 = vunpack.c.h.b16 %v196
    %v507 = vunpack.c.l.b16 %v197
    %v508 = vunpack.c.l.b16 %v198
    %v509 = vunpack.c.h.b16 %v198
    %v510 = vunpack.c.l.b16 %v199
    %v511 = vunpack.c.h.b16 %v199
    %v512 = vunpack.c.l.b16 %v200
    %v513 = vunpack.c.h.b16 %v200
    %v514 = vunpack.c.l.b16 %v201
    %v515 = vunpack.c.h.b16 %v201
    %v516 = vunpack.c.l.b16 %v202
    %v517 = vunpack.c.h.b16 %v202
    %v518 = vunpack.c.l.b16 %v203
    %v519 = vunpack.c.h.b16 %v203
    %v520 = vunpack.c.l.b16 %v204
    %v521 = vunpack.c.l.b16 %v205
    %v522 = vunpack.c.h.b16 %v205
    %v523 = vunpack.c.l.b16 %v206
    %v524 = vunpack.c.h.b16 %v206
    %v525 = vunpack.c.l.b16 %v207
    %v526 = vunpack.c.h.b16 %v207
    %v527 = vunpack.c.l.b16 %v208
    %v528 = vunpack.c.h.b16 %v208
    %v529 = vunpack.c.l.b16 %v209
    %v530 = vunpack.c.h.b16 %v209
    %v531 = vunpack.c.l.b16 %v210
    %v532 = vunpack.c.h.b16 %v210
    %v533 = vunpack.c.l.b16 %v211
    %v534 = vpack.c.b16 %v339, %v326
    %v535 = vpack.c.b16 %v340, %v327
    %v536 = vpack.c.b16 %v341, %v328
    %v537 = vpack.c.b16 %v342, %v329
    %v538 = vpack.c.b16 %v343, %v330
    %v539 = vpack.c.b16 %v344, %v331
    %v540 = vpack.c.b16 %v345, %v332
    %v541 = vpack.c.b16 %v346, %v333
    %v542 = vpack.c.b16 %v347, %v334
    %v543 = vpack.c.b16 %v348, %v335
    %v544 = vpack.c.b16 %v349, %v336
    %v545 = vpack.c.b16 %v350, %v337
    %v546 = vpack.c.b16 %v351, %v338
    %v547 = vpack.c.b16 %v365, %v352
    %v548 = vpack.c.b16 %v366, %v353
    %v549 = vpack.c.b16 %v367, %v354
    %v550 = vpack.c.b16 %v368, %v355
    %v551 = vpack.c.b16 %v369, %v356
    %v552 = vpack.c.b16 %v370, %v357
    %v553 = vpack.c.b16 %v371, %v358
    %v554 = vpack.c.b16 %v372, %v359
    %v555 = vpack.c.b16 %v373, %v360
    %v556 = vpack.c.b16 %v374, %v361
    %v557 = vpack.c.b16 %v375, %v362
    %v558 = vpack.c.b16 %v376, %v363
    %v559 = vpack.c.b16 %v377, %v364
    %v560 = vpack.c.b16 %v391, %v378
    %v561 = vpack.c.b16 %v392, %v379
    %v562 = vpack.c.b16 %v393, %v380
    %v563 = vpack.c.b16 %v394, %v381
    %v564 = vpack.c.b16 %v395, %v382
    %v565 = vpack.c.b16 %v396, %v383
    %v566 = vpack.c.b16 %v397, %v384
    %v567 = vpack.c.b16 %v398, %v385
    %v568 = vpack.c.b16 %v399, %v386
    %v569 = vpack.c.b16 %v400, %v387
    %v570 = vpack.c.b16 %v401, %v388
    %v571 = vpack.c.b16 %v402, %v389
    %v572 = vpack.c.b16 %v403, %v390
    %v573 = vpack.c.b16 %v417, %v404
    %v574 = vpack.c.b16 %v418, %v405
    %v575 = vpack.c.b16 %v419, %v406
    %v576 = vpack.c.b16 %v420, %v407
    %v577 = vpack.c.b16 %v421, %v408
    %v578 = vpack.c.b16 %v422, %v409
    %v579 = vpack.c.b16 %v423, %v410
    %v580 = vpack.c.b16 %v424, %v411
    %v581 = vpack.c.b16 %v425, %v412
    %v582 = vpack.c.b16 %v426, %v413
    %v583 = vpack.c.b16 %v427, %v414
    %v584 = vpack.c.b16 %v428, %v415
    %v585 = vpack.c.b16 %v429, %v416
    %v586 = vpack.c.b16 %v443, %v430
    %v587 = vpack.c.b16 %v444, %v431
    %v588 = vpack.c.b16 %v445, %v432
    %v589 = vpack.c.b16 %v446, %v433
    %v590 = vpack.c.b16 %v447, %v434
    %v591 = vpack.c.b16 %v448, %v435
    %v592 = vpack.c.b16 %v449, %v436
    %v593 = vpack.c.b16 %v450, %v437
    %v594 = vpack.c.b16 %v451, %v438
    %v595 = vpack.c.b16 %v452, %v439
    %v596 = vpack.c.b16 %v453, %v440
    %v597 = vpack.c.b16 %v454, %v441
    %v598 = vpack.c.b16 %v455, %v442
    %v599 = vpack.c.b16 %v469, %v456
    %v600 = vpack.c.b16 %v470, %v457
    %v601 = vpack.c.b16 %v471, %v458
    %v602 = vpack.c.b16 %v472, %v459
    %v603 = vpack.c.b16 %v473, %v460
    %v604 = vpack.c.b16 %v474, %v461
    %v605 = vpack.c.b16 %v475, %v462
    %v606 = vpack.c.b16 %v476, %v463
    %v607 = vpack.c.b16 %v477, %v464
    %v608 = vpack.c.b16 %v478, %v465
    %v609 = vpack.c.b16 %v479, %v466
    %v610 = vpack.c.b16 %v480, %v467
    %v611 = vpack.c.b16 %v481, %v468
    %v612 = vpack.c.b16 %v495, %v482
    %v613 = vpack.c.b16 %v496, %v483
    %v614 = vpack.c.b16 %v497, %v484
    %v615 = vpack.c.b16 %v498, %v485
    %v616 = vpack.c.b16 %v499, %v486
    %v617 = vpack.c.b16 %v500, %v487
    %v618 = vpack.c.b16 %v501, %v488
    %v619 = vpack.c.b16 %v502, %v489
    %v620 = vpack.c.b16 %v503, %v490
    %v621 = vpack.c.b16 %v504, %v491
    %v622 = vpack.c.b16 %v505, %v492
    %v623 = vpack.c.b16 %v506, %v493
    %v624 = vpack.c.b16 %v507, %v494
    %v625 = vpack.c.b16 %v521, %v508
    %v626 = vpack.c.b16 %v522, %v509
    %v627 = vpack.c.b16 %v523, %v510
    %v628 = vpack.c.b16 %v524, %v511
    %v629 = vpack.c.b16 %v525, %v512
    %v630 = vpack.c.b16 %v526, %v513
    %v631 = vpack.c.b16 %v527, %v514
    %v632 = vpack.c.b16 %v528, %v515
    %v633 = vpack.c.b16 %v529, %v516
    %v634 = vpack.c.b16 %v530, %v517
    %v635 = vpack.c.b16 %v531, %v518
    %v636 = vpack.c.b16 %v532, %v519
    %v637 = vpack.c.b16 %v533, %v520
    %742 = vmatpush.bf16.msra.mxu0 %v625
    %743 = vmatpush.bf16.msra.mxu0 %v612
    %744 = vmatpush.bf16.msra.mxu0 %v599
    %745 = vmatpush.bf16.msra.mxu0 %v586
    %746 = vmatpush.bf16.msra.mxu0 %v573
    %747 = vmatpush.bf16.msra.mxu0 %v560
    %748 = vmatpush.bf16.msra.mxu0 %v547
    %749 = vmatpush.bf16.msra.mxu0 %v534
    %750 = vmatmul.bf16.gmra.mxu0 %v213
    %v751 = vpop.f32.mrf.mxu0
    %v752 = vadd.f32 0.0, %v751
    %v753 = vpop.f32.mrf.mxu0
    %754 = vdwg.mxu0
    %755 = vmatpush.bf16.msra.mxu0 %v626
    %756 = vmatpush.bf16.msra.mxu0 %v613
    %757 = vmatpush.bf16.msra.mxu0 %v600
    %758 = vmatpush.bf16.msra.mxu0 %v587
    %759 = vmatpush.bf16.msra.mxu0 %v574
    %760 = vmatpush.bf16.msra.mxu0 %v561
    %761 = vmatpush.bf16.msra.mxu0 %v548
    %762 = vmatpush.bf16.msra.mxu0 %v535
    %763 = vmatmul.bf16.gmra.mxu0 %v213
    %v764 = vpop.f32.mrf.mxu0
    %v765 = vadd.f32 0.0, %v764
    %v766 = vpop.f32.mrf.mxu0
    %767 = vdwg.mxu0
    %768 = vmatpush.bf16.msra.mxu0 %v627
    %769 = vmatpush.bf16.msra.mxu0 %v614
    %770 = vmatpush.bf16.msra.mxu0 %v601
    %771 = vmatpush.bf16.msra.mxu0 %v588
    %772 = vmatpush.bf16.msra.mxu0 %v575
    %773 = vmatpush.bf16.msra.mxu0 %v562
    %774 = vmatpush.bf16.msra.mxu0 %v549
    %775 = vmatpush.bf16.msra.mxu0 %v536
    %776 = vmatmul.bf16.gmra.mxu0 %v213
    %v777 = vpop.f32.mrf.mxu0
    %v778 = vadd.f32 0.0, %v777
    %v779 = vpop.f32.mrf.mxu0
    %780 = vdwg.mxu0
    %781 = vmatpush.bf16.msra.mxu0 %v628
    %782 = vmatpush.bf16.msra.mxu0 %v615
    %783 = vmatpush.bf16.msra.mxu0 %v602
    %784 = vmatpush.bf16.msra.mxu0 %v589
    %785 = vmatpush.bf16.msra.mxu0 %v576
    %786 = vmatpush.bf16.msra.mxu0 %v563
    %787 = vmatpush.bf16.msra.mxu0 %v550
    %788 = vmatpush.bf16.msra.mxu0 %v537
    %789 = vmatmul.bf16.gmra.mxu0 %v213
    %v790 = vpop.f32.mrf.mxu0
    %v791 = vadd.f32 0.0, %v790
    %v792 = vpop.f32.mrf.mxu0
    %793 = vdwg.mxu0
    %794 = vmatpush.bf16.msra.mxu0 %v629
    %795 = vmatpush.bf16.msra.mxu0 %v616
    %796 = vmatpush.bf16.msra.mxu0 %v603
    %797 = vmatpush.bf16.msra.mxu0 %v590
    %798 = vmatpush.bf16.msra.mxu0 %v577
    %799 = vmatpush.bf16.msra.mxu0 %v564
    %800 = vmatpush.bf16.msra.mxu0 %v551
    %801 = vmatpush.bf16.msra.mxu0 %v538
    %802 = vmatmul.bf16.gmra.mxu0 %v213
    %v803 = vpop.f32.mrf.mxu0
    %v804 = vadd.f32 0.0, %v803
    %v805 = vpop.f32.mrf.mxu0
    %806 = vdwg.mxu0
    %807 = vmatpush.bf16.msra.mxu0 %v630
    %808 = vmatpush.bf16.msra.mxu0 %v617
    %809 = vmatpush.bf16.msra.mxu0 %v604
    %810 = vmatpush.bf16.msra.mxu0 %v591
    %811 = vmatpush.bf16.msra.mxu0 %v578
    %812 = vmatpush.bf16.msra.mxu0 %v565
    %813 = vmatpush.bf16.msra.mxu0 %v552
    %814 = vmatpush.bf16.msra.mxu0 %v539
    %815 = vmatmul.bf16.gmra.mxu0 %v213
    %v816 = vpop.f32.mrf.mxu0
    %v817 = vadd.f32 0.0, %v816
    %v818 = vpop.f32.mrf.mxu0
    %819 = vdwg.mxu0
    %820 = vmatpush.bf16.msra.mxu0 %v631
    %821 = vmatpush.bf16.msra.mxu0 %v618
    %822 = vmatpush.bf16.msra.mxu0 %v605
    %823 = vmatpush.bf16.msra.mxu0 %v592
    %824 = vmatpush.bf16.msra.mxu0 %v579
    %825 = vmatpush.bf16.msra.mxu0 %v566
    %826 = vmatpush.bf16.msra.mxu0 %v553
    %827 = vmatpush.bf16.msra.mxu0 %v540
    %828 = vmatmul.bf16.gmra.mxu0 %v213
    %v829 = vpop.f32.mrf.mxu0
    %v830 = vadd.f32 0.0, %v829
    %v831 = vpop.f32.mrf.mxu0
    %832 = vdwg.mxu0
    %833 = vmatpush.bf16.msra.mxu0 %v632
    %834 = vmatpush.bf16.msra.mxu0 %v619
    %835 = vmatpush.bf16.msra.mxu0 %v606
    %836 = vmatpush.bf16.msra.mxu0 %v593
    %837 = vmatpush.bf16.msra.mxu0 %v580
    %838 = vmatpush.bf16.msra.mxu0 %v567
    %839 = vmatpush.bf16.msra.mxu0 %v554
    %840 = vmatpush.bf16.msra.mxu0 %v541
    %841 = vmatmul.bf16.gmra.mxu0 %v213
    %v842 = vpop.f32.mrf.mxu0
    %v843 = vadd.f32 0.0, %v842
    %v844 = vpop.f32.mrf.mxu0
    %845 = vdwg.mxu0
    %846 = vmatpush.bf16.msra.mxu0 %v633
    %847 = vmatpush.bf16.msra.mxu0 %v620
    %848 = vmatpush.bf16.msra.mxu0 %v607
    %849 = vmatpush.bf16.msra.mxu0 %v594
    %850 = vmatpush.bf16.msra.mxu0 %v581
    %851 = vmatpush.bf16.msra.mxu0 %v568
    %852 = vmatpush.bf16.msra.mxu0 %v555
    %853 = vmatpush.bf16.msra.mxu0 %v542
    %854 = vmatmul.bf16.gmra.mxu0 %v213
    %v855 = vpop.f32.mrf.mxu0
    %v856 = vadd.f32 0.0, %v855
    %v857 = vpop.f32.mrf.mxu0
    %858 = vdwg.mxu0
    %859 = vmatpush.bf16.msra.mxu0 %v634
    %860 = vmatpush.bf16.msra.mxu0 %v621
    %861 = vmatpush.bf16.msra.mxu0 %v608
    %862 = vmatpush.bf16.msra.mxu0 %v595
    %863 = vmatpush.bf16.msra.mxu0 %v582
    %864 = vmatpush.bf16.msra.mxu0 %v569
    %865 = vmatpush.bf16.msra.mxu0 %v556
    %866 = vmatpush.bf16.msra.mxu0 %v543
    %867 = vmatmul.bf16.gmra.mxu0 %v213
    %v868 = vpop.f32.mrf.mxu0
    %v869 = vadd.f32 0.0, %v868
    %v870 = vpop.f32.mrf.mxu0
    %871 = vdwg.mxu0
    %872 = vmatpush.bf16.msra.mxu0 %v635
    %873 = vmatpush.bf16.msra.mxu0 %v622
    %874 = vmatpush.bf16.msra.mxu0 %v609
    %875 = vmatpush.bf16.msra.mxu0 %v596
    %876 = vmatpush.bf16.msra.mxu0 %v583
    %877 = vmatpush.bf16.msra.mxu0 %v570
    %878 = vmatpush.bf16.msra.mxu0 %v557
    %879 = vmatpush.bf16.msra.mxu0 %v544
    %880 = vmatmul.bf16.gmra.mxu0 %v213
    %v881 = vpop.f32.mrf.mxu0
    %v882 = vadd.f32 0.0, %v881
    %v883 = vpop.f32.mrf.mxu0
    %884 = vdwg.mxu0
    %885 = vmatpush.bf16.msra.mxu0 %v636
    %886 = vmatpush.bf16.msra.mxu0 %v623
    %887 = vmatpush.bf16.msra.mxu0 %v610
    %888 = vmatpush.bf16.msra.mxu0 %v597
    %889 = vmatpush.bf16.msra.mxu0 %v584
    %890 = vmatpush.bf16.msra.mxu0 %v571
    %891 = vmatpush.bf16.msra.mxu0 %v558
    %892 = vmatpush.bf16.msra.mxu0 %v545
    %893 = vmatmul.bf16.gmra.mxu0 %v213
    %v894 = vpop.f32.mrf.mxu0
    %v895 = vadd.f32 0.0, %v894
    %v896 = vpop.f32.mrf.mxu0
    %897 = vdwg.mxu0
    %898 = vmatpush.bf16.msra.mxu0 %v637
    %899 = vmatpush.bf16.msra.mxu0 %v624
    %900 = vmatpush.bf16.msra.mxu0 %v611
    %901 = vmatpush.bf16.msra.mxu0 %v598
    %902 = vmatpush.bf16.msra.mxu0 %v585
    %903 = vmatpush.bf16.msra.mxu0 %v572
    %904 = vmatpush.bf16.msra.mxu0 %v559
    %905 = vmatpush.bf16.msra.mxu0 %v546
    %906 = vmatmul.bf16.gmra.mxu0 %v213
    %v907 = vpop.f32.mrf.mxu0
    %v908 = vadd.f32 0.0, %v907
    %v909 = vpop.f32.mrf.mxu0
    %910 = vdwg.mxu0
    %911 = vmatpush.bf16.msra.mxu0 %v625
    %912 = vmatpush.bf16.msra.mxu0 %v612
    %913 = vmatpush.bf16.msra.mxu0 %v599
    %914 = vmatpush.bf16.msra.mxu0 %v586
    %915 = vmatpush.bf16.msra.mxu0 %v573
    %916 = vmatpush.bf16.msra.mxu0 %v560
    %917 = vmatpush.bf16.msra.mxu0 %v547
    %918 = vmatpush.bf16.msra.mxu0 %v534
    %919 = vmatmul.bf16.gmra.mxu0 %v212
    %v920 = vpop.f32.mrf.mxu0
    %v921 = vadd.f32 %v752, %v920
    %v922 = vpop.f32.mrf.mxu0
    %923 = vdwg.mxu0
    %924 = vmatpush.bf16.msra.mxu0 %v626
    %925 = vmatpush.bf16.msra.mxu0 %v613
    %926 = vmatpush.bf16.msra.mxu0 %v600
    %927 = vmatpush.bf16.msra.mxu0 %v587
    %928 = vmatpush.bf16.msra.mxu0 %v574
    %929 = vmatpush.bf16.msra.mxu0 %v561
    %930 = vmatpush.bf16.msra.mxu0 %v548
    %931 = vmatpush.bf16.msra.mxu0 %v535
    %932 = vmatmul.bf16.gmra.mxu0 %v212
    %v933 = vpop.f32.mrf.mxu0
    %v934 = vadd.f32 %v765, %v933
    %v935 = vpop.f32.mrf.mxu0
    %936 = vdwg.mxu0
    %937 = vmatpush.bf16.msra.mxu0 %v627
    %938 = vmatpush.bf16.msra.mxu0 %v614
    %939 = vmatpush.bf16.msra.mxu0 %v601
    %940 = vmatpush.bf16.msra.mxu0 %v588
    %941 = vmatpush.bf16.msra.mxu0 %v575
    %942 = vmatpush.bf16.msra.mxu0 %v562
    %943 = vmatpush.bf16.msra.mxu0 %v549
    %944 = vmatpush.bf16.msra.mxu0 %v536
    %945 = vmatmul.bf16.gmra.mxu0 %v212
    %v946 = vpop.f32.mrf.mxu0
    %v947 = vadd.f32 %v778, %v946
    %v948 = vpop.f32.mrf.mxu0
    %949 = vdwg.mxu0
    %950 = vmatpush.bf16.msra.mxu0 %v628
    %951 = vmatpush.bf16.msra.mxu0 %v615
    %952 = vmatpush.bf16.msra.mxu0 %v602
    %953 = vmatpush.bf16.msra.mxu0 %v589
    %954 = vmatpush.bf16.msra.mxu0 %v576
    %955 = vmatpush.bf16.msra.mxu0 %v563
    %956 = vmatpush.bf16.msra.mxu0 %v550
    %957 = vmatpush.bf16.msra.mxu0 %v537
    %958 = vmatmul.bf16.gmra.mxu0 %v212
    %v959 = vpop.f32.mrf.mxu0
    %v960 = vadd.f32 %v791, %v959
    %v961 = vpop.f32.mrf.mxu0
    %962 = vdwg.mxu0
    %963 = vmatpush.bf16.msra.mxu0 %v629
    %964 = vmatpush.bf16.msra.mxu0 %v616
    %965 = vmatpush.bf16.msra.mxu0 %v603
    %966 = vmatpush.bf16.msra.mxu0 %v590
    %967 = vmatpush.bf16.msra.mxu0 %v577
    %968 = vmatpush.bf16.msra.mxu0 %v564
    %969 = vmatpush.bf16.msra.mxu0 %v551
    %970 = vmatpush.bf16.msra.mxu0 %v538
    %971 = vmatmul.bf16.gmra.mxu0 %v212
    %v972 = vpop.f32.mrf.mxu0
    %v973 = vadd.f32 %v804, %v972
    %v974 = vpop.f32.mrf.mxu0
    %975 = vdwg.mxu0
    %976 = vmatpush.bf16.msra.mxu0 %v630
    %977 = vmatpush.bf16.msra.mxu0 %v617
    %978 = vmatpush.bf16.msra.mxu0 %v604
    %979 = vmatpush.bf16.msra.mxu0 %v591
    %980 = vmatpush.bf16.msra.mxu0 %v578
    %981 = vmatpush.bf16.msra.mxu0 %v565
    %982 = vmatpush.bf16.msra.mxu0 %v552
    %983 = vmatpush.bf16.msra.mxu0 %v539
    %984 = vmatmul.bf16.gmra.mxu0 %v212
    %v985 = vpop.f32.mrf.mxu0
    %v986 = vadd.f32 %v817, %v985
    %v987 = vpop.f32.mrf.mxu0
    %988 = vdwg.mxu0
    %989 = vmatpush.bf16.msra.mxu0 %v631
    %990 = vmatpush.bf16.msra.mxu0 %v618
    %991 = vmatpush.bf16.msra.mxu0 %v605
    %992 = vmatpush.bf16.msra.mxu0 %v592
    %993 = vmatpush.bf16.msra.mxu0 %v579
    %994 = vmatpush.bf16.msra.mxu0 %v566
    %995 = vmatpush.bf16.msra.mxu0 %v553
    %996 = vmatpush.bf16.msra.mxu0 %v540
    %997 = vmatmul.bf16.gmra.mxu0 %v212
    %v998 = vpop.f32.mrf.mxu0
    %v999 = vadd.f32 %v830, %v998
    %v1000 = vpop.f32.mrf.mxu0
    %1001 = vdwg.mxu0
    %1002 = vmatpush.bf16.msra.mxu0 %v632
    %1003 = vmatpush.bf16.msra.mxu0 %v619
    %1004 = vmatpush.bf16.msra.mxu0 %v606
    %1005 = vmatpush.bf16.msra.mxu0 %v593
    %1006 = vmatpush.bf16.msra.mxu0 %v580
    %1007 = vmatpush.bf16.msra.mxu0 %v567
    %1008 = vmatpush.bf16.msra.mxu0 %v554
    %1009 = vmatpush.bf16.msra.mxu0 %v541
    %1010 = vmatmul.bf16.gmra.mxu0 %v212
    %v1011 = vpop.f32.mrf.mxu0
    %v1012 = vadd.f32 %v843, %v1011
    %v1013 = vpop.f32.mrf.mxu0
    %1014 = vdwg.mxu0
    %1015 = vmatpush.bf16.msra.mxu0 %v633
    %1016 = vmatpush.bf16.msra.mxu0 %v620
    %1017 = vmatpush.bf16.msra.mxu0 %v607
    %1018 = vmatpush.bf16.msra.mxu0 %v594
    %1019 = vmatpush.bf16.msra.mxu0 %v581
    %1020 = vmatpush.bf16.msra.mxu0 %v568
    %1021 = vmatpush.bf16.msra.mxu0 %v555
    %1022 = vmatpush.bf16.msra.mxu0 %v542
    %1023 = vmatmul.bf16.gmra.mxu0 %v212
    %v1024 = vpop.f32.mrf.mxu0
    %v1025 = vadd.f32 %v856, %v1024
    %v1026 = vpop.f32.mrf.mxu0
    %1027 = vdwg.mxu0
    %1028 = vmatpush.bf16.msra.mxu0 %v634
    %1029 = vmatpush.bf16.msra.mxu0 %v621
    %1030 = vmatpush.bf16.msra.mxu0 %v608
    %1031 = vmatpush.bf16.msra.mxu0 %v595
    %1032 = vmatpush.bf16.msra.mxu0 %v582
    %1033 = vmatpush.bf16.msra.mxu0 %v569
    %1034 = vmatpush.bf16.msra.mxu0 %v556
    %1035 = vmatpush.bf16.msra.mxu0 %v543
    %1036 = vmatmul.bf16.gmra.mxu0 %v212
    %v1037 = vpop.f32.mrf.mxu0
    %v1038 = vadd.f32 %v869, %v1037
    %v1039 = vpop.f32.mrf.mxu0
    %1040 = vdwg.mxu0
    %1041 = vmatpush.bf16.msra.mxu0 %v635
    %1042 = vmatpush.bf16.msra.mxu0 %v622
    %1043 = vmatpush.bf16.msra.mxu0 %v609
    %1044 = vmatpush.bf16.msra.mxu0 %v596
    %1045 = vmatpush.bf16.msra.mxu0 %v583
    %1046 = vmatpush.bf16.msra.mxu0 %v570
    %1047 = vmatpush.bf16.msra.mxu0 %v557
    %1048 = vmatpush.bf16.msra.mxu0 %v544
    %1049 = vmatmul.bf16.gmra.mxu0 %v212
    %v1050 = vpop.f32.mrf.mxu0
    %v1051 = vadd.f32 %v882, %v1050
    %v1052 = vpop.f32.mrf.mxu0
    %1053 = vdwg.mxu0
    %1054 = vmatpush.bf16.msra.mxu0 %v636
    %1055 = vmatpush.bf16.msra.mxu0 %v623
    %1056 = vmatpush.bf16.msra.mxu0 %v610
    %1057 = vmatpush.bf16.msra.mxu0 %v597
    %1058 = vmatpush.bf16.msra.mxu0 %v584
    %1059 = vmatpush.bf16.msra.mxu0 %v571
    %1060 = vmatpush.bf16.msra.mxu0 %v558
    %1061 = vmatpush.bf16.msra.mxu0 %v545
    %1062 = vmatmul.bf16.gmra.mxu0 %v212
    %v1063 = vpop.f32.mrf.mxu0
    %v1064 = vadd.f32 %v895, %v1063
    %v1065 = vpop.f32.mrf.mxu0
    %1066 = vdwg.mxu0
    %1067 = vmatpush.bf16.msra.mxu0 %v637
    %1068 = vmatpush.bf16.msra.mxu0 %v624
    %1069 = vmatpush.bf16.msra.mxu0 %v611
    %1070 = vmatpush.bf16.msra.mxu0 %v598
    %1071 = vmatpush.bf16.msra.mxu0 %v585
    %1072 = vmatpush.bf16.msra.mxu0 %v572
    %1073 = vmatpush.bf16.msra.mxu0 %v559
    %1074 = vmatpush.bf16.msra.mxu0 %v546
    %1075 = vmatmul.bf16.gmra.mxu0 %v212
    %v1076 = vpop.f32.mrf.mxu0
    %v1077 = vadd.f32 %v908, %v1076
    %v1078 = vpop.f32.mrf.mxu0
    %1079 = vdwg.mxu0
    %v1080 = vpack.c.bf16 %v99, %v99
    %1081 = vmatpush.bf16.msra.mxu0 %v625
    %1082 = vmatpush.bf16.msra.mxu0 %v612
    %1083 = vmatpush.bf16.msra.mxu0 %v599
    %1084 = vmatpush.bf16.msra.mxu0 %v586
    %1085 = vmatpush.bf16.msra.mxu0 %v573
    %1086 = vmatpush.bf16.msra.mxu0 %v560
    %1087 = vmatpush.bf16.msra.mxu0 %v547
    %1088 = vmatpush.bf16.msra.mxu0 %v534
    %1089 = vmatmul.bf16.gmra.mxu0 %v1080
    %v1090 = vpop.f32.mrf.mxu0
    %v1091 = vadd.f32 0.0, %v1090
    %v1092 = vpop.f32.mrf.mxu0
    %1093 = vdwg.mxu0
    %1094 = vmatpush.bf16.msra.mxu0 %v626
    %1095 = vmatpush.bf16.msra.mxu0 %v613
    %1096 = vmatpush.bf16.msra.mxu0 %v600
    %1097 = vmatpush.bf16.msra.mxu0 %v587
    %1098 = vmatpush.bf16.msra.mxu0 %v574
    %1099 = vmatpush.bf16.msra.mxu0 %v561
    %1100 = vmatpush.bf16.msra.mxu0 %v548
    %1101 = vmatpush.bf16.msra.mxu0 %v535
    %1102 = vmatmul.bf16.gmra.mxu0 %v1080
    %v1103 = vpop.f32.mrf.mxu0
    %v1104 = vadd.f32 0.0, %v1103
    %v1105 = vpop.f32.mrf.mxu0
    %1106 = vdwg.mxu0
    %1107 = vmatpush.bf16.msra.mxu0 %v627
    %1108 = vmatpush.bf16.msra.mxu0 %v614
    %1109 = vmatpush.bf16.msra.mxu0 %v601
    %1110 = vmatpush.bf16.msra.mxu0 %v588
    %1111 = vmatpush.bf16.msra.mxu0 %v575
    %1112 = vmatpush.bf16.msra.mxu0 %v562
    %1113 = vmatpush.bf16.msra.mxu0 %v549
    %1114 = vmatpush.bf16.msra.mxu0 %v536
    %1115 = vmatmul.bf16.gmra.mxu0 %v1080
    %v1116 = vpop.f32.mrf.mxu0
    %v1117 = vadd.f32 0.0, %v1116
    %v1118 = vpop.f32.mrf.mxu0
    %1119 = vdwg.mxu0
    %1120 = vmatpush.bf16.msra.mxu0 %v628
    %1121 = vmatpush.bf16.msra.mxu0 %v615
    %1122 = vmatpush.bf16.msra.mxu0 %v602
    %1123 = vmatpush.bf16.msra.mxu0 %v589
    %1124 = vmatpush.bf16.msra.mxu0 %v576
    %1125 = vmatpush.bf16.msra.mxu0 %v563
    %1126 = vmatpush.bf16.msra.mxu0 %v550
    %1127 = vmatpush.bf16.msra.mxu0 %v537
    %1128 = vmatmul.bf16.gmra.mxu0 %v1080
    %v1129 = vpop.f32.mrf.mxu0
    %v1130 = vadd.f32 0.0, %v1129
    %v1131 = vpop.f32.mrf.mxu0
    %1132 = vdwg.mxu0
    %1133 = vmatpush.bf16.msra.mxu0 %v629
    %1134 = vmatpush.bf16.msra.mxu0 %v616
    %1135 = vmatpush.bf16.msra.mxu0 %v603
    %1136 = vmatpush.bf16.msra.mxu0 %v590
    %1137 = vmatpush.bf16.msra.mxu0 %v577
    %1138 = vmatpush.bf16.msra.mxu0 %v564
    %1139 = vmatpush.bf16.msra.mxu0 %v551
    %1140 = vmatpush.bf16.msra.mxu0 %v538
    %1141 = vmatmul.bf16.gmra.mxu0 %v1080
    %v1142 = vpop.f32.mrf.mxu0
    %v1143 = vadd.f32 0.0, %v1142
    %v1144 = vpop.f32.mrf.mxu0
    %1145 = vdwg.mxu0
    %1146 = vmatpush.bf16.msra.mxu0 %v630
    %1147 = vmatpush.bf16.msra.mxu0 %v617
    %1148 = vmatpush.bf16.msra.mxu0 %v604
    %1149 = vmatpush.bf16.msra.mxu0 %v591
    %1150 = vmatpush.bf16.msra.mxu0 %v578
    %1151 = vmatpush.bf16.msra.mxu0 %v565
    %1152 = vmatpush.bf16.msra.mxu0 %v552
    %1153 = vmatpush.bf16.msra.mxu0 %v539
    %1154 = vmatmul.bf16.gmra.mxu0 %v1080
    %v1155 = vpop.f32.mrf.mxu0
    %v1156 = vadd.f32 0.0, %v1155
    %v1157 = vpop.f32.mrf.mxu0
    %1158 = vdwg.mxu0
    %1159 = vmatpush.bf16.msra.mxu0 %v631
    %1160 = vmatpush.bf16.msra.mxu0 %v618
    %1161 = vmatpush.bf16.msra.mxu0 %v605
    %1162 = vmatpush.bf16.msra.mxu0 %v592
    %1163 = vmatpush.bf16.msra.mxu0 %v579
    %1164 = vmatpush.bf16.msra.mxu0 %v566
    %1165 = vmatpush.bf16.msra.mxu0 %v553
    %1166 = vmatpush.bf16.msra.mxu0 %v540
    %1167 = vmatmul.bf16.gmra.mxu0 %v1080
    %v1168 = vpop.f32.mrf.mxu0
    %v1169 = vadd.f32 0.0, %v1168
    %v1170 = vpop.f32.mrf.mxu0
    %1171 = vdwg.mxu0
    %1172 = vmatpush.bf16.msra.mxu0 %v632
    %1173 = vmatpush.bf16.msra.mxu0 %v619
    %1174 = vmatpush.bf16.msra.mxu0 %v606
    %1175 = vmatpush.bf16.msra.mxu0 %v593
    %1176 = vmatpush.bf16.msra.mxu0 %v580
    %1177 = vmatpush.bf16.msra.mxu0 %v567
    %1178 = vmatpush.bf16.msra.mxu0 %v554
    %1179 = vmatpush.bf16.msra.mxu0 %v541
    %1180 = vmatmul.bf16.gmra.mxu0 %v1080
    %v1181 = vpop.f32.mrf.mxu0
    %v1182 = vadd.f32 0.0, %v1181
    %v1183 = vpop.f32.mrf.mxu0
    %1184 = vdwg.mxu0
    %1185 = vmatpush.bf16.msra.mxu0 %v633
    %1186 = vmatpush.bf16.msra.mxu0 %v620
    %1187 = vmatpush.bf16.msra.mxu0 %v607
    %1188 = vmatpush.bf16.msra.mxu0 %v594
    %1189 = vmatpush.bf16.msra.mxu0 %v581
    %1190 = vmatpush.bf16.msra.mxu0 %v568
    %1191 = vmatpush.bf16.msra.mxu0 %v555
    %1192 = vmatpush.bf16.msra.mxu0 %v542
    %1193 = vmatmul.bf16.gmra.mxu0 %v1080
    %v1194 = vpop.f32.mrf.mxu0
    %v1195 = vadd.f32 0.0, %v1194
    %v1196 = vpop.f32.mrf.mxu0
    %1197 = vdwg.mxu0
    %1198 = vmatpush.bf16.msra.mxu0 %v634
    %1199 = vmatpush.bf16.msra.mxu0 %v621
    %1200 = vmatpush.bf16.msra.mxu0 %v608
    %1201 = vmatpush.bf16.msra.mxu0 %v595
    %1202 = vmatpush.bf16.msra.mxu0 %v582
    %1203 = vmatpush.bf16.msra.mxu0 %v569
    %1204 = vmatpush.bf16.msra.mxu0 %v556
    %1205 = vmatpush.bf16.msra.mxu0 %v543
    %1206 = vmatmul.bf16.gmra.mxu0 %v1080
    %v1207 = vpop.f32.mrf.mxu0
    %v1208 = vadd.f32 0.0, %v1207
    %v1209 = vpop.f32.mrf.mxu0
    %1210 = vdwg.mxu0
    %1211 = vmatpush.bf16.msra.mxu0 %v635
    %1212 = vmatpush.bf16.msra.mxu0 %v622
    %1213 = vmatpush.bf16.msra.mxu0 %v609
    %1214 = vmatpush.bf16.msra.mxu0 %v596
    %1215 = vmatpush.bf16.msra.mxu0 %v583
    %1216 = vmatpush.bf16.msra.mxu0 %v570
    %1217 = vmatpush.bf16.msra.mxu0 %v557
    %1218 = vmatpush.bf16.msra.mxu0 %v544
    %1219 = vmatmul.bf16.gmra.mxu0 %v1080
    %v1220 = vpop.f32.mrf.mxu0
    %v1221 = vadd.f32 0.0, %v1220
    %v1222 = vpop.f32.mrf.mxu0
    %1223 = vdwg.mxu0
    %1224 = vmatpush.bf16.msra.mxu0 %v636
    %1225 = vmatpush.bf16.msra.mxu0 %v623
    %1226 = vmatpush.bf16.msra.mxu0 %v610
    %1227 = vmatpush.bf16.msra.mxu0 %v597
    %1228 = vmatpush.bf16.msra.mxu0 %v584
    %1229 = vmatpush.bf16.msra.mxu0 %v571
    %1230 = vmatpush.bf16.msra.mxu0 %v558
    %1231 = vmatpush.bf16.msra.mxu0 %v545
    %1232 = vmatmul.bf16.gmra.mxu0 %v1080
    %v1233 = vpop.f32.mrf.mxu0
    %v1234 = vadd.f32 0.0, %v1233
    %v1235 = vpop.f32.mrf.mxu0
    %1236 = vdwg.mxu0
    %1237 = vmatpush.bf16.msra.mxu0 %v637
    %1238 = vmatpush.bf16.msra.mxu0 %v624
    %1239 = vmatpush.bf16.msra.mxu0 %v611
    %1240 = vmatpush.bf16.msra.mxu0 %v598
    %1241 = vmatpush.bf16.msra.mxu0 %v585
    %1242 = vmatpush.bf16.msra.mxu0 %v572
    %1243 = vmatpush.bf16.msra.mxu0 %v559
    %1244 = vmatpush.bf16.msra.mxu0 %v546
    %1245 = vmatmul.bf16.gmra.mxu0 %v1080
    %v1246 = vpop.f32.mrf.mxu0
    %v1247 = vadd.f32 0.0, %v1246
    %v1248 = vpop.f32.mrf.mxu0
    %1249 = vdwg.mxu0
    %v1250 = vadd.f32 %v921, %v1091
    %v1251 = vadd.f32 %v934, %v1104
    %v1252 = vadd.f32 %v947, %v1117
    %v1253 = vadd.f32 %v960, %v1130
    %v1254 = vadd.f32 %v973, %v1143
    %v1255 = vadd.f32 %v986, %v1156
    %v1256 = vadd.f32 %v999, %v1169
    %v1257 = vadd.f32 %v1012, %v1182
    %v1258 = vadd.f32 %v1025, %v1195
    %v1259 = vadd.f32 %v1038, %v1208
    %v1260 = vadd.f32 %v1051, %v1221
    %v1261 = vadd.f32 %v1064, %v1234
    %v1262 = vadd.f32 %v1077, %v1247
    %v1263 = vld [vmem:[#allocation5] sm:$0xff]
    %v1264 = vld [vmem:[#allocation5 + $0x8] sm:$0x1f]
    %v1267 = vperm.slane %v1263, 0
    %v1268 = vperm.slane %v1263, 1
    %v1269 = vperm.slane %v1263, 2
    %v1270 = vperm.slane %v1263, 3
    %v1271 = vperm.slane %v1263, 4
    %v1272 = vperm.slane %v1263, 5
    %v1273 = vperm.slane %v1263, 6
    %v1274 = vperm.slane %v1263, 7
    %v1275 = vperm.slane %v1264, 0
    %v1276 = vperm.slane %v1264, 1
    %v1277 = vperm.slane %v1264, 2
    %v1278 = vperm.slane %v1264, 3
    %v1279 = vperm.slane %v1264, 4
    %v1293 = vmul.f32 %v1250, %v1267
    %v1294 = vmul.f32 %v1251, %v1268
    %v1295 = vmul.f32 %v1252, %v1269
    %v1296 = vmul.f32 %v1253, %v1270
    %v1297 = vmul.f32 %v1254, %v1271
    %v1298 = vmul.f32 %v1255, %v1272
    %v1299 = vmul.f32 %v1256, %v1273
    %v1300 = vmul.f32 %v1257, %v1274
    %v1301 = vmul.f32 %v1258, %v1275
    %v1302 = vmul.f32 %v1259, %v1276
    %v1303 = vmul.f32 %v1260, %v1277
    %v1304 = vmul.f32 %v1261, %v1278
    %v1305 = vmul.f32 %v1262, %v1279
    %v1306 = vld [vmem:[#allocation7] sm:$0xff]
    %v1307 = vld [vmem:[#allocation7 + $0x8] sm:$0x1f]
    %v1310 = vperm.slane %v1306, 0
    %v1311 = vperm.slane %v1306, 1
    %v1312 = vperm.slane %v1306, 2
    %v1313 = vperm.slane %v1306, 3
    %v1314 = vperm.slane %v1306, 4
    %v1315 = vperm.slane %v1306, 5
    %v1316 = vperm.slane %v1306, 6
    %v1317 = vperm.slane %v1306, 7
    %v1318 = vperm.slane %v1307, 0
    %v1319 = vperm.slane %v1307, 1
    %v1320 = vperm.slane %v1307, 2
    %v1321 = vperm.slane %v1307, 3
    %v1322 = vperm.slane %v1307, 4
    %v1336 = vadd.f32 %v1293, %v1310
    %v1337 = vadd.f32 %v1294, %v1311
    %v1338 = vadd.f32 %v1295, %v1312
    %v1339 = vadd.f32 %v1296, %v1313
    %v1340 = vadd.f32 %v1297, %v1314
    %v1341 = vadd.f32 %v1298, %v1315
    %v1342 = vadd.f32 %v1299, %v1316
    %v1343 = vadd.f32 %v1300, %v1317
    %v1344 = vadd.f32 %v1301, %v1318
    %v1345 = vadd.f32 %v1302, %v1319
    %v1346 = vadd.f32 %v1303, %v1320
    %v1347 = vadd.f32 %v1304, %v1321
    %v1348 = vadd.f32 %v1305, %v1322
    %v1349 = vand.u32 2147483647, %v1336
    %vm1350 = vcmp.le.f32.partialorder %v1349, 0.7853982
    %vm1351 = vcmp.lt.s32.totalorder %v1336, 0
    %v1352 = vand.u32 %v1336, 2139095040
    %v1353 = vshrl.u32 %v1352, 23
    %v1354 = vsub.s32 %v1353, 127
    %v1355 = vand.u32 2147483647, %v1336
    %v1356 = vand.u32 %v1355, 8388607
    %v1357 = vor.u32 %v1356, 8388608
    %v1358 = vsub.s32 0, %v1357
    %v1359 = vadd.s32 %v1354, 1
    %vm1360 = vcmp.gt.s32.totalorder %v1359, 0
    %v1361 = vsel %vm1360, %v1359, 0
    %v1362 = vshrl.u32 %v1361, 5
    %v1363 = vand.u32 %v1361, 31
    %v1364 = vsub.s32 32, %v1363
    %v1365 = vshrl.u32 683565275, %v1364
    %v1366 = vshll.u32 683565275, %v1363
    %v1367 = vshrl.u32 2475754826, %v1364
    %v1368 = vor.u32 %v1366, %v1367
    %v1369 = vshll.u32 2475754826, %v1363
    %v1370 = vshrl.u32 2131351028, %v1364
    %v1371 = vor.u32 %v1369, %v1370
    %v1372 = vshll.u32 2131351028, %v1363
    %v1373 = vshrl.u32 2102212464, %v1364
    %v1374 = vor.u32 %v1372, %v1373
    %v1375 = vshll.u32 2102212464, %v1363
    %v1376 = vshrl.u32 920167782, %v1364
    %v1377 = vor.u32 %v1375, %v1376
    %v1378 = vshll.u32 920167782, %v1363
    %v1379 = vshrl.u32 1326507024, %v1364
    %v1380 = vor.u32 %v1378, %v1379
    %vm1381 = vcmp.lt.s32.totalorder %v1362, 1
    %vm1382 = vcmp.lt.s32.totalorder %v1362, 2
    %vm1383 = vcmp.lt.s32.totalorder %v1362, 3
    %vm1384 = vcmp.lt.s32.totalorder %v1362, 4
    %v1385 = vsel %vm1381, %v1365, %v1368
    %v1386 = vsel %vm1384, %v1374, 2102212464
    %v1387 = vsel %vm1383, %v1371, %v1386
    %v1388 = vsel %vm1382, %v1385, %v1387
    %v1389 = vsel %vm1381, %v1368, %v1371
    %v1390 = vsel %vm1384, %v1377, 920167782
    %v1391 = vsel %vm1383, %v1374, %v1390
    %v1392 = vsel %vm1382, %v1389, %v1391
    %v1393 = vsel %vm1381, %v1371, %v1374
    %v1394 = vsel %vm1384, %v1380, 1326507024
    %v1395 = vsel %vm1383, %v1377, %v1394
    %v1396 = vsel %vm1382, %v1393, %v1395
    %v1397 = vshll.u32 %v1357, 8
    %v1398 = vand.u32 %v1397, 65535
    %v1399 = vshrl.u32 %v1397, 16
    %v1400 = vand.u32 %v1396, 65535
    %v1401 = vshrl.u32 %v1396, 16
    %v1402 = vmul.u32 %v1398, %v1400
    %v1403 = vmul.u32 %v1398, %v1401
    %v1404 = vmul.u32 %v1399, %v1400
    %v1405 = vmul.u32 %v1399, %v1401
    %v1406 = vshll.u32 %v1403, 16
    %v1407 = vshrl.u32 %v1403, 16
    %v1408 = vshll.u32 %v1404, 16
    %v1409 = vshrl.u32 %v1404, 16
    %vm1410 = vc.u32 %v1402, %v1406
    %v1411 = vsel %vm1410, 1, 0
    %v1412 = vadd.s32 %v1402, %v1406
    %v1413 = vadd.s32 %v1405, %v1411
    %vm1414 = vc.u32 %v1412, %v1408
    %v1415 = vsel %vm1414, 1, 0
    %v1416 = vadd.s32 %v1412, %v1408
    %v1417 = vadd.s32 %v1413, %v1415
    %v1418 = vadd.s32 %v1417, %v1407
    %v1419 = vadd.s32 %v1418, %v1409
    %v1420 = vand.u32 %v1397, 65535
    %v1421 = vshrl.u32 %v1397, 16
    %v1422 = vand.u32 %v1392, 65535
    %v1423 = vshrl.u32 %v1392, 16
    %v1424 = vmul.u32 %v1420, %v1422
    %v1425 = vmul.u32 %v1420, %v1423
    %v1426 = vmul.u32 %v1421, %v1422
    %v1427 = vmul.u32 %v1421, %v1423
    %v1428 = vshll.u32 %v1425, 16
    %v1429 = vshrl.u32 %v1425, 16
    %v1430 = vshll.u32 %v1426, 16
    %v1431 = vshrl.u32 %v1426, 16
    %vm1432 = vc.u32 %v1424, %v1428
    %v1433 = vsel %vm1432, 1, 0
    %v1434 = vadd.s32 %v1424, %v1428
    %v1435 = vadd.s32 %v1427, %v1433
    %vm1436 = vc.u32 %v1434, %v1430
    %v1437 = vsel %vm1436, 1, 0
    %v1438 = vadd.s32 %v1434, %v1430
    %v1439 = vadd.s32 %v1435, %v1437
    %v1440 = vadd.s32 %v1439, %v1429
    %v1441 = vadd.s32 %v1440, %v1431
    %v1442 = vmul.u32 %v1397, %v1388
    %v1443 = vadd.s32 %v1419, %v1438
    %vm1444 = vc.u32 %v1419, %v1438
    %v1445 = vadd.s32 %v1441, 1
    %v1446 = vsel %vm1444, %v1445, %v1441
    %v1447 = vadd.s32 %v1442, %v1446
    %v1448 = vadd.s32 %v1447, 536870912
    %v1449 = vshrl.u32 %v1448, 30
    %v1450 = vshll.u32 %v1449, 30
    %v1451 = vsub.s32 %v1447, %v1450
    %vm1452 = vcmp.lt.s32.totalorder %v1451, 0
    %v1453 = vsub.s32 0, %v1451
    %v1454 = vsel %vm1452, %v1453, %v1451
    %v1455 = vclz %v1454
    %v1456 = vsub.s32 %v1455, 2
    %vm1457 = vcmp.gt.s32.totalorder 0, %v1456
    %v1458 = vsel %vm1457, 0, %v1456
    %v1459 = vsub.s32 32, %v1458
    %v1460 = vshll.u32 %v1451, %v1458
    %v1461 = vshrl.u32 %v1443, %v1459
    %v1462 = vor.u32 %v1460, %v1461
    %v1463 = vsub.s32 4294967266, %v1458
    %v1464 = vadd.s32 %v1463, 127
    %v1465 = vshll.u32 %v1464, 23
    %v1466 = vor.u32 4788187, %v1465
    %v1467 = vand.u32 2147483647, %v1466
    %v1469 = vcvt.s32.f32 %v1462
    %v1470 = vmul.f32 %v1469, %v1467
    %v1471 = vxor.u32 %v1470, 2147483648
    %v1472 = vsel %vm1351, %v1471, %v1470
    %v1473 = vsub.s32 4, %v1449
    %v1474 = vsel %vm1351, %v1473, %v1449
    %v1475 = vsel %vm1350, %v1336, %v1472
    %v1476 = vsel %vm1350, 0, %v1474
    %v1477 = vmul.f32 %v1475, %v1475
    %v1478 = vmul.f32 %v1477, -0.001358992
    %v1479 = vadd.f32 %v1478, 0.041655596
    %v1480 = vmul.f32 %v1477, %v1479
    %v1481 = vadd.f32 %v1480, -0.4999988
    %v1482 = vmul.f32 %v1477, %v1481
    %v1483 = vadd.f32 1.0, %v1482
    %v1484 = vmul.f32 %v1475, %v1475
    %v1485 = vmul.f32 %v1484, -0.00019511016
    %v1486 = vadd.f32 %v1485, 0.008332121
    %v1487 = vmul.f32 %v1484, %v1486
    %v1488 = vadd.f32 %v1487, -0.16666654
    %v1489 = vmul.f32 %v1484, %v1488
    %v1490 = vadd.f32 %v1489, 1.0
    %v1491 = vmul.f32 %v1490, %v1475
    %vm1492 = vweird.f32 %v1336
    %v1493 = vadd.s32 %v1476, 3
    %v1494 = vand.u32 %v1493, 3
    %vm1495 = vcmp.lt.s32.totalorder %v1494, 2
    %vm1496 = vcmp.eq.s32.totalorder %v1494, 0
    %v1497 = vxor.u32 %v1491, 2147483648
    %v1498 = vsel %vm1496, %v1483, %v1497
    %vm1499 = vcmp.eq.s32.totalorder %v1494, 2
    %v1500 = vxor.u32 %v1483, 2147483648
    %v1501 = vsel %vm1499, %v1500, %v1491
    %v1502 = vsel %vm1495, %v1498, %v1501
    %v1503 = vsel %vm1492, nan, %v1502
    %v1504 = vand.u32 2147483647, %v1337
    %vm1505 = vcmp.le.f32.partialorder %v1504, 0.7853982
    %vm1506 = vcmp.lt.s32.totalorder %v1337, 0
    %v1507 = vand.u32 %v1337, 2139095040
    %v1508 = vshrl.u32 %v1507, 23
    %v1509 = vsub.s32 %v1508, 127
    %v1510 = vand.u32 2147483647, %v1337
    %v1511 = vand.u32 %v1510, 8388607
    %v1512 = vor.u32 %v1511, 8388608
    %v1513 = vsub.s32 0, %v1512
    %v1514 = vadd.s32 %v1509, 1
    %vm1515 = vcmp.gt.s32.totalorder %v1514, 0
    %v1516 = vsel %vm1515, %v1514, 0
    %v1517 = vshrl.u32 %v1516, 5
    %v1518 = vand.u32 %v1516, 31
    %v1519 = vsub.s32 32, %v1518
    %v1520 = vshrl.u32 683565275, %v1519
    %v1521 = vshll.u32 683565275, %v1518
    %v1522 = vshrl.u32 2475754826, %v1519
    %v1523 = vor.u32 %v1521, %v1522
    %v1524 = vshll.u32 2475754826, %v1518
    %v1525 = vshrl.u32 2131351028, %v1519
    %v1526 = vor.u32 %v1524, %v1525
    %v1527 = vshll.u32 2131351028, %v1518
    %v1528 = vshrl.u32 2102212464, %v1519
    %v1529 = vor.u32 %v1527, %v1528
    %v1530 = vshll.u32 2102212464, %v1518
    %v1531 = vshrl.u32 920167782, %v1519
    %v1532 = vor.u32 %v1530, %v1531
    %v1533 = vshll.u32 920167782, %v1518
    %v1534 = vshrl.u32 1326507024, %v1519
    %v1535 = vor.u32 %v1533, %v1534
    %vm1536 = vcmp.lt.s32.totalorder %v1517, 1
    %vm1537 = vcmp.lt.s32.totalorder %v1517, 2
    %vm1538 = vcmp.lt.s32.totalorder %v1517, 3
    %vm1539 = vcmp.lt.s32.totalorder %v1517, 4
    %v1540 = vsel %vm1536, %v1520, %v1523
    %v1541 = vsel %vm1539, %v1529, 2102212464
    %v1542 = vsel %vm1538, %v1526, %v1541
    %v1543 = vsel %vm1537, %v1540, %v1542
    %v1544 = vsel %vm1536, %v1523, %v1526
    %v1545 = vsel %vm1539, %v1532, 920167782
    %v1546 = vsel %vm1538, %v1529, %v1545
    %v1547 = vsel %vm1537, %v1544, %v1546
    %v1548 = vsel %vm1536, %v1526, %v1529
    %v1549 = vsel %vm1539, %v1535, 1326507024
    %v1550 = vsel %vm1538, %v1532, %v1549
    %v1551 = vsel %vm1537, %v1548, %v1550
    %v1552 = vshll.u32 %v1512, 8
    %v1553 = vand.u32 %v1552, 65535
    %v1554 = vshrl.u32 %v1552, 16
    %v1555 = vand.u32 %v1551, 65535
    %v1556 = vshrl.u32 %v1551, 16
    %v1557 = vmul.u32 %v1553, %v1555
    %v1558 = vmul.u32 %v1553, %v1556
    %v1559 = vmul.u32 %v1554, %v1555
    %v1560 = vmul.u32 %v1554, %v1556
    %v1561 = vshll.u32 %v1558, 16
    %v1562 = vshrl.u32 %v1558, 16
    %v1563 = vshll.u32 %v1559, 16
    %v1564 = vshrl.u32 %v1559, 16
    %vm1565 = vc.u32 %v1557, %v1561
    %v1566 = vsel %vm1565, 1, 0
    %v1567 = vadd.s32 %v1557, %v1561
    %v1568 = vadd.s32 %v1560, %v1566
    %vm1569 = vc.u32 %v1567, %v1563
    %v1570 = vsel %vm1569, 1, 0
    %v1571 = vadd.s32 %v1567, %v1563
    %v1572 = vadd.s32 %v1568, %v1570
    %v1573 = vadd.s32 %v1572, %v1562
    %v1574 = vadd.s32 %v1573, %v1564
    %v1575 = vand.u32 %v1552, 65535
    %v1576 = vshrl.u32 %v1552, 16
    %v1577 = vand.u32 %v1547, 65535
    %v1578 = vshrl.u32 %v1547, 16
    %v1579 = vmul.u32 %v1575, %v1577
    %v1580 = vmul.u32 %v1575, %v1578
    %v1581 = vmul.u32 %v1576, %v1577
    %v1582 = vmul.u32 %v1576, %v1578
    %v1583 = vshll.u32 %v1580, 16
    %v1584 = vshrl.u32 %v1580, 16
    %v1585 = vshll.u32 %v1581, 16
    %v1586 = vshrl.u32 %v1581, 16
    %vm1587 = vc.u32 %v1579, %v1583
    %v1588 = vsel %vm1587, 1, 0
    %v1589 = vadd.s32 %v1579, %v1583
    %v1590 = vadd.s32 %v1582, %v1588
    %vm1591 = vc.u32 %v1589, %v1585
    %v1592 = vsel %vm1591, 1, 0
    %v1593 = vadd.s32 %v1589, %v1585
    %v1594 = vadd.s32 %v1590, %v1592
    %v1595 = vadd.s32 %v1594, %v1584
    %v1596 = vadd.s32 %v1595, %v1586
    %v1597 = vmul.u32 %v1552, %v1543
    %v1598 = vadd.s32 %v1574, %v1593
    %vm1599 = vc.u32 %v1574, %v1593
    %v1600 = vadd.s32 %v1596, 1
    %v1601 = vsel %vm1599, %v1600, %v1596
    %v1602 = vadd.s32 %v1597, %v1601
    %v1603 = vadd.s32 %v1602, 536870912
    %v1604 = vshrl.u32 %v1603, 30
    %v1605 = vshll.u32 %v1604, 30
    %v1606 = vsub.s32 %v1602, %v1605
    %vm1607 = vcmp.lt.s32.totalorder %v1606, 0
    %v1608 = vsub.s32 0, %v1606
    %v1609 = vsel %vm1607, %v1608, %v1606
    %v1610 = vclz %v1609
    %v1611 = vsub.s32 %v1610, 2
    %vm1612 = vcmp.gt.s32.totalorder 0, %v1611
    %v1613 = vsel %vm1612, 0, %v1611
    %v1614 = vsub.s32 32, %v1613
    %v1615 = vshll.u32 %v1606, %v1613
    %v1616 = vshrl.u32 %v1598, %v1614
    %v1617 = vor.u32 %v1615, %v1616
    %v1618 = vsub.s32 4294967266, %v1613
    %v1619 = vadd.s32 %v1618, 127
    %v1620 = vshll.u32 %v1619, 23
    %v1621 = vor.u32 4788187, %v1620
    %v1622 = vand.u32 2147483647, %v1621
    %v1624 = vcvt.s32.f32 %v1617
    %v1625 = vmul.f32 %v1624, %v1622
    %v1626 = vxor.u32 %v1625, 2147483648
    %v1627 = vsel %vm1506, %v1626, %v1625
    %v1628 = vsub.s32 4, %v1604
    %v1629 = vsel %vm1506, %v1628, %v1604
    %v1630 = vsel %vm1505, %v1337, %v1627
    %v1631 = vsel %vm1505, 0, %v1629
    %v1632 = vmul.f32 %v1630, %v1630
    %v1633 = vmul.f32 %v1632, -0.001358992
    %v1634 = vadd.f32 %v1633, 0.041655596
    %v1635 = vmul.f32 %v1632, %v1634
    %v1636 = vadd.f32 %v1635, -0.4999988
    %v1637 = vmul.f32 %v1632, %v1636
    %v1638 = vadd.f32 1.0, %v1637
    %v1639 = vmul.f32 %v1630, %v1630
    %v1640 = vmul.f32 %v1639, -0.00019511016
    %v1641 = vadd.f32 %v1640, 0.008332121
    %v1642 = vmul.f32 %v1639, %v1641
    %v1643 = vadd.f32 %v1642, -0.16666654
    %v1644 = vmul.f32 %v1639, %v1643
    %v1645 = vadd.f32 %v1644, 1.0
    %v1646 = vmul.f32 %v1645, %v1630
    %vm1647 = vweird.f32 %v1337
    %v1648 = vadd.s32 %v1631, 3
    %v1649 = vand.u32 %v1648, 3
    %vm1650 = vcmp.lt.s32.totalorder %v1649, 2
    %vm1651 = vcmp.eq.s32.totalorder %v1649, 0
    %v1652 = vxor.u32 %v1646, 2147483648
    %v1653 = vsel %vm1651, %v1638, %v1652
    %vm1654 = vcmp.eq.s32.totalorder %v1649, 2
    %v1655 = vxor.u32 %v1638, 2147483648
    %v1656 = vsel %vm1654, %v1655, %v1646
    %v1657 = vsel %vm1650, %v1653, %v1656
    %v1658 = vsel %vm1647, nan, %v1657
    %v1659 = vand.u32 2147483647, %v1338
    %vm1660 = vcmp.le.f32.partialorder %v1659, 0.7853982
    %vm1661 = vcmp.lt.s32.totalorder %v1338, 0
    %v1662 = vand.u32 %v1338, 2139095040
    %v1663 = vshrl.u32 %v1662, 23
    %v1664 = vsub.s32 %v1663, 127
    %v1665 = vand.u32 2147483647, %v1338
    %v1666 = vand.u32 %v1665, 8388607
    %v1667 = vor.u32 %v1666, 8388608
    %v1668 = vsub.s32 0, %v1667
    %v1669 = vadd.s32 %v1664, 1
    %vm1670 = vcmp.gt.s32.totalorder %v1669, 0
    %v1671 = vsel %vm1670, %v1669, 0
    %v1672 = vshrl.u32 %v1671, 5
    %v1673 = vand.u32 %v1671, 31
    %v1674 = vsub.s32 32, %v1673
    %v1675 = vshrl.u32 683565275, %v1674
    %v1676 = vshll.u32 683565275, %v1673
    %v1677 = vshrl.u32 2475754826, %v1674
    %v1678 = vor.u32 %v1676, %v1677
    %v1679 = vshll.u32 2475754826, %v1673
    %v1680 = vshrl.u32 2131351028, %v1674
    %v1681 = vor.u32 %v1679, %v1680
    %v1682 = vshll.u32 2131351028, %v1673
    %v1683 = vshrl.u32 2102212464, %v1674
    %v1684 = vor.u32 %v1682, %v1683
    %v1685 = vshll.u32 2102212464, %v1673
    %v1686 = vshrl.u32 920167782, %v1674
    %v1687 = vor.u32 %v1685, %v1686
    %v1688 = vshll.u32 920167782, %v1673
    %v1689 = vshrl.u32 1326507024, %v1674
    %v1690 = vor.u32 %v1688, %v1689
    %vm1691 = vcmp.lt.s32.totalorder %v1672, 1
    %vm1692 = vcmp.lt.s32.totalorder %v1672, 2
    %vm1693 = vcmp.lt.s32.totalorder %v1672, 3
    %vm1694 = vcmp.lt.s32.totalorder %v1672, 4
    %v1695 = vsel %vm1691, %v1675, %v1678
    %v1696 = vsel %vm1694, %v1684, 2102212464
    %v1697 = vsel %vm1693, %v1681, %v1696
    %v1698 = vsel %vm1692, %v1695, %v1697
    %v1699 = vsel %vm1691, %v1678, %v1681
    %v1700 = vsel %vm1694, %v1687, 920167782
    %v1701 = vsel %vm1693, %v1684, %v1700
    %v1702 = vsel %vm1692, %v1699, %v1701
    %v1703 = vsel %vm1691, %v1681, %v1684
    %v1704 = vsel %vm1694, %v1690, 1326507024
    %v1705 = vsel %vm1693, %v1687, %v1704
    %v1706 = vsel %vm1692, %v1703, %v1705
    %v1707 = vshll.u32 %v1667, 8
    %v1708 = vand.u32 %v1707, 65535
    %v1709 = vshrl.u32 %v1707, 16
    %v1710 = vand.u32 %v1706, 65535
    %v1711 = vshrl.u32 %v1706, 16
    %v1712 = vmul.u32 %v1708, %v1710
    %v1713 = vmul.u32 %v1708, %v1711
    %v1714 = vmul.u32 %v1709, %v1710
    %v1715 = vmul.u32 %v1709, %v1711
    %v1716 = vshll.u32 %v1713, 16
    %v1717 = vshrl.u32 %v1713, 16
    %v1718 = vshll.u32 %v1714, 16
    %v1719 = vshrl.u32 %v1714, 16
    %vm1720 = vc.u32 %v1712, %v1716
    %v1721 = vsel %vm1720, 1, 0
    %v1722 = vadd.s32 %v1712, %v1716
    %v1723 = vadd.s32 %v1715, %v1721
    %vm1724 = vc.u32 %v1722, %v1718
    %v1725 = vsel %vm1724, 1, 0
    %v1726 = vadd.s32 %v1722, %v1718
    %v1727 = vadd.s32 %v1723, %v1725
    %v1728 = vadd.s32 %v1727, %v1717
    %v1729 = vadd.s32 %v1728, %v1719
    %v1730 = vand.u32 %v1707, 65535
    %v1731 = vshrl.u32 %v1707, 16
    %v1732 = vand.u32 %v1702, 65535
    %v1733 = vshrl.u32 %v1702, 16
    %v1734 = vmul.u32 %v1730, %v1732
    %v1735 = vmul.u32 %v1730, %v1733
    %v1736 = vmul.u32 %v1731, %v1732
    %v1737 = vmul.u32 %v1731, %v1733
    %v1738 = vshll.u32 %v1735, 16
    %v1739 = vshrl.u32 %v1735, 16
    %v1740 = vshll.u32 %v1736, 16
    %v1741 = vshrl.u32 %v1736, 16
    %vm1742 = vc.u32 %v1734, %v1738
    %v1743 = vsel %vm1742, 1, 0
    %v1744 = vadd.s32 %v1734, %v1738
    %v1745 = vadd.s32 %v1737, %v1743
    %vm1746 = vc.u32 %v1744, %v1740
    %v1747 = vsel %vm1746, 1, 0
    %v1748 = vadd.s32 %v1744, %v1740
    %v1749 = vadd.s32 %v1745, %v1747
    %v1750 = vadd.s32 %v1749, %v1739
    %v1751 = vadd.s32 %v1750, %v1741
    %v1752 = vmul.u32 %v1707, %v1698
    %v1753 = vadd.s32 %v1729, %v1748
    %vm1754 = vc.u32 %v1729, %v1748
    %v1755 = vadd.s32 %v1751, 1
    %v1756 = vsel %vm1754, %v1755, %v1751
    %v1757 = vadd.s32 %v1752, %v1756
    %v1758 = vadd.s32 %v1757, 536870912
    %v1759 = vshrl.u32 %v1758, 30
    %v1760 = vshll.u32 %v1759, 30
    %v1761 = vsub.s32 %v1757, %v1760
    %vm1762 = vcmp.lt.s32.totalorder %v1761, 0
    %v1763 = vsub.s32 0, %v1761
    %v1764 = vsel %vm1762, %v1763, %v1761
    %v1765 = vclz %v1764
    %v1766 = vsub.s32 %v1765, 2
    %vm1767 = vcmp.gt.s32.totalorder 0, %v1766
    %v1768 = vsel %vm1767, 0, %v1766
    %v1769 = vsub.s32 32, %v1768
    %v1770 = vshll.u32 %v1761, %v1768
    %v1771 = vshrl.u32 %v1753, %v1769
    %v1772 = vor.u32 %v1770, %v1771
    %v1773 = vsub.s32 4294967266, %v1768
    %v1774 = vadd.s32 %v1773, 127
    %v1775 = vshll.u32 %v1774, 23
    %v1776 = vor.u32 4788187, %v1775
    %v1777 = vand.u32 2147483647, %v1776
    %v1779 = vcvt.s32.f32 %v1772
    %v1780 = vmul.f32 %v1779, %v1777
    %v1781 = vxor.u32 %v1780, 2147483648
    %v1782 = vsel %vm1661, %v1781, %v1780
    %v1783 = vsub.s32 4, %v1759
    %v1784 = vsel %vm1661, %v1783, %v1759
    %v1785 = vsel %vm1660, %v1338, %v1782
    %v1786 = vsel %vm1660, 0, %v1784
    %v1787 = vmul.f32 %v1785, %v1785
    %v1788 = vmul.f32 %v1787, -0.001358992
    %v1789 = vadd.f32 %v1788, 0.041655596
    %v1790 = vmul.f32 %v1787, %v1789
    %v1791 = vadd.f32 %v1790, -0.4999988
    %v1792 = vmul.f32 %v1787, %v1791
    %v1793 = vadd.f32 1.0, %v1792
    %v1794 = vmul.f32 %v1785, %v1785
    %v1795 = vmul.f32 %v1794, -0.00019511016
    %v1796 = vadd.f32 %v1795, 0.008332121
    %v1797 = vmul.f32 %v1794, %v1796
    %v1798 = vadd.f32 %v1797, -0.16666654
    %v1799 = vmul.f32 %v1794, %v1798
    %v1800 = vadd.f32 %v1799, 1.0
    %v1801 = vmul.f32 %v1800, %v1785
    %vm1802 = vweird.f32 %v1338
    %v1803 = vadd.s32 %v1786, 3
    %v1804 = vand.u32 %v1803, 3
    %vm1805 = vcmp.lt.s32.totalorder %v1804, 2
    %vm1806 = vcmp.eq.s32.totalorder %v1804, 0
    %v1807 = vxor.u32 %v1801, 2147483648
    %v1808 = vsel %vm1806, %v1793, %v1807
    %vm1809 = vcmp.eq.s32.totalorder %v1804, 2
    %v1810 = vxor.u32 %v1793, 2147483648
    %v1811 = vsel %vm1809, %v1810, %v1801
    %v1812 = vsel %vm1805, %v1808, %v1811
    %v1813 = vsel %vm1802, nan, %v1812
    %v1814 = vand.u32 2147483647, %v1339
    %vm1815 = vcmp.le.f32.partialorder %v1814, 0.7853982
    %vm1816 = vcmp.lt.s32.totalorder %v1339, 0
    %v1817 = vand.u32 %v1339, 2139095040
    %v1818 = vshrl.u32 %v1817, 23
    %v1819 = vsub.s32 %v1818, 127
    %v1820 = vand.u32 2147483647, %v1339
    %v1821 = vand.u32 %v1820, 8388607
    %v1822 = vor.u32 %v1821, 8388608
    %v1823 = vsub.s32 0, %v1822
    %v1824 = vadd.s32 %v1819, 1
    %vm1825 = vcmp.gt.s32.totalorder %v1824, 0
    %v1826 = vsel %vm1825, %v1824, 0
    %v1827 = vshrl.u32 %v1826, 5
    %v1828 = vand.u32 %v1826, 31
    %v1829 = vsub.s32 32, %v1828
    %v1830 = vshrl.u32 683565275, %v1829
    %v1831 = vshll.u32 683565275, %v1828
    %v1832 = vshrl.u32 2475754826, %v1829
    %v1833 = vor.u32 %v1831, %v1832
    %v1834 = vshll.u32 2475754826, %v1828
    %v1835 = vshrl.u32 2131351028, %v1829
    %v1836 = vor.u32 %v1834, %v1835
    %v1837 = vshll.u32 2131351028, %v1828
    %v1838 = vshrl.u32 2102212464, %v1829
    %v1839 = vor.u32 %v1837, %v1838
    %v1840 = vshll.u32 2102212464, %v1828
    %v1841 = vshrl.u32 920167782, %v1829
    %v1842 = vor.u32 %v1840, %v1841
    %v1843 = vshll.u32 920167782, %v1828
    %v1844 = vshrl.u32 1326507024, %v1829
    %v1845 = vor.u32 %v1843, %v1844
    %vm1846 = vcmp.lt.s32.totalorder %v1827, 1
    %vm1847 = vcmp.lt.s32.totalorder %v1827, 2
    %vm1848 = vcmp.lt.s32.totalorder %v1827, 3
    %vm1849 = vcmp.lt.s32.totalorder %v1827, 4
    %v1850 = vsel %vm1846, %v1830, %v1833
    %v1851 = vsel %vm1849, %v1839, 2102212464
    %v1852 = vsel %vm1848, %v1836, %v1851
    %v1853 = vsel %vm1847, %v1850, %v1852
    %v1854 = vsel %vm1846, %v1833, %v1836
    %v1855 = vsel %vm1849, %v1842, 920167782
    %v1856 = vsel %vm1848, %v1839, %v1855
    %v1857 = vsel %vm1847, %v1854, %v1856
    %v1858 = vsel %vm1846, %v1836, %v1839
    %v1859 = vsel %vm1849, %v1845, 1326507024
    %v1860 = vsel %vm1848, %v1842, %v1859
    %v1861 = vsel %vm1847, %v1858, %v1860
    %v1862 = vshll.u32 %v1822, 8
    %v1863 = vand.u32 %v1862, 65535
    %v1864 = vshrl.u32 %v1862, 16
    %v1865 = vand.u32 %v1861, 65535
    %v1866 = vshrl.u32 %v1861, 16
    %v1867 = vmul.u32 %v1863, %v1865
    %v1868 = vmul.u32 %v1863, %v1866
    %v1869 = vmul.u32 %v1864, %v1865
    %v1870 = vmul.u32 %v1864, %v1866
    %v1871 = vshll.u32 %v1868, 16
    %v1872 = vshrl.u32 %v1868, 16
    %v1873 = vshll.u32 %v1869, 16
    %v1874 = vshrl.u32 %v1869, 16
    %vm1875 = vc.u32 %v1867, %v1871
    %v1876 = vsel %vm1875, 1, 0
    %v1877 = vadd.s32 %v1867, %v1871
    %v1878 = vadd.s32 %v1870, %v1876
    %vm1879 = vc.u32 %v1877, %v1873
    %v1880 = vsel %vm1879, 1, 0
    %v1881 = vadd.s32 %v1877, %v1873
    %v1882 = vadd.s32 %v1878, %v1880
    %v1883 = vadd.s32 %v1882, %v1872
    %v1884 = vadd.s32 %v1883, %v1874
    %v1885 = vand.u32 %v1862, 65535
    %v1886 = vshrl.u32 %v1862, 16
    %v1887 = vand.u32 %v1857, 65535
    %v1888 = vshrl.u32 %v1857, 16
    %v1889 = vmul.u32 %v1885, %v1887
    %v1890 = vmul.u32 %v1885, %v1888
    %v1891 = vmul.u32 %v1886, %v1887
    %v1892 = vmul.u32 %v1886, %v1888
    %v1893 = vshll.u32 %v1890, 16
    %v1894 = vshrl.u32 %v1890, 16
    %v1895 = vshll.u32 %v1891, 16
    %v1896 = vshrl.u32 %v1891, 16
    %vm1897 = vc.u32 %v1889, %v1893
    %v1898 = vsel %vm1897, 1, 0
    %v1899 = vadd.s32 %v1889, %v1893
    %v1900 = vadd.s32 %v1892, %v1898
    %vm1901 = vc.u32 %v1899, %v1895
    %v1902 = vsel %vm1901, 1, 0
    %v1903 = vadd.s32 %v1899, %v1895
    %v1904 = vadd.s32 %v1900, %v1902
    %v1905 = vadd.s32 %v1904, %v1894
    %v1906 = vadd.s32 %v1905, %v1896
    %v1907 = vmul.u32 %v1862, %v1853
    %v1908 = vadd.s32 %v1884, %v1903
    %vm1909 = vc.u32 %v1884, %v1903
    %v1910 = vadd.s32 %v1906, 1
    %v1911 = vsel %vm1909, %v1910, %v1906
    %v1912 = vadd.s32 %v1907, %v1911
    %v1913 = vadd.s32 %v1912, 536870912
    %v1914 = vshrl.u32 %v1913, 30
    %v1915 = vshll.u32 %v1914, 30
    %v1916 = vsub.s32 %v1912, %v1915
    %vm1917 = vcmp.lt.s32.totalorder %v1916, 0
    %v1918 = vsub.s32 0, %v1916
    %v1919 = vsel %vm1917, %v1918, %v1916
    %v1920 = vclz %v1919
    %v1921 = vsub.s32 %v1920, 2
    %vm1922 = vcmp.gt.s32.totalorder 0, %v1921
    %v1923 = vsel %vm1922, 0, %v1921
    %v1924 = vsub.s32 32, %v1923
    %v1925 = vshll.u32 %v1916, %v1923
    %v1926 = vshrl.u32 %v1908, %v1924
    %v1927 = vor.u32 %v1925, %v1926
    %v1928 = vsub.s32 4294967266, %v1923
    %v1929 = vadd.s32 %v1928, 127
    %v1930 = vshll.u32 %v1929, 23
    %v1931 = vor.u32 4788187, %v1930
    %v1932 = vand.u32 2147483647, %v1931
    %v1934 = vcvt.s32.f32 %v1927
    %v1935 = vmul.f32 %v1934, %v1932
    %v1936 = vxor.u32 %v1935, 2147483648
    %v1937 = vsel %vm1816, %v1936, %v1935
    %v1938 = vsub.s32 4, %v1914
    %v1939 = vsel %vm1816, %v1938, %v1914
    %v1940 = vsel %vm1815, %v1339, %v1937
    %v1941 = vsel %vm1815, 0, %v1939
    %v1942 = vmul.f32 %v1940, %v1940
    %v1943 = vmul.f32 %v1942, -0.001358992
    %v1944 = vadd.f32 %v1943, 0.041655596
    %v1945 = vmul.f32 %v1942, %v1944
    %v1946 = vadd.f32 %v1945, -0.4999988
    %v1947 = vmul.f32 %v1942, %v1946
    %v1948 = vadd.f32 1.0, %v1947
    %v1949 = vmul.f32 %v1940, %v1940
    %v1950 = vmul.f32 %v1949, -0.00019511016
    %v1951 = vadd.f32 %v1950, 0.008332121
    %v1952 = vmul.f32 %v1949, %v1951
    %v1953 = vadd.f32 %v1952, -0.16666654
    %v1954 = vmul.f32 %v1949, %v1953
    %v1955 = vadd.f32 %v1954, 1.0
    %v1956 = vmul.f32 %v1955, %v1940
    %vm1957 = vweird.f32 %v1339
    %v1958 = vadd.s32 %v1941, 3
    %v1959 = vand.u32 %v1958, 3
    %vm1960 = vcmp.lt.s32.totalorder %v1959, 2
    %vm1961 = vcmp.eq.s32.totalorder %v1959, 0
    %v1962 = vxor.u32 %v1956, 2147483648
    %v1963 = vsel %vm1961, %v1948, %v1962
    %vm1964 = vcmp.eq.s32.totalorder %v1959, 2
    %v1965 = vxor.u32 %v1948, 2147483648
    %v1966 = vsel %vm1964, %v1965, %v1956
    %v1967 = vsel %vm1960, %v1963, %v1966
    %v1968 = vsel %vm1957, nan, %v1967
    %v1969 = vand.u32 2147483647, %v1340
    %vm1970 = vcmp.le.f32.partialorder %v1969, 0.7853982
    %vm1971 = vcmp.lt.s32.totalorder %v1340, 0
    %v1972 = vand.u32 %v1340, 2139095040
    %v1973 = vshrl.u32 %v1972, 23
    %v1974 = vsub.s32 %v1973, 127
    %v1975 = vand.u32 2147483647, %v1340
    %v1976 = vand.u32 %v1975, 8388607
    %v1977 = vor.u32 %v1976, 8388608
    %v1978 = vsub.s32 0, %v1977
    %v1979 = vadd.s32 %v1974, 1
    %vm1980 = vcmp.gt.s32.totalorder %v1979, 0
    %v1981 = vsel %vm1980, %v1979, 0
    %v1982 = vshrl.u32 %v1981, 5
    %v1983 = vand.u32 %v1981, 31
    %v1984 = vsub.s32 32, %v1983
    %v1985 = vshrl.u32 683565275, %v1984
    %v1986 = vshll.u32 683565275, %v1983
    %v1987 = vshrl.u32 2475754826, %v1984
    %v1988 = vor.u32 %v1986, %v1987
    %v1989 = vshll.u32 2475754826, %v1983
    %v1990 = vshrl.u32 2131351028, %v1984
    %v1991 = vor.u32 %v1989, %v1990
    %v1992 = vshll.u32 2131351028, %v1983
    %v1993 = vshrl.u32 2102212464, %v1984
    %v1994 = vor.u32 %v1992, %v1993
    %v1995 = vshll.u32 2102212464, %v1983
    %v1996 = vshrl.u32 920167782, %v1984
    %v1997 = vor.u32 %v1995, %v1996
    %v1998 = vshll.u32 920167782, %v1983
    %v1999 = vshrl.u32 1326507024, %v1984
    %v2000 = vor.u32 %v1998, %v1999
    %vm2001 = vcmp.lt.s32.totalorder %v1982, 1
    %vm2002 = vcmp.lt.s32.totalorder %v1982, 2
    %vm2003 = vcmp.lt.s32.totalorder %v1982, 3
    %vm2004 = vcmp.lt.s32.totalorder %v1982, 4
    %v2005 = vsel %vm2001, %v1985, %v1988
    %v2006 = vsel %vm2004, %v1994, 2102212464
    %v2007 = vsel %vm2003, %v1991, %v2006
    %v2008 = vsel %vm2002, %v2005, %v2007
    %v2009 = vsel %vm2001, %v1988, %v1991
    %v2010 = vsel %vm2004, %v1997, 920167782
    %v2011 = vsel %vm2003, %v1994, %v2010
    %v2012 = vsel %vm2002, %v2009, %v2011
    %v2013 = vsel %vm2001, %v1991, %v1994
    %v2014 = vsel %vm2004, %v2000, 1326507024
    %v2015 = vsel %vm2003, %v1997, %v2014
    %v2016 = vsel %vm2002, %v2013, %v2015
    %v2017 = vshll.u32 %v1977, 8
    %v2018 = vand.u32 %v2017, 65535
    %v2019 = vshrl.u32 %v2017, 16
    %v2020 = vand.u32 %v2016, 65535
    %v2021 = vshrl.u32 %v2016, 16
    %v2022 = vmul.u32 %v2018, %v2020
    %v2023 = vmul.u32 %v2018, %v2021
    %v2024 = vmul.u32 %v2019, %v2020
    %v2025 = vmul.u32 %v2019, %v2021
    %v2026 = vshll.u32 %v2023, 16
    %v2027 = vshrl.u32 %v2023, 16
    %v2028 = vshll.u32 %v2024, 16
    %v2029 = vshrl.u32 %v2024, 16
    %vm2030 = vc.u32 %v2022, %v2026
    %v2031 = vsel %vm2030, 1, 0
    %v2032 = vadd.s32 %v2022, %v2026
    %v2033 = vadd.s32 %v2025, %v2031
    %vm2034 = vc.u32 %v2032, %v2028
    %v2035 = vsel %vm2034, 1, 0
    %v2036 = vadd.s32 %v2032, %v2028
    %v2037 = vadd.s32 %v2033, %v2035
    %v2038 = vadd.s32 %v2037, %v2027
    %v2039 = vadd.s32 %v2038, %v2029
    %v2040 = vand.u32 %v2017, 65535
    %v2041 = vshrl.u32 %v2017, 16
    %v2042 = vand.u32 %v2012, 65535
    %v2043 = vshrl.u32 %v2012, 16
    %v2044 = vmul.u32 %v2040, %v2042
    %v2045 = vmul.u32 %v2040, %v2043
    %v2046 = vmul.u32 %v2041, %v2042
    %v2047 = vmul.u32 %v2041, %v2043
    %v2048 = vshll.u32 %v2045, 16
    %v2049 = vshrl.u32 %v2045, 16
    %v2050 = vshll.u32 %v2046, 16
    %v2051 = vshrl.u32 %v2046, 16
    %vm2052 = vc.u32 %v2044, %v2048
    %v2053 = vsel %vm2052, 1, 0
    %v2054 = vadd.s32 %v2044, %v2048
    %v2055 = vadd.s32 %v2047, %v2053
    %vm2056 = vc.u32 %v2054, %v2050
    %v2057 = vsel %vm2056, 1, 0
    %v2058 = vadd.s32 %v2054, %v2050
    %v2059 = vadd.s32 %v2055, %v2057
    %v2060 = vadd.s32 %v2059, %v2049
    %v2061 = vadd.s32 %v2060, %v2051
    %v2062 = vmul.u32 %v2017, %v2008
    %v2063 = vadd.s32 %v2039, %v2058
    %vm2064 = vc.u32 %v2039, %v2058
    %v2065 = vadd.s32 %v2061, 1
    %v2066 = vsel %vm2064, %v2065, %v2061
    %v2067 = vadd.s32 %v2062, %v2066
    %v2068 = vadd.s32 %v2067, 536870912
    %v2069 = vshrl.u32 %v2068, 30
    %v2070 = vshll.u32 %v2069, 30
    %v2071 = vsub.s32 %v2067, %v2070
    %vm2072 = vcmp.lt.s32.totalorder %v2071, 0
    %v2073 = vsub.s32 0, %v2071
    %v2074 = vsel %vm2072, %v2073, %v2071
    %v2075 = vclz %v2074
    %v2076 = vsub.s32 %v2075, 2
    %vm2077 = vcmp.gt.s32.totalorder 0, %v2076
    %v2078 = vsel %vm2077, 0, %v2076
    %v2079 = vsub.s32 32, %v2078
    %v2080 = vshll.u32 %v2071, %v2078
    %v2081 = vshrl.u32 %v2063, %v2079
    %v2082 = vor.u32 %v2080, %v2081
    %v2083 = vsub.s32 4294967266, %v2078
    %v2084 = vadd.s32 %v2083, 127
    %v2085 = vshll.u32 %v2084, 23
    %v2086 = vor.u32 4788187, %v2085
    %v2087 = vand.u32 2147483647, %v2086
    %v2089 = vcvt.s32.f32 %v2082
    %v2090 = vmul.f32 %v2089, %v2087
    %v2091 = vxor.u32 %v2090, 2147483648
    %v2092 = vsel %vm1971, %v2091, %v2090
    %v2093 = vsub.s32 4, %v2069
    %v2094 = vsel %vm1971, %v2093, %v2069
    %v2095 = vsel %vm1970, %v1340, %v2092
    %v2096 = vsel %vm1970, 0, %v2094
    %v2097 = vmul.f32 %v2095, %v2095
    %v2098 = vmul.f32 %v2097, -0.001358992
    %v2099 = vadd.f32 %v2098, 0.041655596
    %v2100 = vmul.f32 %v2097, %v2099
    %v2101 = vadd.f32 %v2100, -0.4999988
    %v2102 = vmul.f32 %v2097, %v2101
    %v2103 = vadd.f32 1.0, %v2102
    %v2104 = vmul.f32 %v2095, %v2095
    %v2105 = vmul.f32 %v2104, -0.00019511016
    %v2106 = vadd.f32 %v2105, 0.008332121
    %v2107 = vmul.f32 %v2104, %v2106
    %v2108 = vadd.f32 %v2107, -0.16666654
    %v2109 = vmul.f32 %v2104, %v2108
    %v2110 = vadd.f32 %v2109, 1.0
    %v2111 = vmul.f32 %v2110, %v2095
    %vm2112 = vweird.f32 %v1340
    %v2113 = vadd.s32 %v2096, 3
    %v2114 = vand.u32 %v2113, 3
    %vm2115 = vcmp.lt.s32.totalorder %v2114, 2
    %vm2116 = vcmp.eq.s32.totalorder %v2114, 0
    %v2117 = vxor.u32 %v2111, 2147483648
    %v2118 = vsel %vm2116, %v2103, %v2117
    %vm2119 = vcmp.eq.s32.totalorder %v2114, 2
    %v2120 = vxor.u32 %v2103, 2147483648
    %v2121 = vsel %vm2119, %v2120, %v2111
    %v2122 = vsel %vm2115, %v2118, %v2121
    %v2123 = vsel %vm2112, nan, %v2122
    %v2124 = vand.u32 2147483647, %v1341
    %vm2125 = vcmp.le.f32.partialorder %v2124, 0.7853982
    %vm2126 = vcmp.lt.s32.totalorder %v1341, 0
    %v2127 = vand.u32 %v1341, 2139095040
    %v2128 = vshrl.u32 %v2127, 23
    %v2129 = vsub.s32 %v2128, 127
    %v2130 = vand.u32 2147483647, %v1341
    %v2131 = vand.u32 %v2130, 8388607
    %v2132 = vor.u32 %v2131, 8388608
    %v2133 = vsub.s32 0, %v2132
    %v2134 = vadd.s32 %v2129, 1
    %vm2135 = vcmp.gt.s32.totalorder %v2134, 0
    %v2136 = vsel %vm2135, %v2134, 0
    %v2137 = vshrl.u32 %v2136, 5
    %v2138 = vand.u32 %v2136, 31
    %v2139 = vsub.s32 32, %v2138
    %v2140 = vshrl.u32 683565275, %v2139
    %v2141 = vshll.u32 683565275, %v2138
    %v2142 = vshrl.u32 2475754826, %v2139
    %v2143 = vor.u32 %v2141, %v2142
    %v2144 = vshll.u32 2475754826, %v2138
    %v2145 = vshrl.u32 2131351028, %v2139
    %v2146 = vor.u32 %v2144, %v2145
    %v2147 = vshll.u32 2131351028, %v2138
    %v2148 = vshrl.u32 2102212464, %v2139
    %v2149 = vor.u32 %v2147, %v2148
    %v2150 = vshll.u32 2102212464, %v2138
    %v2151 = vshrl.u32 920167782, %v2139
    %v2152 = vor.u32 %v2150, %v2151
    %v2153 = vshll.u32 920167782, %v2138
    %v2154 = vshrl.u32 1326507024, %v2139
    %v2155 = vor.u32 %v2153, %v2154
    %vm2156 = vcmp.lt.s32.totalorder %v2137, 1
    %vm2157 = vcmp.lt.s32.totalorder %v2137, 2
    %vm2158 = vcmp.lt.s32.totalorder %v2137, 3
    %vm2159 = vcmp.lt.s32.totalorder %v2137, 4
    %v2160 = vsel %vm2156, %v2140, %v2143
    %v2161 = vsel %vm2159, %v2149, 2102212464
    %v2162 = vsel %vm2158, %v2146, %v2161
    %v2163 = vsel %vm2157, %v2160, %v2162
    %v2164 = vsel %vm2156, %v2143, %v2146
    %v2165 = vsel %vm2159, %v2152, 920167782
    %v2166 = vsel %vm2158, %v2149, %v2165
    %v2167 = vsel %vm2157, %v2164, %v2166
    %v2168 = vsel %vm2156, %v2146, %v2149
    %v2169 = vsel %vm2159, %v2155, 1326507024
    %v2170 = vsel %vm2158, %v2152, %v2169
    %v2171 = vsel %vm2157, %v2168, %v2170
    %v2172 = vshll.u32 %v2132, 8
    %v2173 = vand.u32 %v2172, 65535
    %v2174 = vshrl.u32 %v2172, 16
    %v2175 = vand.u32 %v2171, 65535
    %v2176 = vshrl.u32 %v2171, 16
    %v2177 = vmul.u32 %v2173, %v2175
    %v2178 = vmul.u32 %v2173, %v2176
    %v2179 = vmul.u32 %v2174, %v2175
    %v2180 = vmul.u32 %v2174, %v2176
    %v2181 = vshll.u32 %v2178, 16
    %v2182 = vshrl.u32 %v2178, 16
    %v2183 = vshll.u32 %v2179, 16
    %v2184 = vshrl.u32 %v2179, 16
    %vm2185 = vc.u32 %v2177, %v2181
    %v2186 = vsel %vm2185, 1, 0
    %v2187 = vadd.s32 %v2177, %v2181
    %v2188 = vadd.s32 %v2180, %v2186
    %vm2189 = vc.u32 %v2187, %v2183
    %v2190 = vsel %vm2189, 1, 0
    %v2191 = vadd.s32 %v2187, %v2183
    %v2192 = vadd.s32 %v2188, %v2190
    %v2193 = vadd.s32 %v2192, %v2182
    %v2194 = vadd.s32 %v2193, %v2184
    %v2195 = vand.u32 %v2172, 65535
    %v2196 = vshrl.u32 %v2172, 16
    %v2197 = vand.u32 %v2167, 65535
    %v2198 = vshrl.u32 %v2167, 16
    %v2199 = vmul.u32 %v2195, %v2197
    %v2200 = vmul.u32 %v2195, %v2198
    %v2201 = vmul.u32 %v2196, %v2197
    %v2202 = vmul.u32 %v2196, %v2198
    %v2203 = vshll.u32 %v2200, 16
    %v2204 = vshrl.u32 %v2200, 16
    %v2205 = vshll.u32 %v2201, 16
    %v2206 = vshrl.u32 %v2201, 16
    %vm2207 = vc.u32 %v2199, %v2203
    %v2208 = vsel %vm2207, 1, 0
    %v2209 = vadd.s32 %v2199, %v2203
    %v2210 = vadd.s32 %v2202, %v2208
    %vm2211 = vc.u32 %v2209, %v2205
    %v2212 = vsel %vm2211, 1, 0
    %v2213 = vadd.s32 %v2209, %v2205
    %v2214 = vadd.s32 %v2210, %v2212
    %v2215 = vadd.s32 %v2214, %v2204
    %v2216 = vadd.s32 %v2215, %v2206
    %v2217 = vmul.u32 %v2172, %v2163
    %v2218 = vadd.s32 %v2194, %v2213
    %vm2219 = vc.u32 %v2194, %v2213
    %v2220 = vadd.s32 %v2216, 1
    %v2221 = vsel %vm2219, %v2220, %v2216
    %v2222 = vadd.s32 %v2217, %v2221
    %v2223 = vadd.s32 %v2222, 536870912
    %v2224 = vshrl.u32 %v2223, 30
    %v2225 = vshll.u32 %v2224, 30
    %v2226 = vsub.s32 %v2222, %v2225
    %vm2227 = vcmp.lt.s32.totalorder %v2226, 0
    %v2228 = vsub.s32 0, %v2226
    %v2229 = vsel %vm2227, %v2228, %v2226
    %v2230 = vclz %v2229
    %v2231 = vsub.s32 %v2230, 2
    %vm2232 = vcmp.gt.s32.totalorder 0, %v2231
    %v2233 = vsel %vm2232, 0, %v2231
    %v2234 = vsub.s32 32, %v2233
    %v2235 = vshll.u32 %v2226, %v2233
    %v2236 = vshrl.u32 %v2218, %v2234
    %v2237 = vor.u32 %v2235, %v2236
    %v2238 = vsub.s32 4294967266, %v2233
    %v2239 = vadd.s32 %v2238, 127
    %v2240 = vshll.u32 %v2239, 23
    %v2241 = vor.u32 4788187, %v2240
    %v2242 = vand.u32 2147483647, %v2241
    %v2244 = vcvt.s32.f32 %v2237
    %v2245 = vmul.f32 %v2244, %v2242
    %v2246 = vxor.u32 %v2245, 2147483648
    %v2247 = vsel %vm2126, %v2246, %v2245
    %v2248 = vsub.s32 4, %v2224
    %v2249 = vsel %vm2126, %v2248, %v2224
    %v2250 = vsel %vm2125, %v1341, %v2247
    %v2251 = vsel %vm2125, 0, %v2249
    %v2252 = vmul.f32 %v2250, %v2250
    %v2253 = vmul.f32 %v2252, -0.001358992
    %v2254 = vadd.f32 %v2253, 0.041655596
    %v2255 = vmul.f32 %v2252, %v2254
    %v2256 = vadd.f32 %v2255, -0.4999988
    %v2257 = vmul.f32 %v2252, %v2256
    %v2258 = vadd.f32 1.0, %v2257
    %v2259 = vmul.f32 %v2250, %v2250
    %v2260 = vmul.f32 %v2259, -0.00019511016
    %v2261 = vadd.f32 %v2260, 0.008332121
    %v2262 = vmul.f32 %v2259, %v2261
    %v2263 = vadd.f32 %v2262, -0.16666654
    %v2264 = vmul.f32 %v2259, %v2263
    %v2265 = vadd.f32 %v2264, 1.0
    %v2266 = vmul.f32 %v2265, %v2250
    %vm2267 = vweird.f32 %v1341
    %v2268 = vadd.s32 %v2251, 3
    %v2269 = vand.u32 %v2268, 3
    %vm2270 = vcmp.lt.s32.totalorder %v2269, 2
    %vm2271 = vcmp.eq.s32.totalorder %v2269, 0
    %v2272 = vxor.u32 %v2266, 2147483648
    %v2273 = vsel %vm2271, %v2258, %v2272
    %vm2274 = vcmp.eq.s32.totalorder %v2269, 2
    %v2275 = vxor.u32 %v2258, 2147483648
    %v2276 = vsel %vm2274, %v2275, %v2266
    %v2277 = vsel %vm2270, %v2273, %v2276
    %v2278 = vsel %vm2267, nan, %v2277
    %v2279 = vand.u32 2147483647, %v1342
    %vm2280 = vcmp.le.f32.partialorder %v2279, 0.7853982
    %vm2281 = vcmp.lt.s32.totalorder %v1342, 0
    %v2282 = vand.u32 %v1342, 2139095040
    %v2283 = vshrl.u32 %v2282, 23
    %v2284 = vsub.s32 %v2283, 127
    %v2285 = vand.u32 2147483647, %v1342
    %v2286 = vand.u32 %v2285, 8388607
    %v2287 = vor.u32 %v2286, 8388608
    %v2288 = vsub.s32 0, %v2287
    %v2289 = vadd.s32 %v2284, 1
    %vm2290 = vcmp.gt.s32.totalorder %v2289, 0
    %v2291 = vsel %vm2290, %v2289, 0
    %v2292 = vshrl.u32 %v2291, 5
    %v2293 = vand.u32 %v2291, 31
    %v2294 = vsub.s32 32, %v2293
    %v2295 = vshrl.u32 683565275, %v2294
    %v2296 = vshll.u32 683565275, %v2293
    %v2297 = vshrl.u32 2475754826, %v2294
    %v2298 = vor.u32 %v2296, %v2297
    %v2299 = vshll.u32 2475754826, %v2293
    %v2300 = vshrl.u32 2131351028, %v2294
    %v2301 = vor.u32 %v2299, %v2300
    %v2302 = vshll.u32 2131351028, %v2293
    %v2303 = vshrl.u32 2102212464, %v2294
    %v2304 = vor.u32 %v2302, %v2303
    %v2305 = vshll.u32 2102212464, %v2293
    %v2306 = vshrl.u32 920167782, %v2294
    %v2307 = vor.u32 %v2305, %v2306
    %v2308 = vshll.u32 920167782, %v2293
    %v2309 = vshrl.u32 1326507024, %v2294
    %v2310 = vor.u32 %v2308, %v2309
    %vm2311 = vcmp.lt.s32.totalorder %v2292, 1
    %vm2312 = vcmp.lt.s32.totalorder %v2292, 2
    %vm2313 = vcmp.lt.s32.totalorder %v2292, 3
    %vm2314 = vcmp.lt.s32.totalorder %v2292, 4
    %v2315 = vsel %vm2311, %v2295, %v2298
    %v2316 = vsel %vm2314, %v2304, 2102212464
    %v2317 = vsel %vm2313, %v2301, %v2316
    %v2318 = vsel %vm2312, %v2315, %v2317
    %v2319 = vsel %vm2311, %v2298, %v2301
    %v2320 = vsel %vm2314, %v2307, 920167782
    %v2321 = vsel %vm2313, %v2304, %v2320
    %v2322 = vsel %vm2312, %v2319, %v2321
    %v2323 = vsel %vm2311, %v2301, %v2304
    %v2324 = vsel %vm2314, %v2310, 1326507024
    %v2325 = vsel %vm2313, %v2307, %v2324
    %v2326 = vsel %vm2312, %v2323, %v2325
    %v2327 = vshll.u32 %v2287, 8
    %v2328 = vand.u32 %v2327, 65535
    %v2329 = vshrl.u32 %v2327, 16
    %v2330 = vand.u32 %v2326, 65535
    %v2331 = vshrl.u32 %v2326, 16
    %v2332 = vmul.u32 %v2328, %v2330
    %v2333 = vmul.u32 %v2328, %v2331
    %v2334 = vmul.u32 %v2329, %v2330
    %v2335 = vmul.u32 %v2329, %v2331
    %v2336 = vshll.u32 %v2333, 16
    %v2337 = vshrl.u32 %v2333, 16
    %v2338 = vshll.u32 %v2334, 16
    %v2339 = vshrl.u32 %v2334, 16
    %vm2340 = vc.u32 %v2332, %v2336
    %v2341 = vsel %vm2340, 1, 0
    %v2342 = vadd.s32 %v2332, %v2336
    %v2343 = vadd.s32 %v2335, %v2341
    %vm2344 = vc.u32 %v2342, %v2338
    %v2345 = vsel %vm2344, 1, 0
    %v2346 = vadd.s32 %v2342, %v2338
    %v2347 = vadd.s32 %v2343, %v2345
    %v2348 = vadd.s32 %v2347, %v2337
    %v2349 = vadd.s32 %v2348, %v2339
    %v2350 = vand.u32 %v2327, 65535
    %v2351 = vshrl.u32 %v2327, 16
    %v2352 = vand.u32 %v2322, 65535
    %v2353 = vshrl.u32 %v2322, 16
    %v2354 = vmul.u32 %v2350, %v2352
    %v2355 = vmul.u32 %v2350, %v2353
    %v2356 = vmul.u32 %v2351, %v2352
    %v2357 = vmul.u32 %v2351, %v2353
    %v2358 = vshll.u32 %v2355, 16
    %v2359 = vshrl.u32 %v2355, 16
    %v2360 = vshll.u32 %v2356, 16
    %v2361 = vshrl.u32 %v2356, 16
    %vm2362 = vc.u32 %v2354, %v2358
    %v2363 = vsel %vm2362, 1, 0
    %v2364 = vadd.s32 %v2354, %v2358
    %v2365 = vadd.s32 %v2357, %v2363
    %vm2366 = vc.u32 %v2364, %v2360
    %v2367 = vsel %vm2366, 1, 0
    %v2368 = vadd.s32 %v2364, %v2360
    %v2369 = vadd.s32 %v2365, %v2367
    %v2370 = vadd.s32 %v2369, %v2359
    %v2371 = vadd.s32 %v2370, %v2361
    %v2372 = vmul.u32 %v2327, %v2318
    %v2373 = vadd.s32 %v2349, %v2368
    %vm2374 = vc.u32 %v2349, %v2368
    %v2375 = vadd.s32 %v2371, 1
    %v2376 = vsel %vm2374, %v2375, %v2371
    %v2377 = vadd.s32 %v2372, %v2376
    %v2378 = vadd.s32 %v2377, 536870912
    %v2379 = vshrl.u32 %v2378, 30
    %v2380 = vshll.u32 %v2379, 30
    %v2381 = vsub.s32 %v2377, %v2380
    %vm2382 = vcmp.lt.s32.totalorder %v2381, 0
    %v2383 = vsub.s32 0, %v2381
    %v2384 = vsel %vm2382, %v2383, %v2381
    %v2385 = vclz %v2384
    %v2386 = vsub.s32 %v2385, 2
    %vm2387 = vcmp.gt.s32.totalorder 0, %v2386
    %v2388 = vsel %vm2387, 0, %v2386
    %v2389 = vsub.s32 32, %v2388
    %v2390 = vshll.u32 %v2381, %v2388
    %v2391 = vshrl.u32 %v2373, %v2389
    %v2392 = vor.u32 %v2390, %v2391
    %v2393 = vsub.s32 4294967266, %v2388
    %v2394 = vadd.s32 %v2393, 127
    %v2395 = vshll.u32 %v2394, 23
    %v2396 = vor.u32 4788187, %v2395
    %v2397 = vand.u32 2147483647, %v2396
    %v2399 = vcvt.s32.f32 %v2392
    %v2400 = vmul.f32 %v2399, %v2397
    %v2401 = vxor.u32 %v2400, 2147483648
    %v2402 = vsel %vm2281, %v2401, %v2400
    %v2403 = vsub.s32 4, %v2379
    %v2404 = vsel %vm2281, %v2403, %v2379
    %v2405 = vsel %vm2280, %v1342, %v2402
    %v2406 = vsel %vm2280, 0, %v2404
    %v2407 = vmul.f32 %v2405, %v2405
    %v2408 = vmul.f32 %v2407, -0.001358992
    %v2409 = vadd.f32 %v2408, 0.041655596
    %v2410 = vmul.f32 %v2407, %v2409
    %v2411 = vadd.f32 %v2410, -0.4999988
    %v2412 = vmul.f32 %v2407, %v2411
    %v2413 = vadd.f32 1.0, %v2412
    %v2414 = vmul.f32 %v2405, %v2405
    %v2415 = vmul.f32 %v2414, -0.00019511016
    %v2416 = vadd.f32 %v2415, 0.008332121
    %v2417 = vmul.f32 %v2414, %v2416
    %v2418 = vadd.f32 %v2417, -0.16666654
    %v2419 = vmul.f32 %v2414, %v2418
    %v2420 = vadd.f32 %v2419, 1.0
    %v2421 = vmul.f32 %v2420, %v2405
    %vm2422 = vweird.f32 %v1342
    %v2423 = vadd.s32 %v2406, 3
    %v2424 = vand.u32 %v2423, 3
    %vm2425 = vcmp.lt.s32.totalorder %v2424, 2
    %vm2426 = vcmp.eq.s32.totalorder %v2424, 0
    %v2427 = vxor.u32 %v2421, 2147483648
    %v2428 = vsel %vm2426, %v2413, %v2427
    %vm2429 = vcmp.eq.s32.totalorder %v2424, 2
    %v2430 = vxor.u32 %v2413, 2147483648
    %v2431 = vsel %vm2429, %v2430, %v2421
    %v2432 = vsel %vm2425, %v2428, %v2431
    %v2433 = vsel %vm2422, nan, %v2432
    %v2434 = vand.u32 2147483647, %v1343
    %vm2435 = vcmp.le.f32.partialorder %v2434, 0.7853982
    %vm2436 = vcmp.lt.s32.totalorder %v1343, 0
    %v2437 = vand.u32 %v1343, 2139095040
    %v2438 = vshrl.u32 %v2437, 23
    %v2439 = vsub.s32 %v2438, 127
    %v2440 = vand.u32 2147483647, %v1343
    %v2441 = vand.u32 %v2440, 8388607
    %v2442 = vor.u32 %v2441, 8388608
    %v2443 = vsub.s32 0, %v2442
    %v2444 = vadd.s32 %v2439, 1
    %vm2445 = vcmp.gt.s32.totalorder %v2444, 0
    %v2446 = vsel %vm2445, %v2444, 0
    %v2447 = vshrl.u32 %v2446, 5
    %v2448 = vand.u32 %v2446, 31
    %v2449 = vsub.s32 32, %v2448
    %v2450 = vshrl.u32 683565275, %v2449
    %v2451 = vshll.u32 683565275, %v2448
    %v2452 = vshrl.u32 2475754826, %v2449
    %v2453 = vor.u32 %v2451, %v2452
    %v2454 = vshll.u32 2475754826, %v2448
    %v2455 = vshrl.u32 2131351028, %v2449
    %v2456 = vor.u32 %v2454, %v2455
    %v2457 = vshll.u32 2131351028, %v2448
    %v2458 = vshrl.u32 2102212464, %v2449
    %v2459 = vor.u32 %v2457, %v2458
    %v2460 = vshll.u32 2102212464, %v2448
    %v2461 = vshrl.u32 920167782, %v2449
    %v2462 = vor.u32 %v2460, %v2461
    %v2463 = vshll.u32 920167782, %v2448
    %v2464 = vshrl.u32 1326507024, %v2449
    %v2465 = vor.u32 %v2463, %v2464
    %vm2466 = vcmp.lt.s32.totalorder %v2447, 1
    %vm2467 = vcmp.lt.s32.totalorder %v2447, 2
    %vm2468 = vcmp.lt.s32.totalorder %v2447, 3
    %vm2469 = vcmp.lt.s32.totalorder %v2447, 4
    %v2470 = vsel %vm2466, %v2450, %v2453
    %v2471 = vsel %vm2469, %v2459, 2102212464
    %v2472 = vsel %vm2468, %v2456, %v2471
    %v2473 = vsel %vm2467, %v2470, %v2472
    %v2474 = vsel %vm2466, %v2453, %v2456
    %v2475 = vsel %vm2469, %v2462, 920167782
    %v2476 = vsel %vm2468, %v2459, %v2475
    %v2477 = vsel %vm2467, %v2474, %v2476
    %v2478 = vsel %vm2466, %v2456, %v2459
    %v2479 = vsel %vm2469, %v2465, 1326507024
    %v2480 = vsel %vm2468, %v2462, %v2479
    %v2481 = vsel %vm2467, %v2478, %v2480
    %v2482 = vshll.u32 %v2442, 8
    %v2483 = vand.u32 %v2482, 65535
    %v2484 = vshrl.u32 %v2482, 16
    %v2485 = vand.u32 %v2481, 65535
    %v2486 = vshrl.u32 %v2481, 16
    %v2487 = vmul.u32 %v2483, %v2485
    %v2488 = vmul.u32 %v2483, %v2486
    %v2489 = vmul.u32 %v2484, %v2485
    %v2490 = vmul.u32 %v2484, %v2486
    %v2491 = vshll.u32 %v2488, 16
    %v2492 = vshrl.u32 %v2488, 16
    %v2493 = vshll.u32 %v2489, 16
    %v2494 = vshrl.u32 %v2489, 16
    %vm2495 = vc.u32 %v2487, %v2491
    %v2496 = vsel %vm2495, 1, 0
    %v2497 = vadd.s32 %v2487, %v2491
    %v2498 = vadd.s32 %v2490, %v2496
    %vm2499 = vc.u32 %v2497, %v2493
    %v2500 = vsel %vm2499, 1, 0
    %v2501 = vadd.s32 %v2497, %v2493
    %v2502 = vadd.s32 %v2498, %v2500
    %v2503 = vadd.s32 %v2502, %v2492
    %v2504 = vadd.s32 %v2503, %v2494
    %v2505 = vand.u32 %v2482, 65535
    %v2506 = vshrl.u32 %v2482, 16
    %v2507 = vand.u32 %v2477, 65535
    %v2508 = vshrl.u32 %v2477, 16
    %v2509 = vmul.u32 %v2505, %v2507
    %v2510 = vmul.u32 %v2505, %v2508
    %v2511 = vmul.u32 %v2506, %v2507
    %v2512 = vmul.u32 %v2506, %v2508
    %v2513 = vshll.u32 %v2510, 16
    %v2514 = vshrl.u32 %v2510, 16
    %v2515 = vshll.u32 %v2511, 16
    %v2516 = vshrl.u32 %v2511, 16
    %vm2517 = vc.u32 %v2509, %v2513
    %v2518 = vsel %vm2517, 1, 0
    %v2519 = vadd.s32 %v2509, %v2513
    %v2520 = vadd.s32 %v2512, %v2518
    %vm2521 = vc.u32 %v2519, %v2515
    %v2522 = vsel %vm2521, 1, 0
    %v2523 = vadd.s32 %v2519, %v2515
    %v2524 = vadd.s32 %v2520, %v2522
    %v2525 = vadd.s32 %v2524, %v2514
    %v2526 = vadd.s32 %v2525, %v2516
    %v2527 = vmul.u32 %v2482, %v2473
    %v2528 = vadd.s32 %v2504, %v2523
    %vm2529 = vc.u32 %v2504, %v2523
    %v2530 = vadd.s32 %v2526, 1
    %v2531 = vsel %vm2529, %v2530, %v2526
    %v2532 = vadd.s32 %v2527, %v2531
    %v2533 = vadd.s32 %v2532, 536870912
    %v2534 = vshrl.u32 %v2533, 30
    %v2535 = vshll.u32 %v2534, 30
    %v2536 = vsub.s32 %v2532, %v2535
    %vm2537 = vcmp.lt.s32.totalorder %v2536, 0
    %v2538 = vsub.s32 0, %v2536
    %v2539 = vsel %vm2537, %v2538, %v2536
    %v2540 = vclz %v2539
    %v2541 = vsub.s32 %v2540, 2
    %vm2542 = vcmp.gt.s32.totalorder 0, %v2541
    %v2543 = vsel %vm2542, 0, %v2541
    %v2544 = vsub.s32 32, %v2543
    %v2545 = vshll.u32 %v2536, %v2543
    %v2546 = vshrl.u32 %v2528, %v2544
    %v2547 = vor.u32 %v2545, %v2546
    %v2548 = vsub.s32 4294967266, %v2543
    %v2549 = vadd.s32 %v2548, 127
    %v2550 = vshll.u32 %v2549, 23
    %v2551 = vor.u32 4788187, %v2550
    %v2552 = vand.u32 2147483647, %v2551
    %v2554 = vcvt.s32.f32 %v2547
    %v2555 = vmul.f32 %v2554, %v2552
    %v2556 = vxor.u32 %v2555, 2147483648
    %v2557 = vsel %vm2436, %v2556, %v2555
    %v2558 = vsub.s32 4, %v2534
    %v2559 = vsel %vm2436, %v2558, %v2534
    %v2560 = vsel %vm2435, %v1343, %v2557
    %v2561 = vsel %vm2435, 0, %v2559
    %v2562 = vmul.f32 %v2560, %v2560
    %v2563 = vmul.f32 %v2562, -0.001358992
    %v2564 = vadd.f32 %v2563, 0.041655596
    %v2565 = vmul.f32 %v2562, %v2564
    %v2566 = vadd.f32 %v2565, -0.4999988
    %v2567 = vmul.f32 %v2562, %v2566
    %v2568 = vadd.f32 1.0, %v2567
    %v2569 = vmul.f32 %v2560, %v2560
    %v2570 = vmul.f32 %v2569, -0.00019511016
    %v2571 = vadd.f32 %v2570, 0.008332121
    %v2572 = vmul.f32 %v2569, %v2571
    %v2573 = vadd.f32 %v2572, -0.16666654
    %v2574 = vmul.f32 %v2569, %v2573
    %v2575 = vadd.f32 %v2574, 1.0
    %v2576 = vmul.f32 %v2575, %v2560
    %vm2577 = vweird.f32 %v1343
    %v2578 = vadd.s32 %v2561, 3
    %v2579 = vand.u32 %v2578, 3
    %vm2580 = vcmp.lt.s32.totalorder %v2579, 2
    %vm2581 = vcmp.eq.s32.totalorder %v2579, 0
    %v2582 = vxor.u32 %v2576, 2147483648
    %v2583 = vsel %vm2581, %v2568, %v2582
    %vm2584 = vcmp.eq.s32.totalorder %v2579, 2
    %v2585 = vxor.u32 %v2568, 2147483648
    %v2586 = vsel %vm2584, %v2585, %v2576
    %v2587 = vsel %vm2580, %v2583, %v2586
    %v2588 = vsel %vm2577, nan, %v2587
    %v2589 = vand.u32 2147483647, %v1344
    %vm2590 = vcmp.le.f32.partialorder %v2589, 0.7853982
    %vm2591 = vcmp.lt.s32.totalorder %v1344, 0
    %v2592 = vand.u32 %v1344, 2139095040
    %v2593 = vshrl.u32 %v2592, 23
    %v2594 = vsub.s32 %v2593, 127
    %v2595 = vand.u32 2147483647, %v1344
    %v2596 = vand.u32 %v2595, 8388607
    %v2597 = vor.u32 %v2596, 8388608
    %v2598 = vsub.s32 0, %v2597
    %v2599 = vadd.s32 %v2594, 1
    %vm2600 = vcmp.gt.s32.totalorder %v2599, 0
    %v2601 = vsel %vm2600, %v2599, 0
    %v2602 = vshrl.u32 %v2601, 5
    %v2603 = vand.u32 %v2601, 31
    %v2604 = vsub.s32 32, %v2603
    %v2605 = vshrl.u32 683565275, %v2604
    %v2606 = vshll.u32 683565275, %v2603
    %v2607 = vshrl.u32 2475754826, %v2604
    %v2608 = vor.u32 %v2606, %v2607
    %v2609 = vshll.u32 2475754826, %v2603
    %v2610 = vshrl.u32 2131351028, %v2604
    %v2611 = vor.u32 %v2609, %v2610
    %v2612 = vshll.u32 2131351028, %v2603
    %v2613 = vshrl.u32 2102212464, %v2604
    %v2614 = vor.u32 %v2612, %v2613
    %v2615 = vshll.u32 2102212464, %v2603
    %v2616 = vshrl.u32 920167782, %v2604
    %v2617 = vor.u32 %v2615, %v2616
    %v2618 = vshll.u32 920167782, %v2603
    %v2619 = vshrl.u32 1326507024, %v2604
    %v2620 = vor.u32 %v2618, %v2619
    %vm2621 = vcmp.lt.s32.totalorder %v2602, 1
    %vm2622 = vcmp.lt.s32.totalorder %v2602, 2
    %vm2623 = vcmp.lt.s32.totalorder %v2602, 3
    %vm2624 = vcmp.lt.s32.totalorder %v2602, 4
    %v2625 = vsel %vm2621, %v2605, %v2608
    %v2626 = vsel %vm2624, %v2614, 2102212464
    %v2627 = vsel %vm2623, %v2611, %v2626
    %v2628 = vsel %vm2622, %v2625, %v2627
    %v2629 = vsel %vm2621, %v2608, %v2611
    %v2630 = vsel %vm2624, %v2617, 920167782
    %v2631 = vsel %vm2623, %v2614, %v2630
    %v2632 = vsel %vm2622, %v2629, %v2631
    %v2633 = vsel %vm2621, %v2611, %v2614
    %v2634 = vsel %vm2624, %v2620, 1326507024
    %v2635 = vsel %vm2623, %v2617, %v2634
    %v2636 = vsel %vm2622, %v2633, %v2635
    %v2637 = vshll.u32 %v2597, 8
    %v2638 = vand.u32 %v2637, 65535
    %v2639 = vshrl.u32 %v2637, 16
    %v2640 = vand.u32 %v2636, 65535
    %v2641 = vshrl.u32 %v2636, 16
    %v2642 = vmul.u32 %v2638, %v2640
    %v2643 = vmul.u32 %v2638, %v2641
    %v2644 = vmul.u32 %v2639, %v2640
    %v2645 = vmul.u32 %v2639, %v2641
    %v2646 = vshll.u32 %v2643, 16
    %v2647 = vshrl.u32 %v2643, 16
    %v2648 = vshll.u32 %v2644, 16
    %v2649 = vshrl.u32 %v2644, 16
    %vm2650 = vc.u32 %v2642, %v2646
    %v2651 = vsel %vm2650, 1, 0
    %v2652 = vadd.s32 %v2642, %v2646
    %v2653 = vadd.s32 %v2645, %v2651
    %vm2654 = vc.u32 %v2652, %v2648
    %v2655 = vsel %vm2654, 1, 0
    %v2656 = vadd.s32 %v2652, %v2648
    %v2657 = vadd.s32 %v2653, %v2655
    %v2658 = vadd.s32 %v2657, %v2647
    %v2659 = vadd.s32 %v2658, %v2649
    %v2660 = vand.u32 %v2637, 65535
    %v2661 = vshrl.u32 %v2637, 16
    %v2662 = vand.u32 %v2632, 65535
    %v2663 = vshrl.u32 %v2632, 16
    %v2664 = vmul.u32 %v2660, %v2662
    %v2665 = vmul.u32 %v2660, %v2663
    %v2666 = vmul.u32 %v2661, %v2662
    %v2667 = vmul.u32 %v2661, %v2663
    %v2668 = vshll.u32 %v2665, 16
    %v2669 = vshrl.u32 %v2665, 16
    %v2670 = vshll.u32 %v2666, 16
    %v2671 = vshrl.u32 %v2666, 16
    %vm2672 = vc.u32 %v2664, %v2668
    %v2673 = vsel %vm2672, 1, 0
    %v2674 = vadd.s32 %v2664, %v2668
    %v2675 = vadd.s32 %v2667, %v2673
    %vm2676 = vc.u32 %v2674, %v2670
    %v2677 = vsel %vm2676, 1, 0
    %v2678 = vadd.s32 %v2674, %v2670
    %v2679 = vadd.s32 %v2675, %v2677
    %v2680 = vadd.s32 %v2679, %v2669
    %v2681 = vadd.s32 %v2680, %v2671
    %v2682 = vmul.u32 %v2637, %v2628
    %v2683 = vadd.s32 %v2659, %v2678
    %vm2684 = vc.u32 %v2659, %v2678
    %v2685 = vadd.s32 %v2681, 1
    %v2686 = vsel %vm2684, %v2685, %v2681
    %v2687 = vadd.s32 %v2682, %v2686
    %v2688 = vadd.s32 %v2687, 536870912
    %v2689 = vshrl.u32 %v2688, 30
    %v2690 = vshll.u32 %v2689, 30
    %v2691 = vsub.s32 %v2687, %v2690
    %vm2692 = vcmp.lt.s32.totalorder %v2691, 0
    %v2693 = vsub.s32 0, %v2691
    %v2694 = vsel %vm2692, %v2693, %v2691
    %v2695 = vclz %v2694
    %v2696 = vsub.s32 %v2695, 2
    %vm2697 = vcmp.gt.s32.totalorder 0, %v2696
    %v2698 = vsel %vm2697, 0, %v2696
    %v2699 = vsub.s32 32, %v2698
    %v2700 = vshll.u32 %v2691, %v2698
    %v2701 = vshrl.u32 %v2683, %v2699
    %v2702 = vor.u32 %v2700, %v2701
    %v2703 = vsub.s32 4294967266, %v2698
    %v2704 = vadd.s32 %v2703, 127
    %v2705 = vshll.u32 %v2704, 23
    %v2706 = vor.u32 4788187, %v2705
    %v2707 = vand.u32 2147483647, %v2706
    %v2709 = vcvt.s32.f32 %v2702
    %v2710 = vmul.f32 %v2709, %v2707
    %v2711 = vxor.u32 %v2710, 2147483648
    %v2712 = vsel %vm2591, %v2711, %v2710
    %v2713 = vsub.s32 4, %v2689
    %v2714 = vsel %vm2591, %v2713, %v2689
    %v2715 = vsel %vm2590, %v1344, %v2712
    %v2716 = vsel %vm2590, 0, %v2714
    %v2717 = vmul.f32 %v2715, %v2715
    %v2718 = vmul.f32 %v2717, -0.001358992
    %v2719 = vadd.f32 %v2718, 0.041655596
    %v2720 = vmul.f32 %v2717, %v2719
    %v2721 = vadd.f32 %v2720, -0.4999988
    %v2722 = vmul.f32 %v2717, %v2721
    %v2723 = vadd.f32 1.0, %v2722
    %v2724 = vmul.f32 %v2715, %v2715
    %v2725 = vmul.f32 %v2724, -0.00019511016
    %v2726 = vadd.f32 %v2725, 0.008332121
    %v2727 = vmul.f32 %v2724, %v2726
    %v2728 = vadd.f32 %v2727, -0.16666654
    %v2729 = vmul.f32 %v2724, %v2728
    %v2730 = vadd.f32 %v2729, 1.0
    %v2731 = vmul.f32 %v2730, %v2715
    %vm2732 = vweird.f32 %v1344
    %v2733 = vadd.s32 %v2716, 3
    %v2734 = vand.u32 %v2733, 3
    %vm2735 = vcmp.lt.s32.totalorder %v2734, 2
    %vm2736 = vcmp.eq.s32.totalorder %v2734, 0
    %v2737 = vxor.u32 %v2731, 2147483648
    %v2738 = vsel %vm2736, %v2723, %v2737
    %vm2739 = vcmp.eq.s32.totalorder %v2734, 2
    %v2740 = vxor.u32 %v2723, 2147483648
    %v2741 = vsel %vm2739, %v2740, %v2731
    %v2742 = vsel %vm2735, %v2738, %v2741
    %v2743 = vsel %vm2732, nan, %v2742
    %v2744 = vand.u32 2147483647, %v1345
    %vm2745 = vcmp.le.f32.partialorder %v2744, 0.7853982
    %vm2746 = vcmp.lt.s32.totalorder %v1345, 0
    %v2747 = vand.u32 %v1345, 2139095040
    %v2748 = vshrl.u32 %v2747, 23
    %v2749 = vsub.s32 %v2748, 127
    %v2750 = vand.u32 2147483647, %v1345
    %v2751 = vand.u32 %v2750, 8388607
    %v2752 = vor.u32 %v2751, 8388608
    %v2753 = vsub.s32 0, %v2752
    %v2754 = vadd.s32 %v2749, 1
    %vm2755 = vcmp.gt.s32.totalorder %v2754, 0
    %v2756 = vsel %vm2755, %v2754, 0
    %v2757 = vshrl.u32 %v2756, 5
    %v2758 = vand.u32 %v2756, 31
    %v2759 = vsub.s32 32, %v2758
    %v2760 = vshrl.u32 683565275, %v2759
    %v2761 = vshll.u32 683565275, %v2758
    %v2762 = vshrl.u32 2475754826, %v2759
    %v2763 = vor.u32 %v2761, %v2762
    %v2764 = vshll.u32 2475754826, %v2758
    %v2765 = vshrl.u32 2131351028, %v2759
    %v2766 = vor.u32 %v2764, %v2765
    %v2767 = vshll.u32 2131351028, %v2758
    %v2768 = vshrl.u32 2102212464, %v2759
    %v2769 = vor.u32 %v2767, %v2768
    %v2770 = vshll.u32 2102212464, %v2758
    %v2771 = vshrl.u32 920167782, %v2759
    %v2772 = vor.u32 %v2770, %v2771
    %v2773 = vshll.u32 920167782, %v2758
    %v2774 = vshrl.u32 1326507024, %v2759
    %v2775 = vor.u32 %v2773, %v2774
    %vm2776 = vcmp.lt.s32.totalorder %v2757, 1
    %vm2777 = vcmp.lt.s32.totalorder %v2757, 2
    %vm2778 = vcmp.lt.s32.totalorder %v2757, 3
    %vm2779 = vcmp.lt.s32.totalorder %v2757, 4
    %v2780 = vsel %vm2776, %v2760, %v2763
    %v2781 = vsel %vm2779, %v2769, 2102212464
    %v2782 = vsel %vm2778, %v2766, %v2781
    %v2783 = vsel %vm2777, %v2780, %v2782
    %v2784 = vsel %vm2776, %v2763, %v2766
    %v2785 = vsel %vm2779, %v2772, 920167782
    %v2786 = vsel %vm2778, %v2769, %v2785
    %v2787 = vsel %vm2777, %v2784, %v2786
    %v2788 = vsel %vm2776, %v2766, %v2769
    %v2789 = vsel %vm2779, %v2775, 1326507024
    %v2790 = vsel %vm2778, %v2772, %v2789
    %v2791 = vsel %vm2777, %v2788, %v2790
    %v2792 = vshll.u32 %v2752, 8
    %v2793 = vand.u32 %v2792, 65535
    %v2794 = vshrl.u32 %v2792, 16
    %v2795 = vand.u32 %v2791, 65535
    %v2796 = vshrl.u32 %v2791, 16
    %v2797 = vmul.u32 %v2793, %v2795
    %v2798 = vmul.u32 %v2793, %v2796
    %v2799 = vmul.u32 %v2794, %v2795
    %v2800 = vmul.u32 %v2794, %v2796
    %v2801 = vshll.u32 %v2798, 16
    %v2802 = vshrl.u32 %v2798, 16
    %v2803 = vshll.u32 %v2799, 16
    %v2804 = vshrl.u32 %v2799, 16
    %vm2805 = vc.u32 %v2797, %v2801
    %v2806 = vsel %vm2805, 1, 0
    %v2807 = vadd.s32 %v2797, %v2801
    %v2808 = vadd.s32 %v2800, %v2806
    %vm2809 = vc.u32 %v2807, %v2803
    %v2810 = vsel %vm2809, 1, 0
    %v2811 = vadd.s32 %v2807, %v2803
    %v2812 = vadd.s32 %v2808, %v2810
    %v2813 = vadd.s32 %v2812, %v2802
    %v2814 = vadd.s32 %v2813, %v2804
    %v2815 = vand.u32 %v2792, 65535
    %v2816 = vshrl.u32 %v2792, 16
    %v2817 = vand.u32 %v2787, 65535
    %v2818 = vshrl.u32 %v2787, 16
    %v2819 = vmul.u32 %v2815, %v2817
    %v2820 = vmul.u32 %v2815, %v2818
    %v2821 = vmul.u32 %v2816, %v2817
    %v2822 = vmul.u32 %v2816, %v2818
    %v2823 = vshll.u32 %v2820, 16
    %v2824 = vshrl.u32 %v2820, 16
    %v2825 = vshll.u32 %v2821, 16
    %v2826 = vshrl.u32 %v2821, 16
    %vm2827 = vc.u32 %v2819, %v2823
    %v2828 = vsel %vm2827, 1, 0
    %v2829 = vadd.s32 %v2819, %v2823
    %v2830 = vadd.s32 %v2822, %v2828
    %vm2831 = vc.u32 %v2829, %v2825
    %v2832 = vsel %vm2831, 1, 0
    %v2833 = vadd.s32 %v2829, %v2825
    %v2834 = vadd.s32 %v2830, %v2832
    %v2835 = vadd.s32 %v2834, %v2824
    %v2836 = vadd.s32 %v2835, %v2826
    %v2837 = vmul.u32 %v2792, %v2783
    %v2838 = vadd.s32 %v2814, %v2833
    %vm2839 = vc.u32 %v2814, %v2833
    %v2840 = vadd.s32 %v2836, 1
    %v2841 = vsel %vm2839, %v2840, %v2836
    %v2842 = vadd.s32 %v2837, %v2841
    %v2843 = vadd.s32 %v2842, 536870912
    %v2844 = vshrl.u32 %v2843, 30
    %v2845 = vshll.u32 %v2844, 30
    %v2846 = vsub.s32 %v2842, %v2845
    %vm2847 = vcmp.lt.s32.totalorder %v2846, 0
    %v2848 = vsub.s32 0, %v2846
    %v2849 = vsel %vm2847, %v2848, %v2846
    %v2850 = vclz %v2849
    %v2851 = vsub.s32 %v2850, 2
    %vm2852 = vcmp.gt.s32.totalorder 0, %v2851
    %v2853 = vsel %vm2852, 0, %v2851
    %v2854 = vsub.s32 32, %v2853
    %v2855 = vshll.u32 %v2846, %v2853
    %v2856 = vshrl.u32 %v2838, %v2854
    %v2857 = vor.u32 %v2855, %v2856
    %v2858 = vsub.s32 4294967266, %v2853
    %v2859 = vadd.s32 %v2858, 127
    %v2860 = vshll.u32 %v2859, 23
    %v2861 = vor.u32 4788187, %v2860
    %v2862 = vand.u32 2147483647, %v2861
    %v2864 = vcvt.s32.f32 %v2857
    %v2865 = vmul.f32 %v2864, %v2862
    %v2866 = vxor.u32 %v2865, 2147483648
    %v2867 = vsel %vm2746, %v2866, %v2865
    %v2868 = vsub.s32 4, %v2844
    %v2869 = vsel %vm2746, %v2868, %v2844
    %v2870 = vsel %vm2745, %v1345, %v2867
    %v2871 = vsel %vm2745, 0, %v2869
    %v2872 = vmul.f32 %v2870, %v2870
    %v2873 = vmul.f32 %v2872, -0.001358992
    %v2874 = vadd.f32 %v2873, 0.041655596
    %v2875 = vmul.f32 %v2872, %v2874
    %v2876 = vadd.f32 %v2875, -0.4999988
    %v2877 = vmul.f32 %v2872, %v2876
    %v2878 = vadd.f32 1.0, %v2877
    %v2879 = vmul.f32 %v2870, %v2870
    %v2880 = vmul.f32 %v2879, -0.00019511016
    %v2881 = vadd.f32 %v2880, 0.008332121
    %v2882 = vmul.f32 %v2879, %v2881
    %v2883 = vadd.f32 %v2882, -0.16666654
    %v2884 = vmul.f32 %v2879, %v2883
    %v2885 = vadd.f32 %v2884, 1.0
    %v2886 = vmul.f32 %v2885, %v2870
    %vm2887 = vweird.f32 %v1345
    %v2888 = vadd.s32 %v2871, 3
    %v2889 = vand.u32 %v2888, 3
    %vm2890 = vcmp.lt.s32.totalorder %v2889, 2
    %vm2891 = vcmp.eq.s32.totalorder %v2889, 0
    %v2892 = vxor.u32 %v2886, 2147483648
    %v2893 = vsel %vm2891, %v2878, %v2892
    %vm2894 = vcmp.eq.s32.totalorder %v2889, 2
    %v2895 = vxor.u32 %v2878, 2147483648
    %v2896 = vsel %vm2894, %v2895, %v2886
    %v2897 = vsel %vm2890, %v2893, %v2896
    %v2898 = vsel %vm2887, nan, %v2897
    %v2899 = vand.u32 2147483647, %v1346
    %vm2900 = vcmp.le.f32.partialorder %v2899, 0.7853982
    %vm2901 = vcmp.lt.s32.totalorder %v1346, 0
    %v2902 = vand.u32 %v1346, 2139095040
    %v2903 = vshrl.u32 %v2902, 23
    %v2904 = vsub.s32 %v2903, 127
    %v2905 = vand.u32 2147483647, %v1346
    %v2906 = vand.u32 %v2905, 8388607
    %v2907 = vor.u32 %v2906, 8388608
    %v2908 = vsub.s32 0, %v2907
    %v2909 = vadd.s32 %v2904, 1
    %vm2910 = vcmp.gt.s32.totalorder %v2909, 0
    %v2911 = vsel %vm2910, %v2909, 0
    %v2912 = vshrl.u32 %v2911, 5
    %v2913 = vand.u32 %v2911, 31
    %v2914 = vsub.s32 32, %v2913
    %v2915 = vshrl.u32 683565275, %v2914
    %v2916 = vshll.u32 683565275, %v2913
    %v2917 = vshrl.u32 2475754826, %v2914
    %v2918 = vor.u32 %v2916, %v2917
    %v2919 = vshll.u32 2475754826, %v2913
    %v2920 = vshrl.u32 2131351028, %v2914
    %v2921 = vor.u32 %v2919, %v2920
    %v2922 = vshll.u32 2131351028, %v2913
    %v2923 = vshrl.u32 2102212464, %v2914
    %v2924 = vor.u32 %v2922, %v2923
    %v2925 = vshll.u32 2102212464, %v2913
    %v2926 = vshrl.u32 920167782, %v2914
    %v2927 = vor.u32 %v2925, %v2926
    %v2928 = vshll.u32 920167782, %v2913
    %v2929 = vshrl.u32 1326507024, %v2914
    %v2930 = vor.u32 %v2928, %v2929
    %vm2931 = vcmp.lt.s32.totalorder %v2912, 1
    %vm2932 = vcmp.lt.s32.totalorder %v2912, 2
    %vm2933 = vcmp.lt.s32.totalorder %v2912, 3
    %vm2934 = vcmp.lt.s32.totalorder %v2912, 4
    %v2935 = vsel %vm2931, %v2915, %v2918
    %v2936 = vsel %vm2934, %v2924, 2102212464
    %v2937 = vsel %vm2933, %v2921, %v2936
    %v2938 = vsel %vm2932, %v2935, %v2937
    %v2939 = vsel %vm2931, %v2918, %v2921
    %v2940 = vsel %vm2934, %v2927, 920167782
    %v2941 = vsel %vm2933, %v2924, %v2940
    %v2942 = vsel %vm2932, %v2939, %v2941
    %v2943 = vsel %vm2931, %v2921, %v2924
    %v2944 = vsel %vm2934, %v2930, 1326507024
    %v2945 = vsel %vm2933, %v2927, %v2944
    %v2946 = vsel %vm2932, %v2943, %v2945
    %v2947 = vshll.u32 %v2907, 8
    %v2948 = vand.u32 %v2947, 65535
    %v2949 = vshrl.u32 %v2947, 16
    %v2950 = vand.u32 %v2946, 65535
    %v2951 = vshrl.u32 %v2946, 16
    %v2952 = vmul.u32 %v2948, %v2950
    %v2953 = vmul.u32 %v2948, %v2951
    %v2954 = vmul.u32 %v2949, %v2950
    %v2955 = vmul.u32 %v2949, %v2951
    %v2956 = vshll.u32 %v2953, 16
    %v2957 = vshrl.u32 %v2953, 16
    %v2958 = vshll.u32 %v2954, 16
    %v2959 = vshrl.u32 %v2954, 16
    %vm2960 = vc.u32 %v2952, %v2956
    %v2961 = vsel %vm2960, 1, 0
    %v2962 = vadd.s32 %v2952, %v2956
    %v2963 = vadd.s32 %v2955, %v2961
    %vm2964 = vc.u32 %v2962, %v2958
    %v2965 = vsel %vm2964, 1, 0
    %v2966 = vadd.s32 %v2962, %v2958
    %v2967 = vadd.s32 %v2963, %v2965
    %v2968 = vadd.s32 %v2967, %v2957
    %v2969 = vadd.s32 %v2968, %v2959
    %v2970 = vand.u32 %v2947, 65535
    %v2971 = vshrl.u32 %v2947, 16
    %v2972 = vand.u32 %v2942, 65535
    %v2973 = vshrl.u32 %v2942, 16
    %v2974 = vmul.u32 %v2970, %v2972
    %v2975 = vmul.u32 %v2970, %v2973
    %v2976 = vmul.u32 %v2971, %v2972
    %v2977 = vmul.u32 %v2971, %v2973
    %v2978 = vshll.u32 %v2975, 16
    %v2979 = vshrl.u32 %v2975, 16
    %v2980 = vshll.u32 %v2976, 16
    %v2981 = vshrl.u32 %v2976, 16
    %vm2982 = vc.u32 %v2974, %v2978
    %v2983 = vsel %vm2982, 1, 0
    %v2984 = vadd.s32 %v2974, %v2978
    %v2985 = vadd.s32 %v2977, %v2983
    %vm2986 = vc.u32 %v2984, %v2980
    %v2987 = vsel %vm2986, 1, 0
    %v2988 = vadd.s32 %v2984, %v2980
    %v2989 = vadd.s32 %v2985, %v2987
    %v2990 = vadd.s32 %v2989, %v2979
    %v2991 = vadd.s32 %v2990, %v2981
    %v2992 = vmul.u32 %v2947, %v2938
    %v2993 = vadd.s32 %v2969, %v2988
    %vm2994 = vc.u32 %v2969, %v2988
    %v2995 = vadd.s32 %v2991, 1
    %v2996 = vsel %vm2994, %v2995, %v2991
    %v2997 = vadd.s32 %v2992, %v2996
    %v2998 = vadd.s32 %v2997, 536870912
    %v2999 = vshrl.u32 %v2998, 30
    %v3000 = vshll.u32 %v2999, 30
    %v3001 = vsub.s32 %v2997, %v3000
    %vm3002 = vcmp.lt.s32.totalorder %v3001, 0
    %v3003 = vsub.s32 0, %v3001
    %v3004 = vsel %vm3002, %v3003, %v3001
    %v3005 = vclz %v3004
    %v3006 = vsub.s32 %v3005, 2
    %vm3007 = vcmp.gt.s32.totalorder 0, %v3006
    %v3008 = vsel %vm3007, 0, %v3006
    %v3009 = vsub.s32 32, %v3008
    %v3010 = vshll.u32 %v3001, %v3008
    %v3011 = vshrl.u32 %v2993, %v3009
    %v3012 = vor.u32 %v3010, %v3011
    %v3013 = vsub.s32 4294967266, %v3008
    %v3014 = vadd.s32 %v3013, 127
    %v3015 = vshll.u32 %v3014, 23
    %v3016 = vor.u32 4788187, %v3015
    %v3017 = vand.u32 2147483647, %v3016
    %v3019 = vcvt.s32.f32 %v3012
    %v3020 = vmul.f32 %v3019, %v3017
    %v3021 = vxor.u32 %v3020, 2147483648
    %v3022 = vsel %vm2901, %v3021, %v3020
    %v3023 = vsub.s32 4, %v2999
    %v3024 = vsel %vm2901, %v3023, %v2999
    %v3025 = vsel %vm2900, %v1346, %v3022
    %v3026 = vsel %vm2900, 0, %v3024
    %v3027 = vmul.f32 %v3025, %v3025
    %v3028 = vmul.f32 %v3027, -0.001358992
    %v3029 = vadd.f32 %v3028, 0.041655596
    %v3030 = vmul.f32 %v3027, %v3029
    %v3031 = vadd.f32 %v3030, -0.4999988
    %v3032 = vmul.f32 %v3027, %v3031
    %v3033 = vadd.f32 1.0, %v3032
    %v3034 = vmul.f32 %v3025, %v3025
    %v3035 = vmul.f32 %v3034, -0.00019511016
    %v3036 = vadd.f32 %v3035, 0.008332121
    %v3037 = vmul.f32 %v3034, %v3036
    %v3038 = vadd.f32 %v3037, -0.16666654
    %v3039 = vmul.f32 %v3034, %v3038
    %v3040 = vadd.f32 %v3039, 1.0
    %v3041 = vmul.f32 %v3040, %v3025
    %vm3042 = vweird.f32 %v1346
    %v3043 = vadd.s32 %v3026, 3
    %v3044 = vand.u32 %v3043, 3
    %vm3045 = vcmp.lt.s32.totalorder %v3044, 2
    %vm3046 = vcmp.eq.s32.totalorder %v3044, 0
    %v3047 = vxor.u32 %v3041, 2147483648
    %v3048 = vsel %vm3046, %v3033, %v3047
    %vm3049 = vcmp.eq.s32.totalorder %v3044, 2
    %v3050 = vxor.u32 %v3033, 2147483648
    %v3051 = vsel %vm3049, %v3050, %v3041
    %v3052 = vsel %vm3045, %v3048, %v3051
    %v3053 = vsel %vm3042, nan, %v3052
    %v3054 = vand.u32 2147483647, %v1347
    %vm3055 = vcmp.le.f32.partialorder %v3054, 0.7853982
    %vm3056 = vcmp.lt.s32.totalorder %v1347, 0
    %v3057 = vand.u32 %v1347, 2139095040
    %v3058 = vshrl.u32 %v3057, 23
    %v3059 = vsub.s32 %v3058, 127
    %v3060 = vand.u32 2147483647, %v1347
    %v3061 = vand.u32 %v3060, 8388607
    %v3062 = vor.u32 %v3061, 8388608
    %v3063 = vsub.s32 0, %v3062
    %v3064 = vadd.s32 %v3059, 1
    %vm3065 = vcmp.gt.s32.totalorder %v3064, 0
    %v3066 = vsel %vm3065, %v3064, 0
    %v3067 = vshrl.u32 %v3066, 5
    %v3068 = vand.u32 %v3066, 31
    %v3069 = vsub.s32 32, %v3068
    %v3070 = vshrl.u32 683565275, %v3069
    %v3071 = vshll.u32 683565275, %v3068
    %v3072 = vshrl.u32 2475754826, %v3069
    %v3073 = vor.u32 %v3071, %v3072
    %v3074 = vshll.u32 2475754826, %v3068
    %v3075 = vshrl.u32 2131351028, %v3069
    %v3076 = vor.u32 %v3074, %v3075
    %v3077 = vshll.u32 2131351028, %v3068
    %v3078 = vshrl.u32 2102212464, %v3069
    %v3079 = vor.u32 %v3077, %v3078
    %v3080 = vshll.u32 2102212464, %v3068
    %v3081 = vshrl.u32 920167782, %v3069
    %v3082 = vor.u32 %v3080, %v3081
    %v3083 = vshll.u32 920167782, %v3068
    %v3084 = vshrl.u32 1326507024, %v3069
    %v3085 = vor.u32 %v3083, %v3084
    %vm3086 = vcmp.lt.s32.totalorder %v3067, 1
    %vm3087 = vcmp.lt.s32.totalorder %v3067, 2
    %vm3088 = vcmp.lt.s32.totalorder %v3067, 3
    %vm3089 = vcmp.lt.s32.totalorder %v3067, 4
    %v3090 = vsel %vm3086, %v3070, %v3073
    %v3091 = vsel %vm3089, %v3079, 2102212464
    %v3092 = vsel %vm3088, %v3076, %v3091
    %v3093 = vsel %vm3087, %v3090, %v3092
    %v3094 = vsel %vm3086, %v3073, %v3076
    %v3095 = vsel %vm3089, %v3082, 920167782
    %v3096 = vsel %vm3088, %v3079, %v3095
    %v3097 = vsel %vm3087, %v3094, %v3096
    %v3098 = vsel %vm3086, %v3076, %v3079
    %v3099 = vsel %vm3089, %v3085, 1326507024
    %v3100 = vsel %vm3088, %v3082, %v3099
    %v3101 = vsel %vm3087, %v3098, %v3100
    %v3102 = vshll.u32 %v3062, 8
    %v3103 = vand.u32 %v3102, 65535
    %v3104 = vshrl.u32 %v3102, 16
    %v3105 = vand.u32 %v3101, 65535
    %v3106 = vshrl.u32 %v3101, 16
    %v3107 = vmul.u32 %v3103, %v3105
    %v3108 = vmul.u32 %v3103, %v3106
    %v3109 = vmul.u32 %v3104, %v3105
    %v3110 = vmul.u32 %v3104, %v3106
    %v3111 = vshll.u32 %v3108, 16
    %v3112 = vshrl.u32 %v3108, 16
    %v3113 = vshll.u32 %v3109, 16
    %v3114 = vshrl.u32 %v3109, 16
    %vm3115 = vc.u32 %v3107, %v3111
    %v3116 = vsel %vm3115, 1, 0
    %v3117 = vadd.s32 %v3107, %v3111
    %v3118 = vadd.s32 %v3110, %v3116
    %vm3119 = vc.u32 %v3117, %v3113
    %v3120 = vsel %vm3119, 1, 0
    %v3121 = vadd.s32 %v3117, %v3113
    %v3122 = vadd.s32 %v3118, %v3120
    %v3123 = vadd.s32 %v3122, %v3112
    %v3124 = vadd.s32 %v3123, %v3114
    %v3125 = vand.u32 %v3102, 65535
    %v3126 = vshrl.u32 %v3102, 16
    %v3127 = vand.u32 %v3097, 65535
    %v3128 = vshrl.u32 %v3097, 16
    %v3129 = vmul.u32 %v3125, %v3127
    %v3130 = vmul.u32 %v3125, %v3128
    %v3131 = vmul.u32 %v3126, %v3127
    %v3132 = vmul.u32 %v3126, %v3128
    %v3133 = vshll.u32 %v3130, 16
    %v3134 = vshrl.u32 %v3130, 16
    %v3135 = vshll.u32 %v3131, 16
    %v3136 = vshrl.u32 %v3131, 16
    %vm3137 = vc.u32 %v3129, %v3133
    %v3138 = vsel %vm3137, 1, 0
    %v3139 = vadd.s32 %v3129, %v3133
    %v3140 = vadd.s32 %v3132, %v3138
    %vm3141 = vc.u32 %v3139, %v3135
    %v3142 = vsel %vm3141, 1, 0
    %v3143 = vadd.s32 %v3139, %v3135
    %v3144 = vadd.s32 %v3140, %v3142
    %v3145 = vadd.s32 %v3144, %v3134
    %v3146 = vadd.s32 %v3145, %v3136
    %v3147 = vmul.u32 %v3102, %v3093
    %v3148 = vadd.s32 %v3124, %v3143
    %vm3149 = vc.u32 %v3124, %v3143
    %v3150 = vadd.s32 %v3146, 1
    %v3151 = vsel %vm3149, %v3150, %v3146
    %v3152 = vadd.s32 %v3147, %v3151
    %v3153 = vadd.s32 %v3152, 536870912
    %v3154 = vshrl.u32 %v3153, 30
    %v3155 = vshll.u32 %v3154, 30
    %v3156 = vsub.s32 %v3152, %v3155
    %vm3157 = vcmp.lt.s32.totalorder %v3156, 0
    %v3158 = vsub.s32 0, %v3156
    %v3159 = vsel %vm3157, %v3158, %v3156
    %v3160 = vclz %v3159
    %v3161 = vsub.s32 %v3160, 2
    %vm3162 = vcmp.gt.s32.totalorder 0, %v3161
    %v3163 = vsel %vm3162, 0, %v3161
    %v3164 = vsub.s32 32, %v3163
    %v3165 = vshll.u32 %v3156, %v3163
    %v3166 = vshrl.u32 %v3148, %v3164
    %v3167 = vor.u32 %v3165, %v3166
    %v3168 = vsub.s32 4294967266, %v3163
    %v3169 = vadd.s32 %v3168, 127
    %v3170 = vshll.u32 %v3169, 23
    %v3171 = vor.u32 4788187, %v3170
    %v3172 = vand.u32 2147483647, %v3171
    %v3174 = vcvt.s32.f32 %v3167
    %v3175 = vmul.f32 %v3174, %v3172
    %v3176 = vxor.u32 %v3175, 2147483648
    %v3177 = vsel %vm3056, %v3176, %v3175
    %v3178 = vsub.s32 4, %v3154
    %v3179 = vsel %vm3056, %v3178, %v3154
    %v3180 = vsel %vm3055, %v1347, %v3177
    %v3181 = vsel %vm3055, 0, %v3179
    %v3182 = vmul.f32 %v3180, %v3180
    %v3183 = vmul.f32 %v3182, -0.001358992
    %v3184 = vadd.f32 %v3183, 0.041655596
    %v3185 = vmul.f32 %v3182, %v3184
    %v3186 = vadd.f32 %v3185, -0.4999988
    %v3187 = vmul.f32 %v3182, %v3186
    %v3188 = vadd.f32 1.0, %v3187
    %v3189 = vmul.f32 %v3180, %v3180
    %v3190 = vmul.f32 %v3189, -0.00019511016
    %v3191 = vadd.f32 %v3190, 0.008332121
    %v3192 = vmul.f32 %v3189, %v3191
    %v3193 = vadd.f32 %v3192, -0.16666654
    %v3194 = vmul.f32 %v3189, %v3193
    %v3195 = vadd.f32 %v3194, 1.0
    %v3196 = vmul.f32 %v3195, %v3180
    %vm3197 = vweird.f32 %v1347
    %v3198 = vadd.s32 %v3181, 3
    %v3199 = vand.u32 %v3198, 3
    %vm3200 = vcmp.lt.s32.totalorder %v3199, 2
    %vm3201 = vcmp.eq.s32.totalorder %v3199, 0
    %v3202 = vxor.u32 %v3196, 2147483648
    %v3203 = vsel %vm3201, %v3188, %v3202
    %vm3204 = vcmp.eq.s32.totalorder %v3199, 2
    %v3205 = vxor.u32 %v3188, 2147483648
    %v3206 = vsel %vm3204, %v3205, %v3196
    %v3207 = vsel %vm3200, %v3203, %v3206
    %v3208 = vsel %vm3197, nan, %v3207
    %v3209 = vand.u32 2147483647, %v1348
    %vm3210 = vcmp.le.f32.partialorder %v3209, 0.7853982
    %vm3211 = vcmp.lt.s32.totalorder %v1348, 0
    %v3212 = vand.u32 %v1348, 2139095040
    %v3213 = vshrl.u32 %v3212, 23
    %v3214 = vsub.s32 %v3213, 127
    %v3215 = vand.u32 2147483647, %v1348
    %v3216 = vand.u32 %v3215, 8388607
    %v3217 = vor.u32 %v3216, 8388608
    %v3218 = vsub.s32 0, %v3217
    %v3219 = vadd.s32 %v3214, 1
    %vm3220 = vcmp.gt.s32.totalorder %v3219, 0
    %v3221 = vsel %vm3220, %v3219, 0
    %v3222 = vshrl.u32 %v3221, 5
    %v3223 = vand.u32 %v3221, 31
    %v3224 = vsub.s32 32, %v3223
    %v3225 = vshrl.u32 683565275, %v3224
    %v3226 = vshll.u32 683565275, %v3223
    %v3227 = vshrl.u32 2475754826, %v3224
    %v3228 = vor.u32 %v3226, %v3227
    %v3229 = vshll.u32 2475754826, %v3223
    %v3230 = vshrl.u32 2131351028, %v3224
    %v3231 = vor.u32 %v3229, %v3230
    %v3232 = vshll.u32 2131351028, %v3223
    %v3233 = vshrl.u32 2102212464, %v3224
    %v3234 = vor.u32 %v3232, %v3233
    %v3235 = vshll.u32 2102212464, %v3223
    %v3236 = vshrl.u32 920167782, %v3224
    %v3237 = vor.u32 %v3235, %v3236
    %v3238 = vshll.u32 920167782, %v3223
    %v3239 = vshrl.u32 1326507024, %v3224
    %v3240 = vor.u32 %v3238, %v3239
    %vm3241 = vcmp.lt.s32.totalorder %v3222, 1
    %vm3242 = vcmp.lt.s32.totalorder %v3222, 2
    %vm3243 = vcmp.lt.s32.totalorder %v3222, 3
    %vm3244 = vcmp.lt.s32.totalorder %v3222, 4
    %v3245 = vsel %vm3241, %v3225, %v3228
    %v3246 = vsel %vm3244, %v3234, 2102212464
    %v3247 = vsel %vm3243, %v3231, %v3246
    %v3248 = vsel %vm3242, %v3245, %v3247
    %v3249 = vsel %vm3241, %v3228, %v3231
    %v3250 = vsel %vm3244, %v3237, 920167782
    %v3251 = vsel %vm3243, %v3234, %v3250
    %v3252 = vsel %vm3242, %v3249, %v3251
    %v3253 = vsel %vm3241, %v3231, %v3234
    %v3254 = vsel %vm3244, %v3240, 1326507024
    %v3255 = vsel %vm3243, %v3237, %v3254
    %v3256 = vsel %vm3242, %v3253, %v3255
    %v3257 = vshll.u32 %v3217, 8
    %v3258 = vand.u32 %v3257, 65535
    %v3259 = vshrl.u32 %v3257, 16
    %v3260 = vand.u32 %v3256, 65535
    %v3261 = vshrl.u32 %v3256, 16
    %v3262 = vmul.u32 %v3258, %v3260
    %v3263 = vmul.u32 %v3258, %v3261
    %v3264 = vmul.u32 %v3259, %v3260
    %v3265 = vmul.u32 %v3259, %v3261
    %v3266 = vshll.u32 %v3263, 16
    %v3267 = vshrl.u32 %v3263, 16
    %v3268 = vshll.u32 %v3264, 16
    %v3269 = vshrl.u32 %v3264, 16
    %vm3270 = vc.u32 %v3262, %v3266
    %v3271 = vsel %vm3270, 1, 0
    %v3272 = vadd.s32 %v3262, %v3266
    %v3273 = vadd.s32 %v3265, %v3271
    %vm3274 = vc.u32 %v3272, %v3268
    %v3275 = vsel %vm3274, 1, 0
    %v3276 = vadd.s32 %v3272, %v3268
    %v3277 = vadd.s32 %v3273, %v3275
    %v3278 = vadd.s32 %v3277, %v3267
    %v3279 = vadd.s32 %v3278, %v3269
    %v3280 = vand.u32 %v3257, 65535
    %v3281 = vshrl.u32 %v3257, 16
    %v3282 = vand.u32 %v3252, 65535
    %v3283 = vshrl.u32 %v3252, 16
    %v3284 = vmul.u32 %v3280, %v3282
    %v3285 = vmul.u32 %v3280, %v3283
    %v3286 = vmul.u32 %v3281, %v3282
    %v3287 = vmul.u32 %v3281, %v3283
    %v3288 = vshll.u32 %v3285, 16
    %v3289 = vshrl.u32 %v3285, 16
    %v3290 = vshll.u32 %v3286, 16
    %v3291 = vshrl.u32 %v3286, 16
    %vm3292 = vc.u32 %v3284, %v3288
    %v3293 = vsel %vm3292, 1, 0
    %v3294 = vadd.s32 %v3284, %v3288
    %v3295 = vadd.s32 %v3287, %v3293
    %vm3296 = vc.u32 %v3294, %v3290
    %v3297 = vsel %vm3296, 1, 0
    %v3298 = vadd.s32 %v3294, %v3290
    %v3299 = vadd.s32 %v3295, %v3297
    %v3300 = vadd.s32 %v3299, %v3289
    %v3301 = vadd.s32 %v3300, %v3291
    %v3302 = vmul.u32 %v3257, %v3248
    %v3303 = vadd.s32 %v3279, %v3298
    %vm3304 = vc.u32 %v3279, %v3298
    %v3305 = vadd.s32 %v3301, 1
    %v3306 = vsel %vm3304, %v3305, %v3301
    %v3307 = vadd.s32 %v3302, %v3306
    %v3308 = vadd.s32 %v3307, 536870912
    %v3309 = vshrl.u32 %v3308, 30
    %v3310 = vshll.u32 %v3309, 30
    %v3311 = vsub.s32 %v3307, %v3310
    %vm3312 = vcmp.lt.s32.totalorder %v3311, 0
    %v3313 = vsub.s32 0, %v3311
    %v3314 = vsel %vm3312, %v3313, %v3311
    %v3315 = vclz %v3314
    %v3316 = vsub.s32 %v3315, 2
    %vm3317 = vcmp.gt.s32.totalorder 0, %v3316
    %v3318 = vsel %vm3317, 0, %v3316
    %v3319 = vsub.s32 32, %v3318
    %v3320 = vshll.u32 %v3311, %v3318
    %v3321 = vshrl.u32 %v3303, %v3319
    %v3322 = vor.u32 %v3320, %v3321
    %v3323 = vsub.s32 4294967266, %v3318
    %v3324 = vadd.s32 %v3323, 127
    %v3325 = vshll.u32 %v3324, 23
    %v3326 = vor.u32 4788187, %v3325
    %v3327 = vand.u32 2147483647, %v3326
    %v3329 = vcvt.s32.f32 %v3322
    %v3330 = vmul.f32 %v3329, %v3327
    %v3331 = vxor.u32 %v3330, 2147483648
    %v3332 = vsel %vm3211, %v3331, %v3330
    %v3333 = vsub.s32 4, %v3309
    %v3334 = vsel %vm3211, %v3333, %v3309
    %v3335 = vsel %vm3210, %v1348, %v3332
    %v3336 = vsel %vm3210, 0, %v3334
    %v3337 = vmul.f32 %v3335, %v3335
    %v3338 = vmul.f32 %v3337, -0.001358992
    %v3339 = vadd.f32 %v3338, 0.041655596
    %v3340 = vmul.f32 %v3337, %v3339
    %v3341 = vadd.f32 %v3340, -0.4999988
    %v3342 = vmul.f32 %v3337, %v3341
    %v3343 = vadd.f32 1.0, %v3342
    %v3344 = vmul.f32 %v3335, %v3335
    %v3345 = vmul.f32 %v3344, -0.00019511016
    %v3346 = vadd.f32 %v3345, 0.008332121
    %v3347 = vmul.f32 %v3344, %v3346
    %v3348 = vadd.f32 %v3347, -0.16666654
    %v3349 = vmul.f32 %v3344, %v3348
    %v3350 = vadd.f32 %v3349, 1.0
    %v3351 = vmul.f32 %v3350, %v3335
    %vm3352 = vweird.f32 %v1348
    %v3353 = vadd.s32 %v3336, 3
    %v3354 = vand.u32 %v3353, 3
    %vm3355 = vcmp.lt.s32.totalorder %v3354, 2
    %vm3356 = vcmp.eq.s32.totalorder %v3354, 0
    %v3357 = vxor.u32 %v3351, 2147483648
    %v3358 = vsel %vm3356, %v3343, %v3357
    %vm3359 = vcmp.eq.s32.totalorder %v3354, 2
    %v3360 = vxor.u32 %v3343, 2147483648
    %v3361 = vsel %vm3359, %v3360, %v3351
    %v3362 = vsel %vm3355, %v3358, %v3361
    %v3363 = vsel %vm3352, nan, %v3362
    %v3364 = vld [vmem:[#allocation8] sm:$0xff]
    %v3365 = vld [vmem:[#allocation8 + $0x8] sm:$0x1f]
    %v3368 = vperm.slane %v3364, 0
    %v3369 = vperm.slane %v3364, 1
    %v3370 = vperm.slane %v3364, 2
    %v3371 = vperm.slane %v3364, 3
    %v3372 = vperm.slane %v3364, 4
    %v3373 = vperm.slane %v3364, 5
    %v3374 = vperm.slane %v3364, 6
    %v3375 = vperm.slane %v3364, 7
    %v3376 = vperm.slane %v3365, 0
    %v3377 = vperm.slane %v3365, 1
    %v3378 = vperm.slane %v3365, 2
    %v3379 = vperm.slane %v3365, 3
    %v3380 = vperm.slane %v3365, 4
    %v3394 = vmul.f32 %v1250, %v3368
    %v3395 = vmul.f32 %v1251, %v3369
    %v3396 = vmul.f32 %v1252, %v3370
    %v3397 = vmul.f32 %v1253, %v3371
    %v3398 = vmul.f32 %v1254, %v3372
    %v3399 = vmul.f32 %v1255, %v3373
    %v3400 = vmul.f32 %v1256, %v3374
    %v3401 = vmul.f32 %v1257, %v3375
    %v3402 = vmul.f32 %v1258, %v3376
    %v3403 = vmul.f32 %v1259, %v3377
    %v3404 = vmul.f32 %v1260, %v3378
    %v3405 = vmul.f32 %v1261, %v3379
    %v3406 = vmul.f32 %v1262, %v3380
    %v3407 = vsub.f32 1.0, %v3364
    %v3408 = vsub.f32 1.0, %v3365
    %v3411 = vperm.slane %v3407, 0
    %v3412 = vperm.slane %v3407, 1
    %v3413 = vperm.slane %v3407, 2
    %v3414 = vperm.slane %v3407, 3
    %v3415 = vperm.slane %v3407, 4
    %v3416 = vperm.slane %v3407, 5
    %v3417 = vperm.slane %v3407, 6
    %v3418 = vperm.slane %v3407, 7
    %v3419 = vperm.slane %v3408, 0
    %v3420 = vperm.slane %v3408, 1
    %v3421 = vperm.slane %v3408, 2
    %v3422 = vperm.slane %v3408, 3
    %v3423 = vperm.slane %v3408, 4
    %v3437 = vmul.f32 %v1503, %v3411
    %v3438 = vmul.f32 %v1658, %v3412
    %v3439 = vmul.f32 %v1813, %v3413
    %v3440 = vmul.f32 %v1968, %v3414
    %v3441 = vmul.f32 %v2123, %v3415
    %v3442 = vmul.f32 %v2278, %v3416
    %v3443 = vmul.f32 %v2433, %v3417
    %v3444 = vmul.f32 %v2588, %v3418
    %v3445 = vmul.f32 %v2743, %v3419
    %v3446 = vmul.f32 %v2898, %v3420
    %v3447 = vmul.f32 %v3053, %v3421
    %v3448 = vmul.f32 %v3208, %v3422
    %v3449 = vmul.f32 %v3363, %v3423
    %v3450 = vadd.f32 %v3394, %v3437
    %v3451 = vadd.f32 %v3395, %v3438
    %v3452 = vadd.f32 %v3396, %v3439
    %v3453 = vadd.f32 %v3397, %v3440
    %v3454 = vadd.f32 %v3398, %v3441
    %v3455 = vadd.f32 %v3399, %v3442
    %v3456 = vadd.f32 %v3400, %v3443
    %v3457 = vadd.f32 %v3401, %v3444
    %v3458 = vadd.f32 %v3402, %v3445
    %v3459 = vadd.f32 %v3403, %v3446
    %v3460 = vadd.f32 %v3404, %v3447
    %v3461 = vadd.f32 %v3405, %v3448
    %v3462 = vadd.f32 %v3406, %v3449
    %3463 = vst [vmem:[#allocation11] sm:$0xff] %v3450
    %3464 = vst [vmem:[#allocation11 + $0x8] sm:$0xff] %v3451
    %3465 = vst [vmem:[#allocation11 + $0x10] sm:$0xff] %v3452
    %3466 = vst [vmem:[#allocation11 + $0x18] sm:$0xff] %v3453
    %3467 = vst [vmem:[#allocation11 + $0x20] sm:$0xff] %v3454
    %3468 = vst [vmem:[#allocation11 + $0x28] sm:$0xff] %v3455
    %3469 = vst [vmem:[#allocation11 + $0x30] sm:$0xff] %v3456
    %3470 = vst [vmem:[#allocation11 + $0x38] sm:$0xff] %v3457
    %3471 = vst [vmem:[#allocation11 + $0x40] sm:$0xff] %v3458
    %3472 = vst [vmem:[#allocation11 + $0x48] sm:$0xff] %v3459
    %3473 = vst [vmem:[#allocation11 + $0x50] sm:$0xff] %v3460
    %3474 = vst [vmem:[#allocation11 + $0x58] sm:$0xff] %v3461
    %3475 = vst [vmem:[#allocation11 + $0x60] sm:$0xff] %v3462
    // Predicated region
    $region42: #{tpu_custom_call.1} parent=1 // pred_check
      _
    $region43: #{tpu_custom_call.1} parent=1 // pred_check_branch
      %3477 = sbr.rel (0) target = $region45
    $region44: #{tpu_custom_call.1} parent=1 // pred_region
      %3479 = vsyncadd [#allocation4], 0
      %s3481 = sshll.u32 [#allocation11], 4
      %s3482 = int_to_ptr.vmem [resolvable:$true] %s3481
      %s3483 = sshll.u32 %s5, 4
      %s3484 = int_to_ptr.hbm [resolvable:$true] %s3483
      %3486 = dma.vmem_to_hbm [thread:$0]  %s3482, 1664, %s3484, [#allocation4]
    $region45: #{tpu_custom_call.1} parent=1 // pred_fallthru
      _
    // Predicated region
    $region46: #{tpu_custom_call.1} parent=1 // pred_check
      _
    $region47: #{tpu_custom_call.1} parent=1 // pred_check_branch
      %3488 = sbr.rel (0) target = $region49
    $region48: #{tpu_custom_call.1} parent=1 // pred_region
      %3490 = dma.done [#allocation4], 1664
    $region49: #{tpu_custom_call.1} parent=1 // pred_fallthru
      _
    %3491 = vsyncpa [#allocation3], 1
    %3492 = vsyncpa [#allocation6], 1
    %3493 = vsyncpa [#allocation9], 1
    %3494 = vsyncpa [#allocation4], 1

</llo_original>
